<compile_context>
chip_gen: v5e
topology: v5e:2x2
jax: 0.10.0
libtpu: 0.0.40
codegen_flags: <defaults>
</compile_context>

<pallas_src>
import numpy as np
import jax
import jax.numpy as jnp
from jax.experimental import pallas as pl
from jax.experimental.pallas import tpu as pltpu

# ---------------- fixed module hyper-parameters ------------------------------
LB = 4          # luma_bins
CM = 1          # channel_multiplier
SB = 8          # spatial_bin
NSIZE = 32      # net_input_size
COEFF_NUM = 12
C_IN = 3
SPLAT_NUM = int(np.log2(NSIZE / SB))    # 2
GLOBAL_NUM = int(np.log2(SB / 4))       # 1
# TODO(synk): batch_norm=True / use_residual=True branches of the PyTorch module
# are not exercised with these params (both False) and are not implemented.

C0 = CM * LB           # 4   lowlevel conv 1 output channels
C1 = CM * 2 * LB       # 8   lowlevel conv 2 output channels
CL = 8 * CM * LB       # 32  local / global feature width
COUT = LB * COEFF_NUM  # 48
C_PAD = 8              # low-channel activations padded to 8 sublanes (aligned concat)


# guarded flat-padded spatial layout: an HxH map is stored channel-major as
# (C, R) where columns [G, G + (H+2)^2) hold the zero-padded image flattened
# row-major and G = H+3 zero guard columns sit on each side, so the 3x3 tap of
# every candidate position is one contiguous lane slice.
def _layout(h):
    hp, wp = h + 2, h + 2
    g = wp + 1
    return hp, wp, g, hp * wp + 2 * g


HP0, WP0, G0, R0 = _layout(32)   # 34, 34, 35, 1226
HP1, WP1, G1, R1 = _layout(16)   # 18, 18, 19, 362
HP2, WP2, G2, R2 = _layout(8)    # 10, 10, 11, 122


# ------------------- constant 0/1 placement / selection matrices -------------
def _stride2_place(wp_in, h_out, wp_out, g_out, r_out):
    """Right-multiplying the full-resolution conv candidate (C, wp_in*wp_in) by
    this picks the stride-2 outputs (candidate at padded coords (2y+1, 2x+1))
    and places them in the next guarded layout's interior; the zero columns
    produce the next layer's zero padding / guards."""
    pt = np.zeros((wp_in * wp_in, r_out), np.float32)
    for y in range(h_out):
        for x in range(h_out):
            s = (2 * y + 1) * wp_in + (2 * x + 1)
            q = g_out + (y + 1) * wp_out + (x + 1)
            pt[s, q] = 1.0
    return pt


_P0T = _stride2_place(WP0, 16, WP1, G1, R1)          # (1156, 362)
_P1T = _stride2_place(WP1, 8, WP2, G2, R2)           # (324, 122)

_PKT = np.zeros((HP2 * WP2, R2), np.float32)          # stride-1 8x8 re-place
for _i in range(1, 9):
    for _j in range(1, 9):
        _PKT[_i * WP2 + _j, G2 + _i * WP2 + _j] = 1.0

_PSELT = np.zeros((HP2 * WP2, 64), np.float32)        # 8x8 valid-position pick
for _y in range(8):
    for _x in range(8):
        _PSELT[(_y + 1) * WP2 + (_x + 1), _y * 8 + _x] = 1.0

_GSEL = np.zeros((16, HP2 * WP2, 1), np.float32)      # 4x4 gconv output pick
for _y in range(4):
    for _x in range(4):
        _GSEL[_y * 4 + _x, (2 * _y + 1) * WP2 + (2 * _x + 1), 0] = 1.0


# ------------------------------- Pallas kernel --------------------------------
def _taps(src_ref, wp, hpwp, g):
    """im2col: the 9 shifted 3x3-tap views of a guarded channel-major buffer,
    stacked along the channel (sublane) axis -> (9*C, hp*wp)."""
    pieces = []
    for dy in range(3):
        for dx in range(3):
            start = g + (dy - 1) * wp + (dx - 1)
            pieces.append(src_ref[:, pl.ds(start, hpwp)])
    return jnp.concatenate(pieces, axis=0)


def _coeffs_kernel(x_ref,
                   w0_ref, b0_ref, p0_ref,
                   w1_ref, b1_ref, p1_ref,
                   wg_ref, bg_ref, gsel_ref,
                   wf0_ref, bf0_ref, wf1_ref, bf1_ref, wf2_ref, bf2_ref,
                   wl0_ref, bl0_ref, wl1_ref, wl2_ref, wl3_ref,
                   pk_ref, psel_ref, wo_ref, bo_ref,
                   o_ref,
                   b1buf, b2buf, lbuf):
    def mm(a, b):
        return jnp.dot(a, b, preferred_element_type=jnp.float32)

    # --- lowlevel splat conv 1: 32x32x3 -> 16x16x4 (stride 2, bias, ReLU) ---
    pat = _taps(x_ref, WP0, HP0 * WP0, G0)                           # (72, 1156)
    cand = jnp.maximum(mm(w0_ref[...], pat) + b0_ref[...], 0.0)      # (8, 1156)
    b1buf[...] = mm(cand, p0_ref[...])                               # (8, 362)

    # --- lowlevel splat conv 2: 16x16x4 -> 8x8x8 (stride 2, bias, ReLU) ---
    pat = _taps(b1buf, WP1, HP1 * WP1, G1)                           # (72, 324)
    cand = jnp.maximum(mm(w1_ref[...], pat) + b1_ref[...], 0.0)      # (8, 324)
    b2buf[...] = mm(cand, p1_ref[...])                               # (8, 122) splat

    # shared im2col of the splat features (used by global conv and local conv 0)
    pat8 = _taps(b2buf, WP2, HP2 * WP2, G2)                          # (72, 100)

    # --- global path: conv 8x8x8 -> 4x4x32 (stride 2, ReLU), flatten, 3 FCs ---
    gcand = jnp.maximum(mm(wg_ref[...], pat8) + bg_ref[...], 0.0)    # (32, 100)
    cols = [mm(gcand, gsel_ref[i]) for i in range(16)]               # 16 x (32, 1)
    gflat = jnp.concatenate(cols, axis=0)                            # (512, 1)
    f = jnp.maximum(mm(wf0_ref[...], gflat) + bf0_ref[...], 0.0)     # (128, 1)
    f = jnp.maximum(mm(wf1_ref[...], f) + bf1_ref[...], 0.0)         # (64, 1)
    gfeat = mm(wf2_ref[...], f) + bf2_ref[...]                       # (32, 1)

    # --- local path: four 3x3 stride-1 convs on 8x8 (ReLU; bias on the first) ---
    c = jnp.maximum(mm(wl0_ref[...], pat8) + bl0_ref[...], 0.0)      # (32, 100)
    lbuf[...] = mm(c, pk_ref[...])                                   # (32, 122)
    for wref in (wl1_ref, wl2_ref):
        pat = _taps(lbuf, WP2, HP2 * WP2, G2)                        # (288, 100)
        c = jnp.maximum(mm(wref[...], pat), 0.0)
        lbuf[...] = mm(c, pk_ref[...])
    pat = _taps(lbuf, WP2, HP2 * WP2, G2)
    c = jnp.maximum(mm(wl3_ref[...], pat), 0.0)                      # (32, 100)
    local = mm(c, psel_ref[...])                                     # (32, 64)

    # --- fusion ReLU(local + global) + 1x1 conv_out, channel-major output ---
    fused = jnp.maximum(local + gfeat, 0.0)                          # (32, 64)
    o_ref[...] = (mm(wo_ref[...], fused) + bo_ref[...]).astype(o_ref.dtype)


# ------------------------------ parameter init --------------------------------
_ORDER = ("w0", "b0", "p0t", "w1", "b1", "p1t", "wg", "bg", "gsel",
          "wf0", "bf0", "wf1", "bf1", "wf2", "bf2",
          "wl0", "bl0", "wl1", "wl2", "wl3",
          "pkt", "pselt", "wo", "bo")


def init_params(key):
    keys = iter(jax.random.split(key, 24))

    def conv_w(cout, cin):
        w = jax.random.normal(next(keys), (cout, cin, 3, 3), jnp.float32) / np.sqrt(9 * cin)
        b = 0.01 * jax.random.normal(next(keys), (cout,), jnp.float32)
        return w, b

    def conv_w_nobias(cout, cin):
        return jax.random.normal(next(keys), (cout, cin, 3, 3), jnp.float32) / np.sqrt(9 * cin)

    def fc_w(fout, fin):
        w = jax.random.normal(next(keys), (fout, fin), jnp.float32) / np.sqrt(fin)
        b = 0.01 * jax.random.normal(next(keys), (fout,), jnp.float32)
        return w, b

    def to_tap_form(w, cout_pad, cin_pad):
        # (Cout, Cin, 3, 3) PyTorch layout -> (Cout_pad, 9*Cin_pad): transposed,
        # tap-concatenated form used by the kernel's im2col matmul
        # (tap order dy-major/dx-minor; padded channels are zero).
        cout, cin = w.shape[:2]
        wt = jnp.transpose(w, (0, 2, 3, 1)).reshape(cout, 9, cin)
        full = jnp.zeros((cout_pad, 9, cin_pad), jnp.float32)
        full = full.at[:cout, :, :cin].set(wt)
        return full.reshape(cout_pad, 9 * cin_pad)

    def bias_col(b, pad=None):
        n = b.shape[0] if pad is None else pad
        return jnp.zeros((n, 1), jnp.float32).at[:b.shape[0], 0].set(b)

    p = {}
    w, b = conv_w(C0, C_IN)                       # lowlevel 1: 3 -> 4
    p["w0"], p["b0"] = to_tap_form(w, C_PAD, C_PAD), bias_col(b, C_PAD)
    w, b = conv_w(C1, C0)                         # lowlevel 2: 4 -> 8
    p["w1"], p["b1"] = to_tap_form(w, C1, C_PAD), bias_col(b)
    w, b = conv_w(CL, C1)                         # global conv: 8 -> 32
    p["wg"], p["bg"] = to_tap_form(w, CL, C1), bias_col(b)

    # global FCs; FC0's input dim is permuted from PyTorch's (c, y, x) flatten
    # order to the kernel's (y, x, c) gather order (same module function).
    w, b = fc_w(32 * CM * LB, CL * 16)
    w = jnp.transpose(w.reshape(32 * CM * LB, CL, 16), (0, 2, 1)).reshape(32 * CM * LB, CL * 16)
    p["wf0"], p["bf0"] = w, bias_col(b)
    w, b = fc_w(16 * CM * LB, 32 * CM * LB)
    p["wf1"], p["bf1"] = w, bias_col(b)
    w, b = fc_w(8 * CM * LB, 16 * CM * LB)
    p["wf2"], p["bf2"] = w, bias_col(b)

    # local convs (first with bias, rest without; all ReLU)
    w, b = conv_w(CL, C1)
    p["wl0"], p["bl0"] = to_tap_form(w, CL, C1), bias_col(b)
    p["wl1"] = to_tap_form(conv_w_nobias(CL, CL), CL, CL)
    p["wl2"] = to_tap_form(conv_w_nobias(CL, CL), CL, CL)
    p["wl3"] = to_tap_form(conv_w_nobias(CL, CL), CL, CL)

    # 1x1 conv_out (bias, no activation), stored transposed: (48, 32)
    w, b = fc_w(COUT, CL)
    p["wo"], p["bo"] = w, bias_col(b)

    # constant 0/1 placement / selection operands
    p["p0t"] = jnp.asarray(_P0T)
    p["p1t"] = jnp.asarray(_P1T)
    p["pkt"] = jnp.asarray(_PKT)
    p["pselt"] = jnp.asarray(_PSELT)
    p["gsel"] = jnp.asarray(_GSEL)
    return p


# ------------------------------ forward pass -----------------------------------
@jax.jit
def compute_coeffs_forward(x_nchw, params):
    n = x_nchw.shape[0]
    x = x_nchw.astype(jnp.float32)
    # input prep (tiny XLA glue): NCHW is already channel-major; pad channels
    # 3->8, spatial pad 1, flatten spatial, add the zero guard columns.
    xp = jnp.pad(x, ((0, 0), (0, C_PAD - C_IN), (1, 1), (1, 1)))
    xg = jnp.pad(xp.reshape(n, C_PAD, HP0 * WP0), ((0, 0), (0, 0), (G0, G0)))

    consts = [params[k] for k in _ORDER]

    def _const_spec(a):
        nd = a.ndim
        return pl.BlockSpec(a.shape, lambda i, _nd=nd: (0,) * _nd)

    out = pl.pallas_call(
        _coeffs_kernel,
        grid=(n,),
        in_specs=[pl.BlockSpec((None, C_PAD, R0), lambda i: (i, 0, 0))]
                 + [_const_spec(a) for a in consts],
        out_specs=pl.BlockSpec((None, COUT, SB * SB), lambda i: (i, 0, 0)),
        out_shape=jax.ShapeDtypeStruct((n, COUT, SB * SB), jnp.float32),
        scratch_shapes=[pltpu.VMEM((C_PAD, R1), jnp.float32),
                        pltpu.VMEM((C_PAD, R2), jnp.float32),
                        pltpu.VMEM((CL, R2), jnp.float32)],
        compiler_params=pltpu.CompilerParams(
            dimension_semantics=("parallel",)),
    )(xg, *consts)

    # free metadata reshape: (N, 48, 64) -> (N, 12, 4, 8, 8)
    return out.reshape(n, COEFF_NUM, LB, SB, SB)


if __name__ == "__main__":
    key = jax.random.PRNGKey(0)
    pkey, xkey = jax.random.split(key)
    params = init_params(pkey)
    lowres_input = jax.random.normal(xkey, (2, C_IN, NSIZE, NSIZE), jnp.float32)

    out = compute_coeffs_forward(lowres_input, params)
    out = jax.block_until_ready(out)

    assert out.shape == (2, COEFF_NUM, LB, SB, SB), out.shape
    assert bool(jnp.all(jnp.isfinite(out)))
    print("KERNEL_OK")
</pallas_src>

<mosaic_0001>
module attributes {stable_mosaic.version = 11 : i64} {
  func.func @_coeffs_kernel(%arg0: i32, %arg1: memref<1x8x1226xf32, #tpu.memory_space<vmem>>, %arg2: memref<8x72xf32, #tpu.memory_space<vmem>>, %arg3: memref<8x1xf32, #tpu.memory_space<vmem>>, %arg4: memref<1156x362xf32, #tpu.memory_space<vmem>>, %arg5: memref<8x72xf32, #tpu.memory_space<vmem>>, %arg6: memref<8x1xf32, #tpu.memory_space<vmem>>, %arg7: memref<324x122xf32, #tpu.memory_space<vmem>>, %arg8: memref<32x72xf32, #tpu.memory_space<vmem>>, %arg9: memref<32x1xf32, #tpu.memory_space<vmem>>, %arg10: memref<16x100x1xf32, #tpu.memory_space<vmem>>, %arg11: memref<128x512xf32, #tpu.memory_space<vmem>>, %arg12: memref<128x1xf32, #tpu.memory_space<vmem>>, %arg13: memref<64x128xf32, #tpu.memory_space<vmem>>, %arg14: memref<64x1xf32, #tpu.memory_space<vmem>>, %arg15: memref<32x64xf32, #tpu.memory_space<vmem>>, %arg16: memref<32x1xf32, #tpu.memory_space<vmem>>, %arg17: memref<32x72xf32, #tpu.memory_space<vmem>>, %arg18: memref<32x1xf32, #tpu.memory_space<vmem>>, %arg19: memref<32x288xf32, #tpu.memory_space<vmem>>, %arg20: memref<32x288xf32, #tpu.memory_space<vmem>>, %arg21: memref<32x288xf32, #tpu.memory_space<vmem>>, %arg22: memref<100x122xf32, #tpu.memory_space<vmem>>, %arg23: memref<100x64xf32, #tpu.memory_space<vmem>>, %arg24: memref<48x32xf32, #tpu.memory_space<vmem>>, %arg25: memref<48x1xf32, #tpu.memory_space<vmem>>, %arg26: memref<1x48x64xf32, #tpu.memory_space<vmem>>, %arg27: memref<8x362xf32, #tpu.memory_space<vmem>>, %arg28: memref<8x122xf32, #tpu.memory_space<vmem>>, %arg29: memref<32x122xf32, #tpu.memory_space<vmem>>) attributes {dimension_semantics = [#tpu.dimension_semantics<parallel>], iteration_bounds = array<i64: 2>, scalar_prefetch = 0 : i64, scratch_operands = 3 : i64, tpu.core_type = #tpu.core_type<tc>, window_params = [{transform_indices = @transform_0, window_bounds = array<i64: 1, 8, 1226>}, {pipeline_mode = #tpu.pipeline_mode<synchronous>, transform_indices = @transform_1, window_bounds = array<i64: 8, 72>}, {pipeline_mode = #tpu.pipeline_mode<synchronous>, transform_indices = @transform_2, window_bounds = array<i64: 8, 1>}, {pipeline_mode = #tpu.pipeline_mode<synchronous>, transform_indices = @transform_3, window_bounds = array<i64: 1156, 362>}, {pipeline_mode = #tpu.pipeline_mode<synchronous>, transform_indices = @transform_4, window_bounds = array<i64: 8, 72>}, {pipeline_mode = #tpu.pipeline_mode<synchronous>, transform_indices = @transform_5, window_bounds = array<i64: 8, 1>}, {pipeline_mode = #tpu.pipeline_mode<synchronous>, transform_indices = @transform_6, window_bounds = array<i64: 324, 122>}, {pipeline_mode = #tpu.pipeline_mode<synchronous>, transform_indices = @transform_7, window_bounds = array<i64: 32, 72>}, {pipeline_mode = #tpu.pipeline_mode<synchronous>, transform_indices = @transform_8, window_bounds = array<i64: 32, 1>}, {pipeline_mode = #tpu.pipeline_mode<synchronous>, transform_indices = @transform_9, window_bounds = array<i64: 16, 100, 1>}, {pipeline_mode = #tpu.pipeline_mode<synchronous>, transform_indices = @transform_10, window_bounds = array<i64: 128, 512>}, {pipeline_mode = #tpu.pipeline_mode<synchronous>, transform_indices = @transform_11, window_bounds = array<i64: 128, 1>}, {pipeline_mode = #tpu.pipeline_mode<synchronous>, transform_indices = @transform_12, window_bounds = array<i64: 64, 128>}, {pipeline_mode = #tpu.pipeline_mode<synchronous>, transform_indices = @transform_13, window_bounds = array<i64: 64, 1>}, {pipeline_mode = #tpu.pipeline_mode<synchronous>, transform_indices = @transform_14, window_bounds = array<i64: 32, 64>}, {pipeline_mode = #tpu.pipeline_mode<synchronous>, transform_indices = @transform_15, window_bounds = array<i64: 32, 1>}, {pipeline_mode = #tpu.pipeline_mode<synchronous>, transform_indices = @transform_16, window_bounds = array<i64: 32, 72>}, {pipeline_mode = #tpu.pipeline_mode<synchronous>, transform_indices = @transform_17, window_bounds = array<i64: 32, 1>}, {pipeline_mode = #tpu.pipeline_mode<synchronous>, transform_indices = @transform_18, window_bounds = array<i64: 32, 288>}, {pipeline_mode = #tpu.pipeline_mode<synchronous>, transform_indices = @transform_19, window_bounds = array<i64: 32, 288>}, {pipeline_mode = #tpu.pipeline_mode<synchronous>, transform_indices = @transform_20, window_bounds = array<i64: 32, 288>}, {pipeline_mode = #tpu.pipeline_mode<synchronous>, transform_indices = @transform_21, window_bounds = array<i64: 100, 122>}, {pipeline_mode = #tpu.pipeline_mode<synchronous>, transform_indices = @transform_22, window_bounds = array<i64: 100, 64>}, {pipeline_mode = #tpu.pipeline_mode<synchronous>, transform_indices = @transform_23, window_bounds = array<i64: 48, 32>}, {pipeline_mode = #tpu.pipeline_mode<synchronous>, transform_indices = @transform_24, window_bounds = array<i64: 48, 1>}, {transform_indices = @transform_25, window_bounds = array<i64: 1, 48, 64>}]} {
    %c0 = arith.constant 0 : index
    %c0_0 = arith.constant 0 : index
    %c0_1 = arith.constant 0 : index
    %0 = vector.load %arg1[%c0, %c0_0, %c0_1] : memref<1x8x1226xf32, #tpu.memory_space<vmem>>, vector<1x8x1156xf32>
    %1 = vector.shape_cast %0 : vector<1x8x1156xf32> to vector<8x1156xf32>
    %c0_2 = arith.constant 0 : index
    %c0_3 = arith.constant 0 : index
    %c1 = arith.constant 1 : index
    %2 = vector.load %arg1[%c0_2, %c0_3, %c1] : memref<1x8x1226xf32, #tpu.memory_space<vmem>>, vector<1x8x1156xf32>
    %3 = vector.shape_cast %2 : vector<1x8x1156xf32> to vector<8x1156xf32>
    %c0_4 = arith.constant 0 : index
    %c0_5 = arith.constant 0 : index
    %c2 = arith.constant 2 : index
    %4 = vector.load %arg1[%c0_4, %c0_5, %c2] : memref<1x8x1226xf32, #tpu.memory_space<vmem>>, vector<1x8x1156xf32>
    %5 = vector.shape_cast %4 : vector<1x8x1156xf32> to vector<8x1156xf32>
    %c0_6 = arith.constant 0 : index
    %c0_7 = arith.constant 0 : index
    %c34 = arith.constant 34 : index
    %6 = vector.load %arg1[%c0_6, %c0_7, %c34] : memref<1x8x1226xf32, #tpu.memory_space<vmem>>, vector<1x8x1156xf32>
    %7 = vector.shape_cast %6 : vector<1x8x1156xf32> to vector<8x1156xf32>
    %c0_8 = arith.constant 0 : index
    %c0_9 = arith.constant 0 : index
    %c35 = arith.constant 35 : index
    %8 = vector.load %arg1[%c0_8, %c0_9, %c35] : memref<1x8x1226xf32, #tpu.memory_space<vmem>>, vector<1x8x1156xf32>
    %9 = vector.shape_cast %8 : vector<1x8x1156xf32> to vector<8x1156xf32>
    %c0_10 = arith.constant 0 : index
    %c0_11 = arith.constant 0 : index
    %c36 = arith.constant 36 : index
    %10 = vector.load %arg1[%c0_10, %c0_11, %c36] : memref<1x8x1226xf32, #tpu.memory_space<vmem>>, vector<1x8x1156xf32>
    %11 = vector.shape_cast %10 : vector<1x8x1156xf32> to vector<8x1156xf32>
    %c0_12 = arith.constant 0 : index
    %c0_13 = arith.constant 0 : index
    %c68 = arith.constant 68 : index
    %12 = vector.load %arg1[%c0_12, %c0_13, %c68] : memref<1x8x1226xf32, #tpu.memory_space<vmem>>, vector<1x8x1156xf32>
    %13 = vector.shape_cast %12 : vector<1x8x1156xf32> to vector<8x1156xf32>
    %c0_14 = arith.constant 0 : index
    %c0_15 = arith.constant 0 : index
    %c69 = arith.constant 69 : index
    %14 = vector.load %arg1[%c0_14, %c0_15, %c69] : memref<1x8x1226xf32, #tpu.memory_space<vmem>>, vector<1x8x1156xf32>
    %15 = vector.shape_cast %14 : vector<1x8x1156xf32> to vector<8x1156xf32>
    %c0_16 = arith.constant 0 : index
    %c0_17 = arith.constant 0 : index
    %c70 = arith.constant 70 : index
    %16 = vector.load %arg1[%c0_16, %c0_17, %c70] : memref<1x8x1226xf32, #tpu.memory_space<vmem>>, vector<1x8x1156xf32>
    %17 = vector.shape_cast %16 : vector<1x8x1156xf32> to vector<8x1156xf32>
    %18 = tpu.concatenate %1, %3, %5, %7, %9, %11, %13, %15, %17 in 0 : vector<8x1156xf32>, vector<8x1156xf32>, vector<8x1156xf32>, vector<8x1156xf32>, vector<8x1156xf32>, vector<8x1156xf32>, vector<8x1156xf32>, vector<8x1156xf32>, vector<8x1156xf32> -> vector<72x1156xf32>
    %c0_18 = arith.constant 0 : index
    %c0_19 = arith.constant 0 : index
    %19 = vector.load %arg2[%c0_18, %c0_19] : memref<8x72xf32, #tpu.memory_space<vmem>>, vector<8x72xf32>
    %cst = arith.constant dense<0.000000e+00> : vector<8x1156xf32>
    %20 = tpu.matmul %19, %18, %cst {dimension_numbers = #tpu.dot_dimension_numbers<[1], [0], [0], [1], [0, 0, 1, 1], [], []>} : vector<8x72xf32>, vector<72x1156xf32>, vector<8x1156xf32> -> vector<8x1156xf32>
    %c0_20 = arith.constant 0 : index
    %c0_21 = arith.constant 0 : index
    %21 = vector.load %arg3[%c0_20, %c0_21] : memref<8x1xf32, #tpu.memory_space<vmem>>, vector<8x1xf32>
    %22 = vector.broadcast %21 : vector<8x1xf32> to vector<8x1156xf32>
    %23 = arith.addf %20, %22 : vector<8x1156xf32>
    %cst_22 = arith.constant 0.000000e+00 : f32
    %24 = vector.broadcast %cst_22 : f32 to vector<8x1156xf32>
    %25 = arith.maximumf %23, %24 : vector<8x1156xf32>
    %c0_23 = arith.constant 0 : index
    %c0_24 = arith.constant 0 : index
    %26 = vector.load %arg4[%c0_23, %c0_24] : memref<1156x362xf32, #tpu.memory_space<vmem>>, vector<1156x362xf32>
    %cst_25 = arith.constant dense<0.000000e+00> : vector<8x362xf32>
    %27 = tpu.matmul %25, %26, %cst_25 {dimension_numbers = #tpu.dot_dimension_numbers<[1], [0], [0], [1], [0, 0, 1, 1], [], []>} : vector<8x1156xf32>, vector<1156x362xf32>, vector<8x362xf32> -> vector<8x362xf32>
    %c0_26 = arith.constant 0 : index
    %c0_27 = arith.constant 0 : index
    %28 = vector.load %arg27[%c0_26, %c0_27] : memref<8x362xf32, #tpu.memory_space<vmem>>, vector<8x362xf32>
    tpu.vector_store %arg27[%c0_26, %c0_27], %27 {strides = array<i32>} : memref<8x362xf32, #tpu.memory_space<vmem>>, vector<8x362xf32>,
    %c0_28 = arith.constant 0 : index
    %c0_29 = arith.constant 0 : index
    %29 = vector.load %arg27[%c0_28, %c0_29] : memref<8x362xf32, #tpu.memory_space<vmem>>, vector<8x324xf32>
    %c0_30 = arith.constant 0 : index
    %c1_31 = arith.constant 1 : index
    %30 = vector.load %arg27[%c0_30, %c1_31] : memref<8x362xf32, #tpu.memory_space<vmem>>, vector<8x324xf32>
    %c0_32 = arith.constant 0 : index
    %c2_33 = arith.constant 2 : index
    %31 = vector.load %arg27[%c0_32, %c2_33] : memref<8x362xf32, #tpu.memory_space<vmem>>, vector<8x324xf32>
    %c0_34 = arith.constant 0 : index
    %c18 = arith.constant 18 : index
    %32 = vector.load %arg27[%c0_34, %c18] : memref<8x362xf32, #tpu.memory_space<vmem>>, vector<8x324xf32>
    %c0_35 = arith.constant 0 : index
    %c19 = arith.constant 19 : index
    %33 = vector.load %arg27[%c0_35, %c19] : memref<8x362xf32, #tpu.memory_space<vmem>>, vector<8x324xf32>
    %c0_36 = arith.constant 0 : index
    %c20 = arith.constant 20 : index
    %34 = vector.load %arg27[%c0_36, %c20] : memref<8x362xf32, #tpu.memory_space<vmem>>, vector<8x324xf32>
    %c0_37 = arith.constant 0 : index
    %c36_38 = arith.constant 36 : index
    %35 = vector.load %arg27[%c0_37, %c36_38] : memref<8x362xf32, #tpu.memory_space<vmem>>, vector<8x324xf32>
    %c0_39 = arith.constant 0 : index
    %c37 = arith.constant 37 : index
    %36 = vector.load %arg27[%c0_39, %c37] : memref<8x362xf32, #tpu.memory_space<vmem>>, vector<8x324xf32>
    %c0_40 = arith.constant 0 : index
    %c38 = arith.constant 38 : index
    %37 = vector.load %arg27[%c0_40, %c38] : memref<8x362xf32, #tpu.memory_space<vmem>>, vector<8x324xf32>
    %38 = tpu.concatenate %29, %30, %31, %32, %33, %34, %35, %36, %37 in 0 : vector<8x324xf32>, vector<8x324xf32>, vector<8x324xf32>, vector<8x324xf32>, vector<8x324xf32>, vector<8x324xf32>, vector<8x324xf32>, vector<8x324xf32>, vector<8x324xf32> -> vector<72x324xf32>
    %c0_41 = arith.constant 0 : index
    %c0_42 = arith.constant 0 : index
    %39 = vector.load %arg5[%c0_41, %c0_42] : memref<8x72xf32, #tpu.memory_space<vmem>>, vector<8x72xf32>
    %cst_43 = arith.constant dense<0.000000e+00> : vector<8x324xf32>
    %40 = tpu.matmul %39, %38, %cst_43 {dimension_numbers = #tpu.dot_dimension_numbers<[1], [0], [0], [1], [0, 0, 1, 1], [], []>} : vector<8x72xf32>, vector<72x324xf32>, vector<8x324xf32> -> vector<8x324xf32>
    %c0_44 = arith.constant 0 : index
    %c0_45 = arith.constant 0 : index
    %41 = vector.load %arg6[%c0_44, %c0_45] : memref<8x1xf32, #tpu.memory_space<vmem>>, vector<8x1xf32>
    %42 = vector.broadcast %41 : vector<8x1xf32> to vector<8x324xf32>
    %43 = arith.addf %40, %42 : vector<8x324xf32>
    %cst_46 = arith.constant 0.000000e+00 : f32
    %44 = vector.broadcast %cst_46 : f32 to vector<8x324xf32>
    %45 = arith.maximumf %43, %44 : vector<8x324xf32>
    %c0_47 = arith.constant 0 : index
    %c0_48 = arith.constant 0 : index
    %46 = vector.load %arg7[%c0_47, %c0_48] : memref<324x122xf32, #tpu.memory_space<vmem>>, vector<324x122xf32>
    %cst_49 = arith.constant dense<0.000000e+00> : vector<8x122xf32>
    %47 = tpu.matmul %45, %46, %cst_49 {dimension_numbers = #tpu.dot_dimension_numbers<[1], [0], [0], [1], [0, 0, 1, 1], [], []>} : vector<8x324xf32>, vector<324x122xf32>, vector<8x122xf32> -> vector<8x122xf32>
    %c0_50 = arith.constant 0 : index
    %c0_51 = arith.constant 0 : index
    %48 = vector.load %arg28[%c0_50, %c0_51] : memref<8x122xf32, #tpu.memory_space<vmem>>, vector<8x122xf32>
    tpu.vector_store %arg28[%c0_50, %c0_51], %47 {strides = array<i32>} : memref<8x122xf32, #tpu.memory_space<vmem>>, vector<8x122xf32>,
    %c0_52 = arith.constant 0 : index
    %c0_53 = arith.constant 0 : index
    %49 = vector.load %arg28[%c0_52, %c0_53] : memref<8x122xf32, #tpu.memory_space<vmem>>, vector<8x100xf32>
    %c0_54 = arith.constant 0 : index
    %c1_55 = arith.constant 1 : index
    %50 = vector.load %arg28[%c0_54, %c1_55] : memref<8x122xf32, #tpu.memory_space<vmem>>, vector<8x100xf32>
    %c0_56 = arith.constant 0 : index
    %c2_57 = arith.constant 2 : index
    %51 = vector.load %arg28[%c0_56, %c2_57] : memref<8x122xf32, #tpu.memory_space<vmem>>, vector<8x100xf32>
    %c0_58 = arith.constant 0 : index
    %c10 = arith.constant 10 : index
    %52 = vector.load %arg28[%c0_58, %c10] : memref<8x122xf32, #tpu.memory_space<vmem>>, vector<8x100xf32>
    %c0_59 = arith.constant 0 : index
    %c11 = arith.constant 11 : index
    %53 = vector.load %arg28[%c0_59, %c11] : memref<8x122xf32, #tpu.memory_space<vmem>>, vector<8x100xf32>
    %c0_60 = arith.constant 0 : index
    %c12 = arith.constant 12 : index
    %54 = vector.load %arg28[%c0_60, %c12] : memref<8x122xf32, #tpu.memory_space<vmem>>, vector<8x100xf32>
    %c0_61 = arith.constant 0 : index
    %c20_62 = arith.constant 20 : index
    %55 = vector.load %arg28[%c0_61, %c20_62] : memref<8x122xf32, #tpu.memory_space<vmem>>, vector<8x100xf32>
    %c0_63 = arith.constant 0 : index
    %c21 = arith.constant 21 : index
    %56 = vector.load %arg28[%c0_63, %c21] : memref<8x122xf32, #tpu.memory_space<vmem>>, vector<8x100xf32>
    %c0_64 = arith.constant 0 : index
    %c22 = arith.constant 22 : index
    %57 = vector.load %arg28[%c0_64, %c22] : memref<8x122xf32, #tpu.memory_space<vmem>>, vector<8x100xf32>
    %58 = tpu.concatenate %49, %50, %51, %52, %53, %54, %55, %56, %57 in 0 : vector<8x100xf32>, vector<8x100xf32>, vector<8x100xf32>, vector<8x100xf32>, vector<8x100xf32>, vector<8x100xf32>, vector<8x100xf32>, vector<8x100xf32>, vector<8x100xf32> -> vector<72x100xf32>
    %c0_65 = arith.constant 0 : index
    %c0_66 = arith.constant 0 : index
    %59 = vector.load %arg8[%c0_65, %c0_66] : memref<32x72xf32, #tpu.memory_space<vmem>>, vector<32x72xf32>
    %cst_67 = arith.constant dense<0.000000e+00> : vector<32x100xf32>
    %60 = tpu.matmul %59, %58, %cst_67 {dimension_numbers = #tpu.dot_dimension_numbers<[1], [0], [0], [1], [0, 0, 1, 1], [], []>} : vector<32x72xf32>, vector<72x100xf32>, vector<32x100xf32> -> vector<32x100xf32>
    %c0_68 = arith.constant 0 : index
    %c0_69 = arith.constant 0 : index
    %61 = vector.load %arg9[%c0_68, %c0_69] : memref<32x1xf32, #tpu.memory_space<vmem>>, vector<32x1xf32>
    %62 = vector.broadcast %61 : vector<32x1xf32> to vector<32x100xf32>
    %63 = arith.addf %60, %62 : vector<32x100xf32>
    %cst_70 = arith.constant 0.000000e+00 : f32
    %64 = vector.broadcast %cst_70 : f32 to vector<32x100xf32>
    %65 = arith.maximumf %63, %64 : vector<32x100xf32>
    %c0_71 = arith.constant 0 : index
    %c0_72 = arith.constant 0 : index
    %c0_73 = arith.constant 0 : index
    %66 = vector.load %arg10[%c0_71, %c0_72, %c0_73] : memref<16x100x1xf32, #tpu.memory_space<vmem>>, vector<1x100x1xf32>
    %67 = vector.shape_cast %66 : vector<1x100x1xf32> to vector<100x1xf32>
    %cst_74 = arith.constant dense<0.000000e+00> : vector<32x1xf32>
    %68 = tpu.matmul %65, %67, %cst_74 {dimension_numbers = #tpu.dot_dimension_numbers<[1], [0], [0], [1], [0, 0, 1, 1], [], []>} : vector<32x100xf32>, vector<100x1xf32>, vector<32x1xf32> -> vector<32x1xf32>
    %c1_75 = arith.constant 1 : index
    %c0_76 = arith.constant 0 : index
    %c0_77 = arith.constant 0 : index
    %69 = vector.load %arg10[%c1_75, %c0_76, %c0_77] : memref<16x100x1xf32, #tpu.memory_space<vmem>>, vector<1x100x1xf32>
    %70 = vector.shape_cast %69 : vector<1x100x1xf32> to vector<100x1xf32>
    %cst_78 = arith.constant dense<0.000000e+00> : vector<32x1xf32>
    %71 = tpu.matmul %65, %70, %cst_78 {dimension_numbers = #tpu.dot_dimension_numbers<[1], [0], [0], [1], [0, 0, 1, 1], [], []>} : vector<32x100xf32>, vector<100x1xf32>, vector<32x1xf32> -> vector<32x1xf32>
    %c2_79 = arith.constant 2 : index
    %c0_80 = arith.constant 0 : index
    %c0_81 = arith.constant 0 : index
    %72 = vector.load %arg10[%c2_79, %c0_80, %c0_81] : memref<16x100x1xf32, #tpu.memory_space<vmem>>, vector<1x100x1xf32>
    %73 = vector.shape_cast %72 : vector<1x100x1xf32> to vector<100x1xf32>
    %cst_82 = arith.constant dense<0.000000e+00> : vector<32x1xf32>
    %74 = tpu.matmul %65, %73, %cst_82 {dimension_numbers = #tpu.dot_dimension_numbers<[1], [0], [0], [1], [0, 0, 1, 1], [], []>} : vector<32x100xf32>, vector<100x1xf32>, vector<32x1xf32> -> vector<32x1xf32>
    %c3 = arith.constant 3 : index
    %c0_83 = arith.constant 0 : index
    %c0_84 = arith.constant 0 : index
    %75 = vector.load %arg10[%c3, %c0_83, %c0_84] : memref<16x100x1xf32, #tpu.memory_space<vmem>>, vector<1x100x1xf32>
    %76 = vector.shape_cast %75 : vector<1x100x1xf32> to vector<100x1xf32>
    %cst_85 = arith.constant dense<0.000000e+00> : vector<32x1xf32>
    %77 = tpu.matmul %65, %76, %cst_85 {dimension_numbers = #tpu.dot_dimension_numbers<[1], [0], [0], [1], [0, 0, 1, 1], [], []>} : vector<32x100xf32>, vector<100x1xf32>, vector<32x1xf32> -> vector<32x1xf32>
    %c4 = arith.constant 4 : index
    %c0_86 = arith.constant 0 : index
    %c0_87 = arith.constant 0 : index
    %78 = vector.load %arg10[%c4, %c0_86, %c0_87] : memref<16x100x1xf32, #tpu.memory_space<vmem>>, vector<1x100x1xf32>
    %79 = vector.shape_cast %78 : vector<1x100x1xf32> to vector<100x1xf32>
    %cst_88 = arith.constant dense<0.000000e+00> : vector<32x1xf32>
    %80 = tpu.matmul %65, %79, %cst_88 {dimension_numbers = #tpu.dot_dimension_numbers<[1], [0], [0], [1], [0, 0, 1, 1], [], []>} : vector<32x100xf32>, vector<100x1xf32>, vector<32x1xf32> -> vector<32x1xf32>
    %c5 = arith.constant 5 : index
    %c0_89 = arith.constant 0 : index
    %c0_90 = arith.constant 0 : index
    %81 = vector.load %arg10[%c5, %c0_89, %c0_90] : memref<16x100x1xf32, #tpu.memory_space<vmem>>, vector<1x100x1xf32>
    %82 = vector.shape_cast %81 : vector<1x100x1xf32> to vector<100x1xf32>
    %cst_91 = arith.constant dense<0.000000e+00> : vector<32x1xf32>
    %83 = tpu.matmul %65, %82, %cst_91 {dimension_numbers = #tpu.dot_dimension_numbers<[1], [0], [0], [1], [0, 0, 1, 1], [], []>} : vector<32x100xf32>, vector<100x1xf32>, vector<32x1xf32> -> vector<32x1xf32>
    %c6 = arith.constant 6 : index
    %c0_92 = arith.constant 0 : index
    %c0_93 = arith.constant 0 : index
    %84 = vector.load %arg10[%c6, %c0_92, %c0_93] : memref<16x100x1xf32, #tpu.memory_space<vmem>>, vector<1x100x1xf32>
    %85 = vector.shape_cast %84 : vector<1x100x1xf32> to vector<100x1xf32>
    %cst_94 = arith.constant dense<0.000000e+00> : vector<32x1xf32>
    %86 = tpu.matmul %65, %85, %cst_94 {dimension_numbers = #tpu.dot_dimension_numbers<[1], [0], [0], [1], [0, 0, 1, 1], [], []>} : vector<32x100xf32>, vector<100x1xf32>, vector<32x1xf32> -> vector<32x1xf32>
    %c7 = arith.constant 7 : index
    %c0_95 = arith.constant 0 : index
    %c0_96 = arith.constant 0 : index
    %87 = vector.load %arg10[%c7, %c0_95, %c0_96] : memref<16x100x1xf32, #tpu.memory_space<vmem>>, vector<1x100x1xf32>
    %88 = vector.shape_cast %87 : vector<1x100x1xf32> to vector<100x1xf32>
    %cst_97 = arith.constant dense<0.000000e+00> : vector<32x1xf32>
    %89 = tpu.matmul %65, %88, %cst_97 {dimension_numbers = #tpu.dot_dimension_numbers<[1], [0], [0], [1], [0, 0, 1, 1], [], []>} : vector<32x100xf32>, vector<100x1xf32>, vector<32x1xf32> -> vector<32x1xf32>
    %c8 = arith.constant 8 : index
    %c0_98 = arith.constant 0 : index
    %c0_99 = arith.constant 0 : index
    %90 = vector.load %arg10[%c8, %c0_98, %c0_99] : memref<16x100x1xf32, #tpu.memory_space<vmem>>, vector<1x100x1xf32>
    %91 = vector.shape_cast %90 : vector<1x100x1xf32> to vector<100x1xf32>
    %cst_100 = arith.constant dense<0.000000e+00> : vector<32x1xf32>
    %92 = tpu.matmul %65, %91, %cst_100 {dimension_numbers = #tpu.dot_dimension_numbers<[1], [0], [0], [1], [0, 0, 1, 1], [], []>} : vector<32x100xf32>, vector<100x1xf32>, vector<32x1xf32> -> vector<32x1xf32>
    %c9 = arith.constant 9 : index
    %c0_101 = arith.constant 0 : index
    %c0_102 = arith.constant 0 : index
    %93 = vector.load %arg10[%c9, %c0_101, %c0_102] : memref<16x100x1xf32, #tpu.memory_space<vmem>>, vector<1x100x1xf32>
    %94 = vector.shape_cast %93 : vector<1x100x1xf32> to vector<100x1xf32>
    %cst_103 = arith.constant dense<0.000000e+00> : vector<32x1xf32>
    %95 = tpu.matmul %65, %94, %cst_103 {dimension_numbers = #tpu.dot_dimension_numbers<[1], [0], [0], [1], [0, 0, 1, 1], [], []>} : vector<32x100xf32>, vector<100x1xf32>, vector<32x1xf32> -> vector<32x1xf32>
    %c10_104 = arith.constant 10 : index
    %c0_105 = arith.constant 0 : index
    %c0_106 = arith.constant 0 : index
    %96 = vector.load %arg10[%c10_104, %c0_105, %c0_106] : memref<16x100x1xf32, #tpu.memory_space<vmem>>, vector<1x100x1xf32>
    %97 = vector.shape_cast %96 : vector<1x100x1xf32> to vector<100x1xf32>
    %cst_107 = arith.constant dense<0.000000e+00> : vector<32x1xf32>
    %98 = tpu.matmul %65, %97, %cst_107 {dimension_numbers = #tpu.dot_dimension_numbers<[1], [0], [0], [1], [0, 0, 1, 1], [], []>} : vector<32x100xf32>, vector<100x1xf32>, vector<32x1xf32> -> vector<32x1xf32>
    %c11_108 = arith.constant 11 : index
    %c0_109 = arith.constant 0 : index
    %c0_110 = arith.constant 0 : index
    %99 = vector.load %arg10[%c11_108, %c0_109, %c0_110] : memref<16x100x1xf32, #tpu.memory_space<vmem>>, vector<1x100x1xf32>
    %100 = vector.shape_cast %99 : vector<1x100x1xf32> to vector<100x1xf32>
    %cst_111 = arith.constant dense<0.000000e+00> : vector<32x1xf32>
    %101 = tpu.matmul %65, %100, %cst_111 {dimension_numbers = #tpu.dot_dimension_numbers<[1], [0], [0], [1], [0, 0, 1, 1], [], []>} : vector<32x100xf32>, vector<100x1xf32>, vector<32x1xf32> -> vector<32x1xf32>
    %c12_112 = arith.constant 12 : index
    %c0_113 = arith.constant 0 : index
    %c0_114 = arith.constant 0 : index
    %102 = vector.load %arg10[%c12_112, %c0_113, %c0_114] : memref<16x100x1xf32, #tpu.memory_space<vmem>>, vector<1x100x1xf32>
    %103 = vector.shape_cast %102 : vector<1x100x1xf32> to vector<100x1xf32>
    %cst_115 = arith.constant dense<0.000000e+00> : vector<32x1xf32>
    %104 = tpu.matmul %65, %103, %cst_115 {dimension_numbers = #tpu.dot_dimension_numbers<[1], [0], [0], [1], [0, 0, 1, 1], [], []>} : vector<32x100xf32>, vector<100x1xf32>, vector<32x1xf32> -> vector<32x1xf32>
    %c13 = arith.constant 13 : index
    %c0_116 = arith.constant 0 : index
    %c0_117 = arith.constant 0 : index
    %105 = vector.load %arg10[%c13, %c0_116, %c0_117] : memref<16x100x1xf32, #tpu.memory_space<vmem>>, vector<1x100x1xf32>
    %106 = vector.shape_cast %105 : vector<1x100x1xf32> to vector<100x1xf32>
    %cst_118 = arith.constant dense<0.000000e+00> : vector<32x1xf32>
    %107 = tpu.matmul %65, %106, %cst_118 {dimension_numbers = #tpu.dot_dimension_numbers<[1], [0], [0], [1], [0, 0, 1, 1], [], []>} : vector<32x100xf32>, vector<100x1xf32>, vector<32x1xf32> -> vector<32x1xf32>
    %c14 = arith.constant 14 : index
    %c0_119 = arith.constant 0 : index
    %c0_120 = arith.constant 0 : index
    %108 = vector.load %arg10[%c14, %c0_119, %c0_120] : memref<16x100x1xf32, #tpu.memory_space<vmem>>, vector<1x100x1xf32>
    %109 = vector.shape_cast %108 : vector<1x100x1xf32> to vector<100x1xf32>
    %cst_121 = arith.constant dense<0.000000e+00> : vector<32x1xf32>
    %110 = tpu.matmul %65, %109, %cst_121 {dimension_numbers = #tpu.dot_dimension_numbers<[1], [0], [0], [1], [0, 0, 1, 1], [], []>} : vector<32x100xf32>, vector<100x1xf32>, vector<32x1xf32> -> vector<32x1xf32>
    %c15 = arith.constant 15 : index
    %c0_122 = arith.constant 0 : index
    %c0_123 = arith.constant 0 : index
    %111 = vector.load %arg10[%c15, %c0_122, %c0_123] : memref<16x100x1xf32, #tpu.memory_space<vmem>>, vector<1x100x1xf32>
    %112 = vector.shape_cast %111 : vector<1x100x1xf32> to vector<100x1xf32>
    %cst_124 = arith.constant dense<0.000000e+00> : vector<32x1xf32>
    %113 = tpu.matmul %65, %112, %cst_124 {dimension_numbers = #tpu.dot_dimension_numbers<[1], [0], [0], [1], [0, 0, 1, 1], [], []>} : vector<32x100xf32>, vector<100x1xf32>, vector<32x1xf32> -> vector<32x1xf32>
    %114 = tpu.concatenate %68, %71, %74, %77, %80, %83, %86, %89, %92, %95, %98, %101, %104, %107, %110, %113 in 0 : vector<32x1xf32>, vector<32x1xf32>, vector<32x1xf32>, vector<32x1xf32>, vector<32x1xf32>, vector<32x1xf32>, vector<32x1xf32>, vector<32x1xf32>, vector<32x1xf32>, vector<32x1xf32>, vector<32x1xf32>, vector<32x1xf32>, vector<32x1xf32>, vector<32x1xf32>, vector<32x1xf32>, vector<32x1xf32> -> vector<512x1xf32>
    %c0_125 = arith.constant 0 : index
    %c0_126 = arith.constant 0 : index
    %115 = vector.load %arg11[%c0_125, %c0_126] : memref<128x512xf32, #tpu.memory_space<vmem>>, vector<128x512xf32>
    %cst_127 = arith.constant dense<0.000000e+00> : vector<128x1xf32>
    %116 = tpu.matmul %115, %114, %cst_127 {dimension_numbers = #tpu.dot_dimension_numbers<[1], [0], [0], [1], [0, 0, 1, 1], [], []>} : vector<128x512xf32>, vector<512x1xf32>, vector<128x1xf32> -> vector<128x1xf32>
    %c0_128 = arith.constant 0 : index
    %c0_129 = arith.constant 0 : index
    %117 = vector.load %arg12[%c0_128, %c0_129] : memref<128x1xf32, #tpu.memory_space<vmem>>, vector<128x1xf32>
    %118 = arith.addf %116, %117 : vector<128x1xf32>
    %cst_130 = arith.constant 0.000000e+00 : f32
    %119 = vector.broadcast %cst_130 : f32 to vector<128x1xf32>
    %120 = arith.maximumf %118, %119 : vector<128x1xf32>
    %c0_131 = arith.constant 0 : index
    %c0_132 = arith.constant 0 : index
    %121 = vector.load %arg13[%c0_131, %c0_132] : memref<64x128xf32, #tpu.memory_space<vmem>>, vector<64x128xf32>
    %cst_133 = arith.constant dense<0.000000e+00> : vector<64x1xf32>
    %122 = tpu.matmul %121, %120, %cst_133 {dimension_numbers = #tpu.dot_dimension_numbers<[1], [0], [0], [1], [0, 0, 1, 1], [], []>} : vector<64x128xf32>, vector<128x1xf32>, vector<64x1xf32> -> vector<64x1xf32>
    %c0_134 = arith.constant 0 : index
    %c0_135 = arith.constant 0 : index
    %123 = vector.load %arg14[%c0_134, %c0_135] : memref<64x1xf32, #tpu.memory_space<vmem>>, vector<64x1xf32>
    %124 = arith.addf %122, %123 : vector<64x1xf32>
    %cst_136 = arith.constant 0.000000e+00 : f32
    %125 = vector.broadcast %cst_136 : f32 to vector<64x1xf32>
    %126 = arith.maximumf %124, %125 : vector<64x1xf32>
    %c0_137 = arith.constant 0 : index
    %c0_138 = arith.constant 0 : index
    %127 = vector.load %arg15[%c0_137, %c0_138] : memref<32x64xf32, #tpu.memory_space<vmem>>, vector<32x64xf32>
    %cst_139 = arith.constant dense<0.000000e+00> : vector<32x1xf32>
    %128 = tpu.matmul %127, %126, %cst_139 {dimension_numbers = #tpu.dot_dimension_numbers<[1], [0], [0], [1], [0, 0, 1, 1], [], []>} : vector<32x64xf32>, vector<64x1xf32>, vector<32x1xf32> -> vector<32x1xf32>
    %c0_140 = arith.constant 0 : index
    %c0_141 = arith.constant 0 : index
    %129 = vector.load %arg16[%c0_140, %c0_141] : memref<32x1xf32, #tpu.memory_space<vmem>>, vector<32x1xf32>
    %130 = arith.addf %128, %129 : vector<32x1xf32>
    %c0_142 = arith.constant 0 : index
    %c0_143 = arith.constant 0 : index
    %131 = vector.load %arg17[%c0_142, %c0_143] : memref<32x72xf32, #tpu.memory_space<vmem>>, vector<32x72xf32>
    %cst_144 = arith.constant dense<0.000000e+00> : vector<32x100xf32>
    %132 = tpu.matmul %131, %58, %cst_144 {dimension_numbers = #tpu.dot_dimension_numbers<[1], [0], [0], [1], [0, 0, 1, 1], [], []>} : vector<32x72xf32>, vector<72x100xf32>, vector<32x100xf32> -> vector<32x100xf32>
    %c0_145 = arith.constant 0 : index
    %c0_146 = arith.constant 0 : index
    %133 = vector.load %arg18[%c0_145, %c0_146] : memref<32x1xf32, #tpu.memory_space<vmem>>, vector<32x1xf32>
    %134 = vector.broadcast %133 : vector<32x1xf32> to vector<32x100xf32>
    %135 = arith.addf %132, %134 : vector<32x100xf32>
    %cst_147 = arith.constant 0.000000e+00 : f32
    %136 = vector.broadcast %cst_147 : f32 to vector<32x100xf32>
    %137 = arith.maximumf %135, %136 : vector<32x100xf32>
    %c0_148 = arith.constant 0 : index
    %c0_149 = arith.constant 0 : index
    %138 = vector.load %arg22[%c0_148, %c0_149] : memref<100x122xf32, #tpu.memory_space<vmem>>, vector<100x122xf32>
    %cst_150 = arith.constant dense<0.000000e+00> : vector<32x122xf32>
    %139 = tpu.matmul %137, %138, %cst_150 {dimension_numbers = #tpu.dot_dimension_numbers<[1], [0], [0], [1], [0, 0, 1, 1], [], []>} : vector<32x100xf32>, vector<100x122xf32>, vector<32x122xf32> -> vector<32x122xf32>
    %c0_151 = arith.constant 0 : index
    %c0_152 = arith.constant 0 : index
    %140 = vector.load %arg29[%c0_151, %c0_152] : memref<32x122xf32, #tpu.memory_space<vmem>>, vector<32x122xf32>
    tpu.vector_store %arg29[%c0_151, %c0_152], %139 {strides = array<i32>} : memref<32x122xf32, #tpu.memory_space<vmem>>, vector<32x122xf32>,
    %c0_153 = arith.constant 0 : index
    %c0_154 = arith.constant 0 : index
    %141 = vector.load %arg29[%c0_153, %c0_154] : memref<32x122xf32, #tpu.memory_space<vmem>>, vector<32x100xf32>
    %c0_155 = arith.constant 0 : index
    %c1_156 = arith.constant 1 : index
    %142 = vector.load %arg29[%c0_155, %c1_156] : memref<32x122xf32, #tpu.memory_space<vmem>>, vector<32x100xf32>
    %c0_157 = arith.constant 0 : index
    %c2_158 = arith.constant 2 : index
    %143 = vector.load %arg29[%c0_157, %c2_158] : memref<32x122xf32, #tpu.memory_space<vmem>>, vector<32x100xf32>
    %c0_159 = arith.constant 0 : index
    %c10_160 = arith.constant 10 : index
    %144 = vector.load %arg29[%c0_159, %c10_160] : memref<32x122xf32, #tpu.memory_space<vmem>>, vector<32x100xf32>
    %c0_161 = arith.constant 0 : index
    %c11_162 = arith.constant 11 : index
    %145 = vector.load %arg29[%c0_161, %c11_162] : memref<32x122xf32, #tpu.memory_space<vmem>>, vector<32x100xf32>
    %c0_163 = arith.constant 0 : index
    %c12_164 = arith.constant 12 : index
    %146 = vector.load %arg29[%c0_163, %c12_164] : memref<32x122xf32, #tpu.memory_space<vmem>>, vector<32x100xf32>
    %c0_165 = arith.constant 0 : index
    %c20_166 = arith.constant 20 : index
    %147 = vector.load %arg29[%c0_165, %c20_166] : memref<32x122xf32, #tpu.memory_space<vmem>>, vector<32x100xf32>
    %c0_167 = arith.constant 0 : index
    %c21_168 = arith.constant 21 : index
    %148 = vector.load %arg29[%c0_167, %c21_168] : memref<32x122xf32, #tpu.memory_space<vmem>>, vector<32x100xf32>
    %c0_169 = arith.constant 0 : index
    %c22_170 = arith.constant 22 : index
    %149 = vector.load %arg29[%c0_169, %c22_170] : memref<32x122xf32, #tpu.memory_space<vmem>>, vector<32x100xf32>
    %150 = tpu.concatenate %141, %142, %143, %144, %145, %146, %147, %148, %149 in 0 : vector<32x100xf32>, vector<32x100xf32>, vector<32x100xf32>, vector<32x100xf32>, vector<32x100xf32>, vector<32x100xf32>, vector<32x100xf32>, vector<32x100xf32>, vector<32x100xf32> -> vector<288x100xf32>
    %c0_171 = arith.constant 0 : index
    %c0_172 = arith.constant 0 : index
    %151 = vector.load %arg19[%c0_171, %c0_172] : memref<32x288xf32, #tpu.memory_space<vmem>>, vector<32x288xf32>
    %cst_173 = arith.constant dense<0.000000e+00> : vector<32x100xf32>
    %152 = tpu.matmul %151, %150, %cst_173 {dimension_numbers = #tpu.dot_dimension_numbers<[1], [0], [0], [1], [0, 0, 1, 1], [], []>} : vector<32x288xf32>, vector<288x100xf32>, vector<32x100xf32> -> vector<32x100xf32>
    %cst_174 = arith.constant 0.000000e+00 : f32
    %153 = vector.broadcast %cst_174 : f32 to vector<32x100xf32>
    %154 = arith.maximumf %152, %153 : vector<32x100xf32>
    %c0_175 = arith.constant 0 : index
    %c0_176 = arith.constant 0 : index
    %155 = vector.load %arg22[%c0_175, %c0_176] : memref<100x122xf32, #tpu.memory_space<vmem>>, vector<100x122xf32>
    %cst_177 = arith.constant dense<0.000000e+00> : vector<32x122xf32>
    %156 = tpu.matmul %154, %155, %cst_177 {dimension_numbers = #tpu.dot_dimension_numbers<[1], [0], [0], [1], [0, 0, 1, 1], [], []>} : vector<32x100xf32>, vector<100x122xf32>, vector<32x122xf32> -> vector<32x122xf32>
    %c0_178 = arith.constant 0 : index
    %c0_179 = arith.constant 0 : index
    %157 = vector.load %arg29[%c0_178, %c0_179] : memref<32x122xf32, #tpu.memory_space<vmem>>, vector<32x122xf32>
    tpu.vector_store %arg29[%c0_178, %c0_179], %156 {strides = array<i32>} : memref<32x122xf32, #tpu.memory_space<vmem>>, vector<32x122xf32>,
    %c0_180 = arith.constant 0 : index
    %c0_181 = arith.constant 0 : index
    %158 = vector.load %arg29[%c0_180, %c0_181] : memref<32x122xf32, #tpu.memory_space<vmem>>, vector<32x100xf32>
    %c0_182 = arith.constant 0 : index
    %c1_183 = arith.constant 1 : index
    %159 = vector.load %arg29[%c0_182, %c1_183] : memref<32x122xf32, #tpu.memory_space<vmem>>, vector<32x100xf32>
    %c0_184 = arith.constant 0 : index
    %c2_185 = arith.constant 2 : index
    %160 = vector.load %arg29[%c0_184, %c2_185] : memref<32x122xf32, #tpu.memory_space<vmem>>, vector<32x100xf32>
    %c0_186 = arith.constant 0 : index
    %c10_187 = arith.constant 10 : index
    %161 = vector.load %arg29[%c0_186, %c10_187] : memref<32x122xf32, #tpu.memory_space<vmem>>, vector<32x100xf32>
    %c0_188 = arith.constant 0 : index
    %c11_189 = arith.constant 11 : index
    %162 = vector.load %arg29[%c0_188, %c11_189] : memref<32x122xf32, #tpu.memory_space<vmem>>, vector<32x100xf32>
    %c0_190 = arith.constant 0 : index
    %c12_191 = arith.constant 12 : index
    %163 = vector.load %arg29[%c0_190, %c12_191] : memref<32x122xf32, #tpu.memory_space<vmem>>, vector<32x100xf32>
    %c0_192 = arith.constant 0 : index
    %c20_193 = arith.constant 20 : index
    %164 = vector.load %arg29[%c0_192, %c20_193] : memref<32x122xf32, #tpu.memory_space<vmem>>, vector<32x100xf32>
    %c0_194 = arith.constant 0 : index
    %c21_195 = arith.constant 21 : index
    %165 = vector.load %arg29[%c0_194, %c21_195] : memref<32x122xf32, #tpu.memory_space<vmem>>, vector<32x100xf32>
    %c0_196 = arith.constant 0 : index
    %c22_197 = arith.constant 22 : index
    %166 = vector.load %arg29[%c0_196, %c22_197] : memref<32x122xf32, #tpu.memory_space<vmem>>, vector<32x100xf32>
    %167 = tpu.concatenate %158, %159, %160, %161, %162, %163, %164, %165, %166 in 0 : vector<32x100xf32>, vector<32x100xf32>, vector<32x100xf32>, vector<32x100xf32>, vector<32x100xf32>, vector<32x100xf32>, vector<32x100xf32>, vector<32x100xf32>, vector<32x100xf32> -> vector<288x100xf32>
    %c0_198 = arith.constant 0 : index
    %c0_199 = arith.constant 0 : index
    %168 = vector.load %arg20[%c0_198, %c0_199] : memref<32x288xf32, #tpu.memory_space<vmem>>, vector<32x288xf32>
    %cst_200 = arith.constant dense<0.000000e+00> : vector<32x100xf32>
    %169 = tpu.matmul %168, %167, %cst_200 {dimension_numbers = #tpu.dot_dimension_numbers<[1], [0], [0], [1], [0, 0, 1, 1], [], []>} : vector<32x288xf32>, vector<288x100xf32>, vector<32x100xf32> -> vector<32x100xf32>
    %cst_201 = arith.constant 0.000000e+00 : f32
    %170 = vector.broadcast %cst_201 : f32 to vector<32x100xf32>
    %171 = arith.maximumf %169, %170 : vector<32x100xf32>
    %c0_202 = arith.constant 0 : index
    %c0_203 = arith.constant 0 : index
    %172 = vector.load %arg22[%c0_202, %c0_203] : memref<100x122xf32, #tpu.memory_space<vmem>>, vector<100x122xf32>
    %cst_204 = arith.constant dense<0.000000e+00> : vector<32x122xf32>
    %173 = tpu.matmul %171, %172, %cst_204 {dimension_numbers = #tpu.dot_dimension_numbers<[1], [0], [0], [1], [0, 0, 1, 1], [], []>} : vector<32x100xf32>, vector<100x122xf32>, vector<32x122xf32> -> vector<32x122xf32>
    %c0_205 = arith.constant 0 : index
    %c0_206 = arith.constant 0 : index
    %174 = vector.load %arg29[%c0_205, %c0_206] : memref<32x122xf32, #tpu.memory_space<vmem>>, vector<32x122xf32>
    tpu.vector_store %arg29[%c0_205, %c0_206], %173 {strides = array<i32>} : memref<32x122xf32, #tpu.memory_space<vmem>>, vector<32x122xf32>,
    %c0_207 = arith.constant 0 : index
    %c0_208 = arith.constant 0 : index
    %175 = vector.load %arg29[%c0_207, %c0_208] : memref<32x122xf32, #tpu.memory_space<vmem>>, vector<32x100xf32>
    %c0_209 = arith.constant 0 : index
    %c1_210 = arith.constant 1 : index
    %176 = vector.load %arg29[%c0_209, %c1_210] : memref<32x122xf32, #tpu.memory_space<vmem>>, vector<32x100xf32>
    %c0_211 = arith.constant 0 : index
    %c2_212 = arith.constant 2 : index
    %177 = vector.load %arg29[%c0_211, %c2_212] : memref<32x122xf32, #tpu.memory_space<vmem>>, vector<32x100xf32>
    %c0_213 = arith.constant 0 : index
    %c10_214 = arith.constant 10 : index
    %178 = vector.load %arg29[%c0_213, %c10_214] : memref<32x122xf32, #tpu.memory_space<vmem>>, vector<32x100xf32>
    %c0_215 = arith.constant 0 : index
    %c11_216 = arith.constant 11 : index
    %179 = vector.load %arg29[%c0_215, %c11_216] : memref<32x122xf32, #tpu.memory_space<vmem>>, vector<32x100xf32>
    %c0_217 = arith.constant 0 : index
    %c12_218 = arith.constant 12 : index
    %180 = vector.load %arg29[%c0_217, %c12_218] : memref<32x122xf32, #tpu.memory_space<vmem>>, vector<32x100xf32>
    %c0_219 = arith.constant 0 : index
    %c20_220 = arith.constant 20 : index
    %181 = vector.load %arg29[%c0_219, %c20_220] : memref<32x122xf32, #tpu.memory_space<vmem>>, vector<32x100xf32>
    %c0_221 = arith.constant 0 : index
    %c21_222 = arith.constant 21 : index
    %182 = vector.load %arg29[%c0_221, %c21_222] : memref<32x122xf32, #tpu.memory_space<vmem>>, vector<32x100xf32>
    %c0_223 = arith.constant 0 : index
    %c22_224 = arith.constant 22 : index
    %183 = vector.load %arg29[%c0_223, %c22_224] : memref<32x122xf32, #tpu.memory_space<vmem>>, vector<32x100xf32>
    %184 = tpu.concatenate %175, %176, %177, %178, %179, %180, %181, %182, %183 in 0 : vector<32x100xf32>, vector<32x100xf32>, vector<32x100xf32>, vector<32x100xf32>, vector<32x100xf32>, vector<32x100xf32>, vector<32x100xf32>, vector<32x100xf32>, vector<32x100xf32> -> vector<288x100xf32>
    %c0_225 = arith.constant 0 : index
    %c0_226 = arith.constant 0 : index
    %185 = vector.load %arg21[%c0_225, %c0_226] : memref<32x288xf32, #tpu.memory_space<vmem>>, vector<32x288xf32>
    %cst_227 = arith.constant dense<0.000000e+00> : vector<32x100xf32>
    %186 = tpu.matmul %185, %184, %cst_227 {dimension_numbers = #tpu.dot_dimension_numbers<[1], [0], [0], [1], [0, 0, 1, 1], [], []>} : vector<32x288xf32>, vector<288x100xf32>, vector<32x100xf32> -> vector<32x100xf32>
    %cst_228 = arith.constant 0.000000e+00 : f32
    %187 = vector.broadcast %cst_228 : f32 to vector<32x100xf32>
    %188 = arith.maximumf %186, %187 : vector<32x100xf32>
    %c0_229 = arith.constant 0 : index
    %c0_230 = arith.constant 0 : index
    %189 = vector.load %arg23[%c0_229, %c0_230] : memref<100x64xf32, #tpu.memory_space<vmem>>, vector<100x64xf32>
    %cst_231 = arith.constant dense<0.000000e+00> : vector<32x64xf32>
    %190 = tpu.matmul %188, %189, %cst_231 {dimension_numbers = #tpu.dot_dimension_numbers<[1], [0], [0], [1], [0, 0, 1, 1], [], []>} : vector<32x100xf32>, vector<100x64xf32>, vector<32x64xf32> -> vector<32x64xf32>
    %191 = vector.broadcast %130 : vector<32x1xf32> to vector<32x64xf32>
    %192 = arith.addf %190, %191 : vector<32x64xf32>
    %cst_232 = arith.constant 0.000000e+00 : f32
    %193 = vector.broadcast %cst_232 : f32 to vector<32x64xf32>
    %194 = arith.maximumf %192, %193 : vector<32x64xf32>
    %c0_233 = arith.constant 0 : index
    %c0_234 = arith.constant 0 : index
    %195 = vector.load %arg24[%c0_233, %c0_234] : memref<48x32xf32, #tpu.memory_space<vmem>>, vector<48x32xf32>
    %cst_235 = arith.constant dense<0.000000e+00> : vector<48x64xf32>
    %196 = tpu.matmul %195, %194, %cst_235 {dimension_numbers = #tpu.dot_dimension_numbers<[1], [0], [0], [1], [0, 0, 1, 1], [], []>} : vector<48x32xf32>, vector<32x64xf32>, vector<48x64xf32> -> vector<48x64xf32>
    %c0_236 = arith.constant 0 : index
    %c0_237 = arith.constant 0 : index
    %197 = vector.load %arg25[%c0_236, %c0_237] : memref<48x1xf32, #tpu.memory_space<vmem>>, vector<48x1xf32>
    %198 = vector.broadcast %197 : vector<48x1xf32> to vector<48x64xf32>
    %199 = arith.addf %196, %198 : vector<48x64xf32>
    %c0_238 = arith.constant 0 : index
    %c0_239 = arith.constant 0 : index
    %c0_240 = arith.constant 0 : index
    %200 = vector.load %arg26[%c0_238, %c0_239, %c0_240] : memref<1x48x64xf32, #tpu.memory_space<vmem>>, vector<1x48x64xf32>
    %201 = vector.shape_cast %200 : vector<1x48x64xf32> to vector<48x64xf32>
    %202 = vector.shape_cast %199 : vector<48x64xf32> to vector<1x48x64xf32>
    tpu.vector_store %arg26[%c0_238, %c0_239, %c0_240], %202 {strides = array<i32>} : memref<1x48x64xf32, #tpu.memory_space<vmem>>, vector<1x48x64xf32>,
    return
  }
  func.func @transform_0(%arg0: i32) -> (i32, i32, i32) {
    %c0_i32 = arith.constant 0 : i32
    %c0_i32_0 = arith.constant 0 : i32
    %c0_i32_1 = arith.constant 0 : i32
    return %arg0, %c0_i32, %c0_i32_0 : i32, i32, i32
  }
  func.func @transform_1(%arg0: i32) -> (i32, i32) {
    %c0_i32 = arith.constant 0 : i32
    %c0_i32_0 = arith.constant 0 : i32
    %c0_i32_1 = arith.constant 0 : i32
    return %c0_i32, %c0_i32_0 : i32, i32
  }
  func.func @transform_2(%arg0: i32) -> (i32, i32) {
    %c0_i32 = arith.constant 0 : i32
    %c0_i32_0 = arith.constant 0 : i32
    %c0_i32_1 = arith.constant 0 : i32
    return %c0_i32, %c0_i32_0 : i32, i32
  }
  func.func @transform_3(%arg0: i32) -> (i32, i32) {
    %c0_i32 = arith.constant 0 : i32
    %c0_i32_0 = arith.constant 0 : i32
    %c0_i32_1 = arith.constant 0 : i32
    return %c0_i32, %c0_i32_0 : i32, i32
  }
  func.func @transform_4(%arg0: i32) -> (i32, i32) {
    %c0_i32 = arith.constant 0 : i32
    %c0_i32_0 = arith.constant 0 : i32
    %c0_i32_1 = arith.constant 0 : i32
    return %c0_i32, %c0_i32_0 : i32, i32
  }
  func.func @transform_5(%arg0: i32) -> (i32, i32) {
    %c0_i32 = arith.constant 0 : i32
    %c0_i32_0 = arith.constant 0 : i32
    %c0_i32_1 = arith.constant 0 : i32
    return %c0_i32, %c0_i32_0 : i32, i32
  }
  func.func @transform_6(%arg0: i32) -> (i32, i32) {
    %c0_i32 = arith.constant 0 : i32
    %c0_i32_0 = arith.constant 0 : i32
    %c0_i32_1 = arith.constant 0 : i32
    return %c0_i32, %c0_i32_0 : i32, i32
  }
  func.func @transform_7(%arg0: i32) -> (i32, i32) {
    %c0_i32 = arith.constant 0 : i32
    %c0_i32_0 = arith.constant 0 : i32
    %c0_i32_1 = arith.constant 0 : i32
    return %c0_i32, %c0_i32_0 : i32, i32
  }
  func.func @transform_8(%arg0: i32) -> (i32, i32) {
    %c0_i32 = arith.constant 0 : i32
    %c0_i32_0 = arith.constant 0 : i32
    %c0_i32_1 = arith.constant 0 : i32
    return %c0_i32, %c0_i32_0 : i32, i32
  }
  func.func @transform_9(%arg0: i32) -> (i32, i32, i32) {
    %c0_i32 = arith.constant 0 : i32
    %c0_i32_0 = arith.constant 0 : i32
    %c0_i32_1 = arith.constant 0 : i32
    %c0_i32_2 = arith.constant 0 : i32
    return %c0_i32, %c0_i32_0, %c0_i32_1 : i32, i32, i32
  }
  func.func @transform_10(%arg0: i32) -> (i32, i32) {
    %c0_i32 = arith.constant 0 : i32
    %c0_i32_0 = arith.constant 0 : i32
    %c0_i32_1 = arith.constant 0 : i32
    return %c0_i32, %c0_i32_0 : i32, i32
  }
  func.func @transform_11(%arg0: i32) -> (i32, i32) {
    %c0_i32 = arith.constant 0 : i32
    %c0_i32_0 = arith.constant 0 : i32
    %c0_i32_1 = arith.constant 0 : i32
    return %c0_i32, %c0_i32_0 : i32, i32
  }
  func.func @transform_12(%arg0: i32) -> (i32, i32) {
    %c0_i32 = arith.constant 0 : i32
    %c0_i32_0 = arith.constant 0 : i32
    %c0_i32_1 = arith.constant 0 : i32
    return %c0_i32, %c0_i32_0 : i32, i32
  }
  func.func @transform_13(%arg0: i32) -> (i32, i32) {
    %c0_i32 = arith.constant 0 : i32
    %c0_i32_0 = arith.constant 0 : i32
    %c0_i32_1 = arith.constant 0 : i32
    return %c0_i32, %c0_i32_0 : i32, i32
  }
  func.func @transform_14(%arg0: i32) -> (i32, i32) {
    %c0_i32 = arith.constant 0 : i32
    %c0_i32_0 = arith.constant 0 : i32
    %c0_i32_1 = arith.constant 0 : i32
    return %c0_i32, %c0_i32_0 : i32, i32
  }
  func.func @transform_15(%arg0: i32) -> (i32, i32) {
    %c0_i32 = arith.constant 0 : i32
    %c0_i32_0 = arith.constant 0 : i32
    %c0_i32_1 = arith.constant 0 : i32
    return %c0_i32, %c0_i32_0 : i32, i32
  }
  func.func @transform_16(%arg0: i32) -> (i32, i32) {
    %c0_i32 = arith.constant 0 : i32
    %c0_i32_0 = arith.constant 0 : i32
    %c0_i32_1 = arith.constant 0 : i32
    return %c0_i32, %c0_i32_0 : i32, i32
  }
  func.func @transform_17(%arg0: i32) -> (i32, i32) {
    %c0_i32 = arith.constant 0 : i32
    %c0_i32_0 = arith.constant 0 : i32
    %c0_i32_1 = arith.constant 0 : i32
    return %c0_i32, %c0_i32_0 : i32, i32
  }
  func.func @transform_18(%arg0: i32) -> (i32, i32) {
    %c0_i32 = arith.constant 0 : i32
    %c0_i32_0 = arith.constant 0 : i32
    %c0_i32_1 = arith.constant 0 : i32
    return %c0_i32, %c0_i32_0 : i32, i32
  }
  func.func @transform_19(%arg0: i32) -> (i32, i32) {
    %c0_i32 = arith.constant 0 : i32
    %c0_i32_0 = arith.constant 0 : i32
    %c0_i32_1 = arith.constant 0 : i32
    return %c0_i32, %c0_i32_0 : i32, i32
  }
  func.func @transform_20(%arg0: i32) -> (i32, i32) {
    %c0_i32 = arith.constant 0 : i32
    %c0_i32_0 = arith.constant 0 : i32
    %c0_i32_1 = arith.constant 0 : i32
    return %c0_i32, %c0_i32_0 : i32, i32
  }
  func.func @transform_21(%arg0: i32) -> (i32, i32) {
    %c0_i32 = arith.constant 0 : i32
    %c0_i32_0 = arith.constant 0 : i32
    %c0_i32_1 = arith.constant 0 : i32
    return %c0_i32, %c0_i32_0 : i32, i32
  }
  func.func @transform_22(%arg0: i32) -> (i32, i32) {
    %c0_i32 = arith.constant 0 : i32
    %c0_i32_0 = arith.constant 0 : i32
    %c0_i32_1 = arith.constant 0 : i32
    return %c0_i32, %c0_i32_0 : i32, i32
  }
  func.func @transform_23(%arg0: i32) -> (i32, i32) {
    %c0_i32 = arith.constant 0 : i32
    %c0_i32_0 = arith.constant 0 : i32
    %c0_i32_1 = arith.constant 0 : i32
    return %c0_i32, %c0_i32_0 : i32, i32
  }
  func.func @transform_24(%arg0: i32) -> (i32, i32) {
    %c0_i32 = arith.constant 0 : i32
    %c0_i32_0 = arith.constant 0 : i32
    %c0_i32_1 = arith.constant 0 : i32
    return %c0_i32, %c0_i32_0 : i32, i32
  }
  func.func @transform_25(%arg0: i32) -> (i32, i32, i32) {
    %c0_i32 = arith.constant 0 : i32
    %c0_i32_0 = arith.constant 0 : i32
    %c0_i32_1 = arith.constant 0 : i32
    return %arg0, %c0_i32, %c0_i32_0 : i32, i32, i32
  }
}

</mosaic_0001>

<llo_original>
// kernel: compute_coeffs_forward.1
$region0: #{compute_coeffs_forward.1}
  #allocation0 [shape = 'u32[]', space=smem, size = 0x4, offset = 0x4, fixed_abs, tag = 'smem constant byte address 0x4 - core index']
  #allocation1 [shape = 'u32[72,128]{1,0:T(1,128)}', space=vmem, size = 0x9000, scoped, tag = 'internal scratch']
  #allocation2 [shape = 'f32[8,362]{1,0:T(8,128)}', space=vmem, size = 0x3000, scoped, tag = 'scratch operand']
  #allocation3 [shape = 'f32[8,122]{1,0:T(8,128)}', space=vmem, size = 0x1000, scoped, tag = 'scratch operand']
  #allocation4 [shape = 'f32[32,122]{1,0:T(8,128)}', space=vmem, size = 0x4000, scoped, tag = 'scratch operand']
  %s0 = inlined_call_operand.vmem [shape: f32[2,8,1226], index: 0, kind: input, shape index: {}]
  %s1 = inlined_call_operand.hbm [shape: f32[8,72], index: 1, kind: input, shape index: {}]
  %s2 = inlined_call_operand.vmem [shape: f32[8,1], index: 2, kind: input, shape index: {}]
  %s3 = inlined_call_operand.vmem [shape: f32[1156,362], index: 3, kind: input, shape index: {}]
  %s4 = inlined_call_operand.hbm [shape: f32[8,72], index: 4, kind: input, shape index: {}]
  %s5 = inlined_call_operand.vmem [shape: f32[8,1], index: 5, kind: input, shape index: {}]
  %s6 = inlined_call_operand.hbm [shape: f32[324,122], index: 6, kind: input, shape index: {}]
  %s7 = inlined_call_operand.hbm [shape: f32[32,72], index: 7, kind: input, shape index: {}]
  %s8 = inlined_call_operand.vmem [shape: f32[32,1], index: 8, kind: input, shape index: {}]
  %s9 = inlined_call_operand.vmem [shape: f32[16,100,1], index: 9, kind: input, shape index: {}]
  %s10 = inlined_call_operand.vmem [shape: f32[128,512], index: 10, kind: input, shape index: {}]
  %s11 = inlined_call_operand.vmem [shape: f32[128,1], index: 11, kind: input, shape index: {}]
  %s12 = inlined_call_operand.vmem [shape: f32[64,128], index: 12, kind: input, shape index: {}]
  %s13 = inlined_call_operand.vmem [shape: f32[64,1], index: 13, kind: input, shape index: {}]
  %s14 = inlined_call_operand.hbm [shape: f32[32,64], index: 14, kind: input, shape index: {}]
  %s15 = inlined_call_operand.vmem [shape: f32[32,1], index: 15, kind: input, shape index: {}]
  %s16 = inlined_call_operand.hbm [shape: f32[32,72], index: 16, kind: input, shape index: {}]
  %s17 = inlined_call_operand.vmem [shape: f32[32,1], index: 17, kind: input, shape index: {}]
  %s18 = inlined_call_operand.vmem [shape: f32[32,288], index: 18, kind: input, shape index: {}]
  %s19 = inlined_call_operand.hbm [shape: f32[32,288], index: 19, kind: input, shape index: {}]
  %s20 = inlined_call_operand.hbm [shape: f32[32,288], index: 20, kind: input, shape index: {}]
  %s21 = inlined_call_operand.vmem [shape: f32[100,122], index: 21, kind: input, shape index: {}]
  %s22 = inlined_call_operand.vmem [shape: f32[100,64], index: 22, kind: input, shape index: {}]
  %s23 = inlined_call_operand.vmem [shape: f32[48,32], index: 23, kind: input, shape index: {}]
  %s24 = inlined_call_operand.vmem [shape: f32[48,1], index: 24, kind: input, shape index: {}]
  %s25 = inlined_call_operand.vmem [shape: f32[2,48,64], index: 25, kind: output, shape index: {}]
  %s26 = sld [smem:[#allocation0]]
  $region165: #{compute_coeffs_forward.1} parent=0
    _
  %s28 = ssub.s32 1, %s26
  %s29 = scalar_select 0, %s28, %s26
  $region1: #{compute_coeffs_forward.1} parent=0
    #allocation5 [shape = 'u8[4096]{0}', space=vmem, size = 0x1000, scoped, tag = 'input window, operand 1, single buffered']
    #allocation6 [shape = 's32[2]{0}', space=sflag, size = 0x8, scoped, tag = 'scoped memory for compute_coeffs_forward.1']
    #allocation7 [shape = 'u8[4096]{0}', space=vmem, size = 0x1000, scoped, tag = 'input window, operand 4, single buffered']
    #allocation8 [shape = 's32[1]{0}', space=sflag, size = 0x4, scoped, tag = 'scoped memory for compute_coeffs_forward.1']
    #allocation9 [shape = 'u8[167936]{0}', space=vmem, size = 0x29000, scoped, tag = 'input window, operand 6, single buffered']
    #allocation10 [shape = 'u8[16384]{0}', space=vmem, size = 0x4000, scoped, tag = 'input window, operand 7, single buffered']
    #allocation11 [shape = 's32[1]{0}', space=sflag, size = 0x4, scoped, tag = 'scoped memory for compute_coeffs_forward.1']
    #allocation12 [shape = 'u8[16384]{0}', space=vmem, size = 0x4000, scoped, tag = 'input window, operand 14, single buffered']
    #allocation13 [shape = 'u8[16384]{0}', space=vmem, size = 0x4000, scoped, tag = 'input window, operand 16, single buffered']
    #allocation14 [shape = 's32[1]{0}', space=sflag, size = 0x4, scoped, tag = 'scoped memory for compute_coeffs_forward.1']
    #allocation15 [shape = 'u8[49152]{0}', space=vmem, size = 0xc000, scoped, tag = 'input window, operand 19, single buffered']
    #allocation16 [shape = 'u8[49152]{0}', space=vmem, size = 0xc000, scoped, tag = 'input window, operand 20, single buffered']
    #allocation17 [shape = 's32[1]{0}', space=sflag, size = 0x4, scoped, tag = 'scoped memory for compute_coeffs_forward.1']
    %30 = vsyncpa [#allocation6], 0
    %31 = vsyncpa [#allocation8], 0
    %32 = vsyncpa [#allocation11], 0
    %33 = vsyncpa [#allocation14], 0
    %34 = vsyncpa [#allocation17], 0
    loop: start=0, step=1, limit=4
    $region2: #{compute_coeffs_forward.1} parent=1 // loop_pre_header
      _
    $region3: #{compute_coeffs_forward.1} parent=1 // loop_header
      %s36 = sphi 0, %s40
      %p37 = scmp.ge.s32.totalorder %s36, 4
      %s46 = sphi 0, %s48
      %s49 = sphi 0, %s46
      %s50 = sphi 0, %s49
      %s66 = sphi 0, %s50
      %s70 = sphi 0, %s70
      %s72 = sphi 0, %s70
      %s73 = sphi 0, %s72
      %s87 = sphi 0, %s73
      %s91 = sphi 0, %s91
      %s93 = sphi 0, %s91
      %s94 = sphi 0, %s93
      %s108 = sphi 0, %s94
      %s112 = sphi 0, %s112
      %s114 = sphi 0, %s112
      %s115 = sphi 0, %s114
      %s129 = sphi 0, %s115
      %s133 = sphi 0, %s133
      %s135 = sphi 0, %s133
      %s136 = sphi 0, %s135
      %s150 = sphi 0, %s136
      %s154 = sphi 0, %s154
      %s156 = sphi 0, %s154
      %s157 = sphi 0, %s156
      %s171 = sphi 0, %s157
      %s175 = sphi 0, %s175
      %s177 = sphi 0, %s175
      %s178 = sphi 0, %s177
      %s192 = sphi 0, %s178
      %s196 = sphi 0, %s196
      %s198 = sphi 0, %s196
      %s199 = sphi 0, %s198
      %s213 = sphi 0, %s199
      %s217 = sphi 0, %s217
      %s219 = sphi 0, %s217
      %s220 = sphi 0, %s219
      %s234 = sphi 0, %s220
      %s238 = sphi 0, %s238
      %s240 = sphi 0, %s238
      %s241 = sphi 0, %s240
      %s255 = sphi 0, %s241
      %s259 = sphi 0, %s259
      %s261 = sphi 0, %s259
      %s262 = sphi 0, %s261
      %s276 = sphi 0, %s262
      %s280 = sphi 0, %s280
      %s282 = sphi 0, %s280
      %s283 = sphi 0, %s282
      %s297 = sphi 0, %s283
      %s301 = sphi 0, %s301
      %s303 = sphi 0, %s301
      %s304 = sphi 0, %s303
      %s318 = sphi 0, %s304
      %s322 = sphi 0, %s322
      %s324 = sphi 0, %s322
      %s325 = sphi 0, %s324
      %s339 = sphi 0, %s325
      %s343 = sphi 0, %s343
      %s345 = sphi 0, %s343
      %s346 = sphi 0, %s345
      %s360 = sphi 0, %s346
      %s364 = sphi 0, %s364
      %s366 = sphi 0, %s364
      %s367 = sphi 0, %s366
      %s381 = sphi 0, %s367
      %s385 = sphi 0, %s385
      %s387 = sphi 0, %s385
      %s388 = sphi 0, %s387
      %s402 = sphi 0, %s388
      %s406 = sphi 0, %s406
      %s408 = sphi 0, %s406
      %s409 = sphi 0, %s408
      %s423 = sphi 0, %s409
      %s427 = sphi 0, %s427
      %s429 = sphi 0, %s427
      %s430 = sphi 0, %s429
      %s444 = sphi 0, %s430
      %s448 = sphi 0, %s448
      %s450 = sphi 0, %s448
      %s451 = sphi 0, %s450
      %s465 = sphi 0, %s451
      %s469 = sphi 0, %s469
      %s471 = sphi 0, %s469
      %s472 = sphi 0, %s471
      %s486 = sphi 0, %s472
      %s490 = sphi 0, %s490
      %s492 = sphi 0, %s490
      %s493 = sphi 0, %s492
      %s507 = sphi 0, %s493
      %s511 = sphi 0, %s511
      %s513 = sphi 0, %s511
      %s514 = sphi 0, %s513
      %s528 = sphi 0, %s514
      %s532 = sphi 0, %s532
      %s534 = sphi 0, %s532
      %s535 = sphi 0, %s534
      %s549 = sphi 0, %s535
      %s553 = sphi 0, %s553
      %s555 = sphi 0, %s553
      %s556 = sphi 0, %s555
      %s570 = sphi 0, %s556
      %s576 = sphi 0, %s578
      %s579 = sphi 0, %s576
      %s580 = sphi 0, %s579
      %s596 = sphi 0, %s580
    $region4: #{compute_coeffs_forward.1} parent=1 // loop_header_branch
      %39 = sbr.rel (%p37) target = $region8
    $region5: #{compute_coeffs_forward.1} parent=1 // loop_body
      %s41 = ssub.s32 %s36, 1
      %s42 = ssub.s32 %s36, 2
      %s43 = sadd.s32 %s36, 1
      %s44 = ssub.s32 %s36, %s43
      %p45 = scmp.eq.s32.totalorder %s44, 0
      %s47 = sadd.s32 %s46, 1
      %s48 = scalar_select %p45, %s46, %s47
      %p51 = pneg %p45
      %p52 = scmp.eq.s32.totalorder %s36, 1
      %p53 = por %p51, %p52
      %p54 = scmp.ne.s32.totalorder %s46, %s49
      %p55 = scmp.eq.s32.totalorder %s36, 0
      %p56 = por %p54, %p55
      %p57 = scmp.ne.s32.totalorder %s46, %s49
      %p58 = scmp.eq.s32.totalorder %s41, 1
      %p59 = por %p57, %p58
      %p60 = scmp.ne.s32.totalorder %s49, %s50
      %p61 = scmp.eq.s32.totalorder %s41, 0
      %p62 = por %p60, %p61
      %p63 = scmp.ne.s32.totalorder %s49, %s50
      %p64 = scmp.eq.s32.totalorder %s42, 1
      %p65 = por %p63, %p64
      %p67 = scmp.ne.s32.totalorder %s50, %s66
      %p68 = scmp.eq.s32.totalorder %s42, 0
      %p69 = por %p67, %p68
      %s71 = sadd.s32 %s70, 1
      %p74 = scmp.eq.s32.totalorder %s36, 1
      %p75 = scmp.ne.s32.totalorder %s70, %s72
      %p76 = scmp.eq.s32.totalorder %s36, 0
      %p77 = por %p75, %p76
      %p78 = scmp.ne.s32.totalorder %s70, %s72
      %p79 = scmp.eq.s32.totalorder %s41, 1
      %p80 = por %p78, %p79
      %p81 = scmp.ne.s32.totalorder %s72, %s73
      %p82 = scmp.eq.s32.totalorder %s41, 0
      %p83 = por %p81, %p82
      %p84 = scmp.ne.s32.totalorder %s72, %s73
      %p85 = scmp.eq.s32.totalorder %s42, 1
      %p86 = por %p84, %p85
      %p88 = scmp.ne.s32.totalorder %s73, %s87
      %p89 = scmp.eq.s32.totalorder %s42, 0
      %p90 = por %p88, %p89
      %s92 = sadd.s32 %s91, 1
      %p95 = scmp.eq.s32.totalorder %s36, 1
      %p96 = scmp.ne.s32.totalorder %s91, %s93
      %p97 = scmp.eq.s32.totalorder %s36, 0
      %p98 = por %p96, %p97
      %p99 = scmp.ne.s32.totalorder %s91, %s93
      %p100 = scmp.eq.s32.totalorder %s41, 1
      %p101 = por %p99, %p100
      %p102 = scmp.ne.s32.totalorder %s93, %s94
      %p103 = scmp.eq.s32.totalorder %s41, 0
      %p104 = por %p102, %p103
      %p105 = scmp.ne.s32.totalorder %s93, %s94
      %p106 = scmp.eq.s32.totalorder %s42, 1
      %p107 = por %p105, %p106
      %p109 = scmp.ne.s32.totalorder %s94, %s108
      %p110 = scmp.eq.s32.totalorder %s42, 0
      %p111 = por %p109, %p110
      %s113 = sadd.s32 %s112, 1
      %p116 = scmp.eq.s32.totalorder %s36, 1
      %p117 = scmp.ne.s32.totalorder %s112, %s114
      %p118 = scmp.eq.s32.totalorder %s36, 0
      %p119 = por %p117, %p118
      %p120 = scmp.ne.s32.totalorder %s112, %s114
      %p121 = scmp.eq.s32.totalorder %s41, 1
      %p122 = por %p120, %p121
      %p123 = scmp.ne.s32.totalorder %s114, %s115
      %p124 = scmp.eq.s32.totalorder %s41, 0
      %p125 = por %p123, %p124
      %p126 = scmp.ne.s32.totalorder %s114, %s115
      %p127 = scmp.eq.s32.totalorder %s42, 1
      %p128 = por %p126, %p127
      %p130 = scmp.ne.s32.totalorder %s115, %s129
      %p131 = scmp.eq.s32.totalorder %s42, 0
      %p132 = por %p130, %p131
      %s134 = sadd.s32 %s133, 1
      %p137 = scmp.eq.s32.totalorder %s36, 1
      %p138 = scmp.ne.s32.totalorder %s133, %s135
      %p139 = scmp.eq.s32.totalorder %s36, 0
      %p140 = por %p138, %p139
      %p141 = scmp.ne.s32.totalorder %s133, %s135
      %p142 = scmp.eq.s32.totalorder %s41, 1
      %p143 = por %p141, %p142
      %p144 = scmp.ne.s32.totalorder %s135, %s136
      %p145 = scmp.eq.s32.totalorder %s41, 0
      %p146 = por %p144, %p145
      %p147 = scmp.ne.s32.totalorder %s135, %s136
      %p148 = scmp.eq.s32.totalorder %s42, 1
      %p149 = por %p147, %p148
      %p151 = scmp.ne.s32.totalorder %s136, %s150
      %p152 = scmp.eq.s32.totalorder %s42, 0
      %p153 = por %p151, %p152
      %s155 = sadd.s32 %s154, 1
      %p158 = scmp.eq.s32.totalorder %s36, 1
      %p159 = scmp.ne.s32.totalorder %s154, %s156
      %p160 = scmp.eq.s32.totalorder %s36, 0
      %p161 = por %p159, %p160
      %p162 = scmp.ne.s32.totalorder %s154, %s156
      %p163 = scmp.eq.s32.totalorder %s41, 1
      %p164 = por %p162, %p163
      %p165 = scmp.ne.s32.totalorder %s156, %s157
      %p166 = scmp.eq.s32.totalorder %s41, 0
      %p167 = por %p165, %p166
      %p168 = scmp.ne.s32.totalorder %s156, %s157
      %p169 = scmp.eq.s32.totalorder %s42, 1
      %p170 = por %p168, %p169
      %p172 = scmp.ne.s32.totalorder %s157, %s171
      %p173 = scmp.eq.s32.totalorder %s42, 0
      %p174 = por %p172, %p173
      %s176 = sadd.s32 %s175, 1
      %p179 = scmp.eq.s32.totalorder %s36, 1
      %p180 = scmp.ne.s32.totalorder %s175, %s177
      %p181 = scmp.eq.s32.totalorder %s36, 0
      %p182 = por %p180, %p181
      %p183 = scmp.ne.s32.totalorder %s175, %s177
      %p184 = scmp.eq.s32.totalorder %s41, 1
      %p185 = por %p183, %p184
      %p186 = scmp.ne.s32.totalorder %s177, %s178
      %p187 = scmp.eq.s32.totalorder %s41, 0
      %p188 = por %p186, %p187
      %p189 = scmp.ne.s32.totalorder %s177, %s178
      %p190 = scmp.eq.s32.totalorder %s42, 1
      %p191 = por %p189, %p190
      %p193 = scmp.ne.s32.totalorder %s178, %s192
      %p194 = scmp.eq.s32.totalorder %s42, 0
      %p195 = por %p193, %p194
      %s197 = sadd.s32 %s196, 1
      %p200 = scmp.eq.s32.totalorder %s36, 1
      %p201 = scmp.ne.s32.totalorder %s196, %s198
      %p202 = scmp.eq.s32.totalorder %s36, 0
      %p203 = por %p201, %p202
      %p204 = scmp.ne.s32.totalorder %s196, %s198
      %p205 = scmp.eq.s32.totalorder %s41, 1
      %p206 = por %p204, %p205
      %p207 = scmp.ne.s32.totalorder %s198, %s199
      %p208 = scmp.eq.s32.totalorder %s41, 0
      %p209 = por %p207, %p208
      %p210 = scmp.ne.s32.totalorder %s198, %s199
      %p211 = scmp.eq.s32.totalorder %s42, 1
      %p212 = por %p210, %p211
      %p214 = scmp.ne.s32.totalorder %s199, %s213
      %p215 = scmp.eq.s32.totalorder %s42, 0
      %p216 = por %p214, %p215
      %s218 = sadd.s32 %s217, 1
      %p221 = scmp.eq.s32.totalorder %s36, 1
      %p222 = scmp.ne.s32.totalorder %s217, %s219
      %p223 = scmp.eq.s32.totalorder %s36, 0
      %p224 = por %p222, %p223
      %p225 = scmp.ne.s32.totalorder %s217, %s219
      %p226 = scmp.eq.s32.totalorder %s41, 1
      %p227 = por %p225, %p226
      %p228 = scmp.ne.s32.totalorder %s219, %s220
      %p229 = scmp.eq.s32.totalorder %s41, 0
      %p230 = por %p228, %p229
      %p231 = scmp.ne.s32.totalorder %s219, %s220
      %p232 = scmp.eq.s32.totalorder %s42, 1
      %p233 = por %p231, %p232
      %p235 = scmp.ne.s32.totalorder %s220, %s234
      %p236 = scmp.eq.s32.totalorder %s42, 0
      %p237 = por %p235, %p236
      %s239 = sadd.s32 %s238, 1
      %p242 = scmp.eq.s32.totalorder %s36, 1
      %p243 = scmp.ne.s32.totalorder %s238, %s240
      %p244 = scmp.eq.s32.totalorder %s36, 0
      %p245 = por %p243, %p244
      %p246 = scmp.ne.s32.totalorder %s238, %s240
      %p247 = scmp.eq.s32.totalorder %s41, 1
      %p248 = por %p246, %p247
      %p249 = scmp.ne.s32.totalorder %s240, %s241
      %p250 = scmp.eq.s32.totalorder %s41, 0
      %p251 = por %p249, %p250
      %p252 = scmp.ne.s32.totalorder %s240, %s241
      %p253 = scmp.eq.s32.totalorder %s42, 1
      %p254 = por %p252, %p253
      %p256 = scmp.ne.s32.totalorder %s241, %s255
      %p257 = scmp.eq.s32.totalorder %s42, 0
      %p258 = por %p256, %p257
      %s260 = sadd.s32 %s259, 1
      %p263 = scmp.eq.s32.totalorder %s36, 1
      %p264 = scmp.ne.s32.totalorder %s259, %s261
      %p265 = scmp.eq.s32.totalorder %s36, 0
      %p266 = por %p264, %p265
      %p267 = scmp.ne.s32.totalorder %s259, %s261
      %p268 = scmp.eq.s32.totalorder %s41, 1
      %p269 = por %p267, %p268
      %p270 = scmp.ne.s32.totalorder %s261, %s262
      %p271 = scmp.eq.s32.totalorder %s41, 0
      %p272 = por %p270, %p271
      %p273 = scmp.ne.s32.totalorder %s261, %s262
      %p274 = scmp.eq.s32.totalorder %s42, 1
      %p275 = por %p273, %p274
      %p277 = scmp.ne.s32.totalorder %s262, %s276
      %p278 = scmp.eq.s32.totalorder %s42, 0
      %p279 = por %p277, %p278
      %s281 = sadd.s32 %s280, 1
      %p284 = scmp.eq.s32.totalorder %s36, 1
      %p285 = scmp.ne.s32.totalorder %s280, %s282
      %p286 = scmp.eq.s32.totalorder %s36, 0
      %p287 = por %p285, %p286
      %p288 = scmp.ne.s32.totalorder %s280, %s282
      %p289 = scmp.eq.s32.totalorder %s41, 1
      %p290 = por %p288, %p289
      %p291 = scmp.ne.s32.totalorder %s282, %s283
      %p292 = scmp.eq.s32.totalorder %s41, 0
      %p293 = por %p291, %p292
      %p294 = scmp.ne.s32.totalorder %s282, %s283
      %p295 = scmp.eq.s32.totalorder %s42, 1
      %p296 = por %p294, %p295
      %p298 = scmp.ne.s32.totalorder %s283, %s297
      %p299 = scmp.eq.s32.totalorder %s42, 0
      %p300 = por %p298, %p299
      %s302 = sadd.s32 %s301, 1
      %p305 = scmp.eq.s32.totalorder %s36, 1
      %p306 = scmp.ne.s32.totalorder %s301, %s303
      %p307 = scmp.eq.s32.totalorder %s36, 0
      %p308 = por %p306, %p307
      %p309 = scmp.ne.s32.totalorder %s301, %s303
      %p310 = scmp.eq.s32.totalorder %s41, 1
      %p311 = por %p309, %p310
      %p312 = scmp.ne.s32.totalorder %s303, %s304
      %p313 = scmp.eq.s32.totalorder %s41, 0
      %p314 = por %p312, %p313
      %p315 = scmp.ne.s32.totalorder %s303, %s304
      %p316 = scmp.eq.s32.totalorder %s42, 1
      %p317 = por %p315, %p316
      %p319 = scmp.ne.s32.totalorder %s304, %s318
      %p320 = scmp.eq.s32.totalorder %s42, 0
      %p321 = por %p319, %p320
      %s323 = sadd.s32 %s322, 1
      %p326 = scmp.eq.s32.totalorder %s36, 1
      %p327 = scmp.ne.s32.totalorder %s322, %s324
      %p328 = scmp.eq.s32.totalorder %s36, 0
      %p329 = por %p327, %p328
      %p330 = scmp.ne.s32.totalorder %s322, %s324
      %p331 = scmp.eq.s32.totalorder %s41, 1
      %p332 = por %p330, %p331
      %p333 = scmp.ne.s32.totalorder %s324, %s325
      %p334 = scmp.eq.s32.totalorder %s41, 0
      %p335 = por %p333, %p334
      %p336 = scmp.ne.s32.totalorder %s324, %s325
      %p337 = scmp.eq.s32.totalorder %s42, 1
      %p338 = por %p336, %p337
      %p340 = scmp.ne.s32.totalorder %s325, %s339
      %p341 = scmp.eq.s32.totalorder %s42, 0
      %p342 = por %p340, %p341
      %s344 = sadd.s32 %s343, 1
      %p347 = scmp.eq.s32.totalorder %s36, 1
      %p348 = scmp.ne.s32.totalorder %s343, %s345
      %p349 = scmp.eq.s32.totalorder %s36, 0
      %p350 = por %p348, %p349
      %p351 = scmp.ne.s32.totalorder %s343, %s345
      %p352 = scmp.eq.s32.totalorder %s41, 1
      %p353 = por %p351, %p352
      %p354 = scmp.ne.s32.totalorder %s345, %s346
      %p355 = scmp.eq.s32.totalorder %s41, 0
      %p356 = por %p354, %p355
      %p357 = scmp.ne.s32.totalorder %s345, %s346
      %p358 = scmp.eq.s32.totalorder %s42, 1
      %p359 = por %p357, %p358
      %p361 = scmp.ne.s32.totalorder %s346, %s360
      %p362 = scmp.eq.s32.totalorder %s42, 0
      %p363 = por %p361, %p362
      %s365 = sadd.s32 %s364, 1
      %p368 = scmp.eq.s32.totalorder %s36, 1
      %p369 = scmp.ne.s32.totalorder %s364, %s366
      %p370 = scmp.eq.s32.totalorder %s36, 0
      %p371 = por %p369, %p370
      %p372 = scmp.ne.s32.totalorder %s364, %s366
      %p373 = scmp.eq.s32.totalorder %s41, 1
      %p374 = por %p372, %p373
      %p375 = scmp.ne.s32.totalorder %s366, %s367
      %p376 = scmp.eq.s32.totalorder %s41, 0
      %p377 = por %p375, %p376
      %p378 = scmp.ne.s32.totalorder %s366, %s367
      %p379 = scmp.eq.s32.totalorder %s42, 1
      %p380 = por %p378, %p379
      %p382 = scmp.ne.s32.totalorder %s367, %s381
      %p383 = scmp.eq.s32.totalorder %s42, 0
      %p384 = por %p382, %p383
      %s386 = sadd.s32 %s385, 1
      %p389 = scmp.eq.s32.totalorder %s36, 1
      %p390 = scmp.ne.s32.totalorder %s385, %s387
      %p391 = scmp.eq.s32.totalorder %s36, 0
      %p392 = por %p390, %p391
      %p393 = scmp.ne.s32.totalorder %s385, %s387
      %p394 = scmp.eq.s32.totalorder %s41, 1
      %p395 = por %p393, %p394
      %p396 = scmp.ne.s32.totalorder %s387, %s388
      %p397 = scmp.eq.s32.totalorder %s41, 0
      %p398 = por %p396, %p397
      %p399 = scmp.ne.s32.totalorder %s387, %s388
      %p400 = scmp.eq.s32.totalorder %s42, 1
      %p401 = por %p399, %p400
      %p403 = scmp.ne.s32.totalorder %s388, %s402
      %p404 = scmp.eq.s32.totalorder %s42, 0
      %p405 = por %p403, %p404
      %s407 = sadd.s32 %s406, 1
      %p410 = scmp.eq.s32.totalorder %s36, 1
      %p411 = scmp.ne.s32.totalorder %s406, %s408
      %p412 = scmp.eq.s32.totalorder %s36, 0
      %p413 = por %p411, %p412
      %p414 = scmp.ne.s32.totalorder %s406, %s408
      %p415 = scmp.eq.s32.totalorder %s41, 1
      %p416 = por %p414, %p415
      %p417 = scmp.ne.s32.totalorder %s408, %s409
      %p418 = scmp.eq.s32.totalorder %s41, 0
      %p419 = por %p417, %p418
      %p420 = scmp.ne.s32.totalorder %s408, %s409
      %p421 = scmp.eq.s32.totalorder %s42, 1
      %p422 = por %p420, %p421
      %p424 = scmp.ne.s32.totalorder %s409, %s423
      %p425 = scmp.eq.s32.totalorder %s42, 0
      %p426 = por %p424, %p425
      %s428 = sadd.s32 %s427, 1
      %p431 = scmp.eq.s32.totalorder %s36, 1
      %p432 = scmp.ne.s32.totalorder %s427, %s429
      %p433 = scmp.eq.s32.totalorder %s36, 0
      %p434 = por %p432, %p433
      %p435 = scmp.ne.s32.totalorder %s427, %s429
      %p436 = scmp.eq.s32.totalorder %s41, 1
      %p437 = por %p435, %p436
      %p438 = scmp.ne.s32.totalorder %s429, %s430
      %p439 = scmp.eq.s32.totalorder %s41, 0
      %p440 = por %p438, %p439
      %p441 = scmp.ne.s32.totalorder %s429, %s430
      %p442 = scmp.eq.s32.totalorder %s42, 1
      %p443 = por %p441, %p442
      %p445 = scmp.ne.s32.totalorder %s430, %s444
      %p446 = scmp.eq.s32.totalorder %s42, 0
      %p447 = por %p445, %p446
      %s449 = sadd.s32 %s448, 1
      %p452 = scmp.eq.s32.totalorder %s36, 1
      %p453 = scmp.ne.s32.totalorder %s448, %s450
      %p454 = scmp.eq.s32.totalorder %s36, 0
      %p455 = por %p453, %p454
      %p456 = scmp.ne.s32.totalorder %s448, %s450
      %p457 = scmp.eq.s32.totalorder %s41, 1
      %p458 = por %p456, %p457
      %p459 = scmp.ne.s32.totalorder %s450, %s451
      %p460 = scmp.eq.s32.totalorder %s41, 0
      %p461 = por %p459, %p460
      %p462 = scmp.ne.s32.totalorder %s450, %s451
      %p463 = scmp.eq.s32.totalorder %s42, 1
      %p464 = por %p462, %p463
      %p466 = scmp.ne.s32.totalorder %s451, %s465
      %p467 = scmp.eq.s32.totalorder %s42, 0
      %p468 = por %p466, %p467
      %s470 = sadd.s32 %s469, 1
      %p473 = scmp.eq.s32.totalorder %s36, 1
      %p474 = scmp.ne.s32.totalorder %s469, %s471
      %p475 = scmp.eq.s32.totalorder %s36, 0
      %p476 = por %p474, %p475
      %p477 = scmp.ne.s32.totalorder %s469, %s471
      %p478 = scmp.eq.s32.totalorder %s41, 1
      %p479 = por %p477, %p478
      %p480 = scmp.ne.s32.totalorder %s471, %s472
      %p481 = scmp.eq.s32.totalorder %s41, 0
      %p482 = por %p480, %p481
      %p483 = scmp.ne.s32.totalorder %s471, %s472
      %p484 = scmp.eq.s32.totalorder %s42, 1
      %p485 = por %p483, %p484
      %p487 = scmp.ne.s32.totalorder %s472, %s486
      %p488 = scmp.eq.s32.totalorder %s42, 0
      %p489 = por %p487, %p488
      %s491 = sadd.s32 %s490, 1
      %p494 = scmp.eq.s32.totalorder %s36, 1
      %p495 = scmp.ne.s32.totalorder %s490, %s492
      %p496 = scmp.eq.s32.totalorder %s36, 0
      %p497 = por %p495, %p496
      %p498 = scmp.ne.s32.totalorder %s490, %s492
      %p499 = scmp.eq.s32.totalorder %s41, 1
      %p500 = por %p498, %p499
      %p501 = scmp.ne.s32.totalorder %s492, %s493
      %p502 = scmp.eq.s32.totalorder %s41, 0
      %p503 = por %p501, %p502
      %p504 = scmp.ne.s32.totalorder %s492, %s493
      %p505 = scmp.eq.s32.totalorder %s42, 1
      %p506 = por %p504, %p505
      %p508 = scmp.ne.s32.totalorder %s493, %s507
      %p509 = scmp.eq.s32.totalorder %s42, 0
      %p510 = por %p508, %p509
      %s512 = sadd.s32 %s511, 1
      %p515 = scmp.eq.s32.totalorder %s36, 1
      %p516 = scmp.ne.s32.totalorder %s511, %s513
      %p517 = scmp.eq.s32.totalorder %s36, 0
      %p518 = por %p516, %p517
      %p519 = scmp.ne.s32.totalorder %s511, %s513
      %p520 = scmp.eq.s32.totalorder %s41, 1
      %p521 = por %p519, %p520
      %p522 = scmp.ne.s32.totalorder %s513, %s514
      %p523 = scmp.eq.s32.totalorder %s41, 0
      %p524 = por %p522, %p523
      %p525 = scmp.ne.s32.totalorder %s513, %s514
      %p526 = scmp.eq.s32.totalorder %s42, 1
      %p527 = por %p525, %p526
      %p529 = scmp.ne.s32.totalorder %s514, %s528
      %p530 = scmp.eq.s32.totalorder %s42, 0
      %p531 = por %p529, %p530
      %s533 = sadd.s32 %s532, 1
      %p536 = scmp.eq.s32.totalorder %s36, 1
      %p537 = scmp.ne.s32.totalorder %s532, %s534
      %p538 = scmp.eq.s32.totalorder %s36, 0
      %p539 = por %p537, %p538
      %p540 = scmp.ne.s32.totalorder %s532, %s534
      %p541 = scmp.eq.s32.totalorder %s41, 1
      %p542 = por %p540, %p541
      %p543 = scmp.ne.s32.totalorder %s534, %s535
      %p544 = scmp.eq.s32.totalorder %s41, 0
      %p545 = por %p543, %p544
      %p546 = scmp.ne.s32.totalorder %s534, %s535
      %p547 = scmp.eq.s32.totalorder %s42, 1
      %p548 = por %p546, %p547
      %p550 = scmp.ne.s32.totalorder %s535, %s549
      %p551 = scmp.eq.s32.totalorder %s42, 0
      %p552 = por %p550, %p551
      %s554 = sadd.s32 %s553, 1
      %p557 = scmp.eq.s32.totalorder %s36, 1
      %p558 = scmp.ne.s32.totalorder %s553, %s555
      %p559 = scmp.eq.s32.totalorder %s36, 0
      %p560 = por %p558, %p559
      %p561 = scmp.ne.s32.totalorder %s553, %s555
      %p562 = scmp.eq.s32.totalorder %s41, 1
      %p563 = por %p561, %p562
      %p564 = scmp.ne.s32.totalorder %s555, %s556
      %p565 = scmp.eq.s32.totalorder %s41, 0
      %p566 = por %p564, %p565
      %p567 = scmp.ne.s32.totalorder %s555, %s556
      %p568 = scmp.eq.s32.totalorder %s42, 1
      %p569 = por %p567, %p568
      %p571 = scmp.ne.s32.totalorder %s556, %s570
      %p572 = scmp.eq.s32.totalorder %s42, 0
      %p573 = por %p571, %p572
      %s574 = ssub.s32 %s36, %s43
      %p575 = scmp.eq.s32.totalorder %s574, 0
      %s577 = sadd.s32 %s576, 1
      %s578 = scalar_select %p575, %s576, %s577
      %p581 = pneg %p575
      %p582 = scmp.eq.s32.totalorder %s36, 1
      %p583 = por %p581, %p582
      %p584 = scmp.ne.s32.totalorder %s576, %s579
      %p585 = scmp.eq.s32.totalorder %s36, 0
      %p586 = por %p584, %p585
      %p587 = scmp.ne.s32.totalorder %s576, %s579
      %p588 = scmp.eq.s32.totalorder %s41, 1
      %p589 = por %p587, %p588
      %p590 = scmp.ne.s32.totalorder %s579, %s580
      %p591 = scmp.eq.s32.totalorder %s41, 0
      %p592 = por %p590, %p591
      %p593 = scmp.ne.s32.totalorder %s579, %s580
      %p594 = scmp.eq.s32.totalorder %s42, 1
      %p595 = por %p593, %p594
      %p597 = scmp.ne.s32.totalorder %s580, %s596
      %p598 = scmp.eq.s32.totalorder %s42, 0
      %p599 = por %p597, %p598
      %p600 = scmp.le.s32.totalorder 1, %s36
      %p601 = scmp.lt.s32.totalorder %s36, 3
      %p602 = pnand %p600, %p601
      %p603 = pneg %p602
      // Predicated region
      $region9: #{compute_coeffs_forward.1} parent=5 // pred_check
        _
      $region10: #{compute_coeffs_forward.1} parent=5 // pred_check_branch
        %605 = sbr.rel (%p602) target = $region12
      $region11: #{compute_coeffs_forward.1} parent=5 // pred_region
        %s606 = ssub.s32 %s36, 1
        // Predicated region
        $region13: #{compute_coeffs_forward.1} parent=11 // pred_check
          %p607 = pneg %p83
        $region14: #{compute_coeffs_forward.1} parent=11 // pred_check_branch
          %609 = sbr.rel (%p607) target = $region16
        $region15: #{compute_coeffs_forward.1} parent=11 // pred_region
          %611 = vsyncadd [#allocation6], 0
          %s613 = sshll.u32 %s1, 4
          %s614 = int_to_ptr.hbm [resolvable:$true] %s613
          %s615 = sshll.u32 [#allocation5], 4
          %s616 = int_to_ptr.vmem [resolvable:$true] %s615
          %618 = dma.hbm_to_vmem [thread:$0]  %s614, 128, %s616, [#allocation6]
        $region16: #{compute_coeffs_forward.1} parent=11 // pred_fallthru
          _
        // Predicated region
        $region17: #{compute_coeffs_forward.1} parent=11 // pred_check
          %p619 = pneg %p104
        $region18: #{compute_coeffs_forward.1} parent=11 // pred_check_branch
          %621 = sbr.rel (%p619) target = $region20
        $region19: #{compute_coeffs_forward.1} parent=11 // pred_region
          _
        $region20: #{compute_coeffs_forward.1} parent=11 // pred_fallthru
          _
        // Predicated region
        $region21: #{compute_coeffs_forward.1} parent=11 // pred_check
          %p622 = pneg %p125
        $region22: #{compute_coeffs_forward.1} parent=11 // pred_check_branch
          %624 = sbr.rel (%p622) target = $region24
        $region23: #{compute_coeffs_forward.1} parent=11 // pred_region
          _
        $region24: #{compute_coeffs_forward.1} parent=11 // pred_fallthru
          _
        // Predicated region
        $region25: #{compute_coeffs_forward.1} parent=11 // pred_check
          %p625 = pneg %p146
        $region26: #{compute_coeffs_forward.1} parent=11 // pred_check_branch
          %627 = sbr.rel (%p625) target = $region28
        $region27: #{compute_coeffs_forward.1} parent=11 // pred_region
          %629 = vsyncadd [#allocation8], 0
          %s631 = sshll.u32 %s4, 4
          %s632 = int_to_ptr.hbm [resolvable:$true] %s631
          %s633 = sshll.u32 [#allocation7], 4
          %s634 = int_to_ptr.vmem [resolvable:$true] %s633
          %636 = dma.hbm_to_vmem [thread:$0]  %s632, 128, %s634, [#allocation8]
        $region28: #{compute_coeffs_forward.1} parent=11 // pred_fallthru
          _
        // Predicated region
        $region29: #{compute_coeffs_forward.1} parent=11 // pred_check
          %p637 = pneg %p167
        $region30: #{compute_coeffs_forward.1} parent=11 // pred_check_branch
          %639 = sbr.rel (%p637) target = $region32
        $region31: #{compute_coeffs_forward.1} parent=11 // pred_region
          _
        $region32: #{compute_coeffs_forward.1} parent=11 // pred_fallthru
          _
        // Predicated region
        $region33: #{compute_coeffs_forward.1} parent=11 // pred_check
          %p640 = pneg %p188
        $region34: #{compute_coeffs_forward.1} parent=11 // pred_check_branch
          %642 = sbr.rel (%p640) target = $region36
        $region35: #{compute_coeffs_forward.1} parent=11 // pred_region
          %644 = vsyncadd [#allocation8], 0
          %s645 = sshll.u32 %s6, 4
          %s646 = int_to_ptr.hbm [resolvable:$true] %s645
          %s647 = sshll.u32 [#allocation9], 4
          %s648 = int_to_ptr.vmem [resolvable:$true] %s647
          %653 = dma.hbm_to_vmem [thread:$0]  %s646, 5248, %s648, [#allocation8], 128, 128, 8
        $region36: #{compute_coeffs_forward.1} parent=11 // pred_fallthru
          _
        // Predicated region
        $region37: #{compute_coeffs_forward.1} parent=11 // pred_check
          %p654 = pneg %p209
        $region38: #{compute_coeffs_forward.1} parent=11 // pred_check_branch
          %656 = sbr.rel (%p654) target = $region40
        $region39: #{compute_coeffs_forward.1} parent=11 // pred_region
          %658 = vsyncadd [#allocation11], 0
          %s659 = sshll.u32 %s7, 4
          %s660 = int_to_ptr.hbm [resolvable:$true] %s659
          %s661 = sshll.u32 [#allocation10], 4
          %s662 = int_to_ptr.vmem [resolvable:$true] %s661
          %667 = dma.hbm_to_vmem [thread:$0]  %s660, 512, %s662, [#allocation11], 128, 128, 8
        $region40: #{compute_coeffs_forward.1} parent=11 // pred_fallthru
          _
        // Predicated region
        $region41: #{compute_coeffs_forward.1} parent=11 // pred_check
          %p668 = pneg %p230
        $region42: #{compute_coeffs_forward.1} parent=11 // pred_check_branch
          %670 = sbr.rel (%p668) target = $region44
        $region43: #{compute_coeffs_forward.1} parent=11 // pred_region
          _
        $region44: #{compute_coeffs_forward.1} parent=11 // pred_fallthru
          _
        // Predicated region
        $region45: #{compute_coeffs_forward.1} parent=11 // pred_check
          %p671 = pneg %p251
        $region46: #{compute_coeffs_forward.1} parent=11 // pred_check_branch
          %673 = sbr.rel (%p671) target = $region48
        $region47: #{compute_coeffs_forward.1} parent=11 // pred_region
          _
        $region48: #{compute_coeffs_forward.1} parent=11 // pred_fallthru
          _
        // Predicated region
        $region49: #{compute_coeffs_forward.1} parent=11 // pred_check
          %p674 = pneg %p272
        $region50: #{compute_coeffs_forward.1} parent=11 // pred_check_branch
          %676 = sbr.rel (%p674) target = $region52
        $region51: #{compute_coeffs_forward.1} parent=11 // pred_region
          _
        $region52: #{compute_coeffs_forward.1} parent=11 // pred_fallthru
          _
        // Predicated region
        $region53: #{compute_coeffs_forward.1} parent=11 // pred_check
          %p677 = pneg %p293
        $region54: #{compute_coeffs_forward.1} parent=11 // pred_check_branch
          %679 = sbr.rel (%p677) target = $region56
        $region55: #{compute_coeffs_forward.1} parent=11 // pred_region
          _
        $region56: #{compute_coeffs_forward.1} parent=11 // pred_fallthru
          _
        // Predicated region
        $region57: #{compute_coeffs_forward.1} parent=11 // pred_check
          %p680 = pneg %p314
        $region58: #{compute_coeffs_forward.1} parent=11 // pred_check_branch
          %682 = sbr.rel (%p680) target = $region60
        $region59: #{compute_coeffs_forward.1} parent=11 // pred_region
          _
        $region60: #{compute_coeffs_forward.1} parent=11 // pred_fallthru
          _
        // Predicated region
        $region61: #{compute_coeffs_forward.1} parent=11 // pred_check
          %p683 = pneg %p335
        $region62: #{compute_coeffs_forward.1} parent=11 // pred_check_branch
          %685 = sbr.rel (%p683) target = $region64
        $region63: #{compute_coeffs_forward.1} parent=11 // pred_region
          _
        $region64: #{compute_coeffs_forward.1} parent=11 // pred_fallthru
          _
        // Predicated region
        $region65: #{compute_coeffs_forward.1} parent=11 // pred_check
          %p686 = pneg %p356
        $region66: #{compute_coeffs_forward.1} parent=11 // pred_check_branch
          %688 = sbr.rel (%p686) target = $region68
        $region67: #{compute_coeffs_forward.1} parent=11 // pred_region
          %690 = vsyncadd [#allocation11], 0
          %s691 = sshll.u32 %s14, 4
          %s692 = int_to_ptr.hbm [resolvable:$true] %s691
          %s693 = sshll.u32 [#allocation12], 4
          %s694 = int_to_ptr.vmem [resolvable:$true] %s693
          %699 = dma.hbm_to_vmem [thread:$0]  %s692, 512, %s694, [#allocation11], 128, 128, 8
        $region68: #{compute_coeffs_forward.1} parent=11 // pred_fallthru
          _
        // Predicated region
        $region69: #{compute_coeffs_forward.1} parent=11 // pred_check
          %p700 = pneg %p377
        $region70: #{compute_coeffs_forward.1} parent=11 // pred_check_branch
          %702 = sbr.rel (%p700) target = $region72
        $region71: #{compute_coeffs_forward.1} parent=11 // pred_region
          _
        $region72: #{compute_coeffs_forward.1} parent=11 // pred_fallthru
          _
        // Predicated region
        $region73: #{compute_coeffs_forward.1} parent=11 // pred_check
          %p703 = pneg %p398
        $region74: #{compute_coeffs_forward.1} parent=11 // pred_check_branch
          %705 = sbr.rel (%p703) target = $region76
        $region75: #{compute_coeffs_forward.1} parent=11 // pred_region
          %707 = vsyncadd [#allocation14], 0
          %s708 = sshll.u32 %s16, 4
          %s709 = int_to_ptr.hbm [resolvable:$true] %s708
          %s710 = sshll.u32 [#allocation13], 4
          %s711 = int_to_ptr.vmem [resolvable:$true] %s710
          %716 = dma.hbm_to_vmem [thread:$0]  %s709, 512, %s711, [#allocation14], 128, 128, 8
        $region76: #{compute_coeffs_forward.1} parent=11 // pred_fallthru
          _
        // Predicated region
        $region77: #{compute_coeffs_forward.1} parent=11 // pred_check
          %p717 = pneg %p419
        $region78: #{compute_coeffs_forward.1} parent=11 // pred_check_branch
          %719 = sbr.rel (%p717) target = $region80
        $region79: #{compute_coeffs_forward.1} parent=11 // pred_region
          _
        $region80: #{compute_coeffs_forward.1} parent=11 // pred_fallthru
          _
        // Predicated region
        $region81: #{compute_coeffs_forward.1} parent=11 // pred_check
          %p720 = pneg %p440
        $region82: #{compute_coeffs_forward.1} parent=11 // pred_check_branch
          %722 = sbr.rel (%p720) target = $region84
        $region83: #{compute_coeffs_forward.1} parent=11 // pred_region
          _
        $region84: #{compute_coeffs_forward.1} parent=11 // pred_fallthru
          _
        // Predicated region
        $region85: #{compute_coeffs_forward.1} parent=11 // pred_check
          %p723 = pneg %p461
        $region86: #{compute_coeffs_forward.1} parent=11 // pred_check_branch
          %725 = sbr.rel (%p723) target = $region88
        $region87: #{compute_coeffs_forward.1} parent=11 // pred_region
          %727 = vsyncadd [#allocation14], 0
          %s728 = sshll.u32 %s19, 4
          %s729 = int_to_ptr.hbm [resolvable:$true] %s728
          %s730 = sshll.u32 [#allocation15], 4
          %s731 = int_to_ptr.vmem [resolvable:$true] %s730
          %736 = dma.hbm_to_vmem [thread:$0]  %s729, 1536, %s731, [#allocation14], 384, 384, 24
        $region88: #{compute_coeffs_forward.1} parent=11 // pred_fallthru
          _
        // Predicated region
        $region89: #{compute_coeffs_forward.1} parent=11 // pred_check
          %p737 = pneg %p482
        $region90: #{compute_coeffs_forward.1} parent=11 // pred_check_branch
          %739 = sbr.rel (%p737) target = $region92
        $region91: #{compute_coeffs_forward.1} parent=11 // pred_region
          %741 = vsyncadd [#allocation17], 0
          %s742 = sshll.u32 %s20, 4
          %s743 = int_to_ptr.hbm [resolvable:$true] %s742
          %s744 = sshll.u32 [#allocation16], 4
          %s745 = int_to_ptr.vmem [resolvable:$true] %s744
          %750 = dma.hbm_to_vmem [thread:$0]  %s743, 1536, %s745, [#allocation17], 384, 384, 24
        $region92: #{compute_coeffs_forward.1} parent=11 // pred_fallthru
          _
        // Predicated region
        $region93: #{compute_coeffs_forward.1} parent=11 // pred_check
          %p751 = pneg %p503
        $region94: #{compute_coeffs_forward.1} parent=11 // pred_check_branch
          %753 = sbr.rel (%p751) target = $region96
        $region95: #{compute_coeffs_forward.1} parent=11 // pred_region
          _
        $region96: #{compute_coeffs_forward.1} parent=11 // pred_fallthru
          _
        // Predicated region
        $region97: #{compute_coeffs_forward.1} parent=11 // pred_check
          %p754 = pneg %p524
        $region98: #{compute_coeffs_forward.1} parent=11 // pred_check_branch
          %756 = sbr.rel (%p754) target = $region100
        $region99: #{compute_coeffs_forward.1} parent=11 // pred_region
          _
        $region100: #{compute_coeffs_forward.1} parent=11 // pred_fallthru
          _
        // Predicated region
        $region101: #{compute_coeffs_forward.1} parent=11 // pred_check
          %p757 = pneg %p545
        $region102: #{compute_coeffs_forward.1} parent=11 // pred_check_branch
          %759 = sbr.rel (%p757) target = $region104
        $region103: #{compute_coeffs_forward.1} parent=11 // pred_region
          _
        $region104: #{compute_coeffs_forward.1} parent=11 // pred_fallthru
          _
        // Predicated region
        $region105: #{compute_coeffs_forward.1} parent=11 // pred_check
          %p760 = pneg %p566
        $region106: #{compute_coeffs_forward.1} parent=11 // pred_check_branch
          %762 = sbr.rel (%p760) target = $region108
        $region107: #{compute_coeffs_forward.1} parent=11 // pred_region
          _
        $region108: #{compute_coeffs_forward.1} parent=11 // pred_fallthru
          _
      $region12: #{compute_coeffs_forward.1} parent=5 // pred_fallthru
        _
      %p763 = scmp.lt.s32.totalorder %s36, 2
      // Predicated region
      $region109: #{compute_coeffs_forward.1} parent=5 // pred_check
        %p764 = pneg %p763
      $region110: #{compute_coeffs_forward.1} parent=5 // pred_check_branch
        %766 = sbr.rel (%p764) target = $region112
      $region111: #{compute_coeffs_forward.1} parent=5 // pred_region
        // Predicated region
        $region113: #{compute_coeffs_forward.1} parent=111 // pred_check
          %p767 = pneg %p56
        $region114: #{compute_coeffs_forward.1} parent=111 // pred_check_branch
          %769 = sbr.rel (%p767) target = $region116
        $region115: #{compute_coeffs_forward.1} parent=111 // pred_region
          %p770 = scmp.lt.s32.totalorder %s36, 1
          %s771 = scalar_select %p770, %s36, 1
          %s772 = smul.addr %s771, 10
          %s773 = smul.addr %s772, 8
          %s774 = scalar_lea.vmem %s0, %s773
        $region116: #{compute_coeffs_forward.1} parent=111 // pred_fallthru
          _
      $region112: #{compute_coeffs_forward.1} parent=5 // pred_fallthru
        _
      %p775 = scmp.le.s32.totalorder 1, %s36
      %p776 = scmp.lt.s32.totalorder %s36, 3
      %p777 = pnand %p775, %p776
      %p778 = pneg %p777
      // Predicated region
      $region117: #{compute_coeffs_forward.1} parent=5 // pred_check
        _
      $region118: #{compute_coeffs_forward.1} parent=5 // pred_check_branch
        %780 = sbr.rel (%p777) target = $region120
      $region119: #{compute_coeffs_forward.1} parent=5 // pred_region
        %s781 = ssub.s32 %s36, 1
        // Predicated region
        $region121: #{compute_coeffs_forward.1} parent=119 // pred_check
          %p782 = pneg %p83
        $region122: #{compute_coeffs_forward.1} parent=119 // pred_check_branch
          %784 = sbr.rel (%p782) target = $region124
        $region123: #{compute_coeffs_forward.1} parent=119 // pred_region
          %786 = dma.done [#allocation6], 128
        $region124: #{compute_coeffs_forward.1} parent=119 // pred_fallthru
          _
        // Predicated region
        $region125: #{compute_coeffs_forward.1} parent=119 // pred_check
          %p787 = pneg %p146
        $region126: #{compute_coeffs_forward.1} parent=119 // pred_check_branch
          %789 = sbr.rel (%p787) target = $region128
        $region127: #{compute_coeffs_forward.1} parent=119 // pred_region
          %791 = dma.done [#allocation8], 128
        $region128: #{compute_coeffs_forward.1} parent=119 // pred_fallthru
          _
        // Predicated region
        $region129: #{compute_coeffs_forward.1} parent=119 // pred_check
          %p792 = pneg %p188
        $region130: #{compute_coeffs_forward.1} parent=119 // pred_check_branch
          %794 = sbr.rel (%p792) target = $region132
        $region131: #{compute_coeffs_forward.1} parent=119 // pred_region
          %796 = dma.done [#allocation8], 5248
        $region132: #{compute_coeffs_forward.1} parent=119 // pred_fallthru
          _
        // Predicated region
        $region133: #{compute_coeffs_forward.1} parent=119 // pred_check
          %p797 = pneg %p209
        $region134: #{compute_coeffs_forward.1} parent=119 // pred_check_branch
          %799 = sbr.rel (%p797) target = $region136
        $region135: #{compute_coeffs_forward.1} parent=119 // pred_region
          %801 = dma.done [#allocation11], 512
        $region136: #{compute_coeffs_forward.1} parent=119 // pred_fallthru
          _
        // Predicated region
        $region137: #{compute_coeffs_forward.1} parent=119 // pred_check
          %p802 = pneg %p356
        $region138: #{compute_coeffs_forward.1} parent=119 // pred_check_branch
          %804 = sbr.rel (%p802) target = $region140
        $region139: #{compute_coeffs_forward.1} parent=119 // pred_region
          %806 = dma.done [#allocation11], 512
        $region140: #{compute_coeffs_forward.1} parent=119 // pred_fallthru
          _
        // Predicated region
        $region141: #{compute_coeffs_forward.1} parent=119 // pred_check
          %p807 = pneg %p398
        $region142: #{compute_coeffs_forward.1} parent=119 // pred_check_branch
          %809 = sbr.rel (%p807) target = $region144
        $region143: #{compute_coeffs_forward.1} parent=119 // pred_region
          %811 = dma.done [#allocation14], 512
        $region144: #{compute_coeffs_forward.1} parent=119 // pred_fallthru
          _
        // Predicated region
        $region145: #{compute_coeffs_forward.1} parent=119 // pred_check
          %p812 = pneg %p461
        $region146: #{compute_coeffs_forward.1} parent=119 // pred_check_branch
          %814 = sbr.rel (%p812) target = $region148
        $region147: #{compute_coeffs_forward.1} parent=119 // pred_region
          %816 = dma.done [#allocation14], 1536
        $region148: #{compute_coeffs_forward.1} parent=119 // pred_fallthru
          _
        // Predicated region
        $region149: #{compute_coeffs_forward.1} parent=119 // pred_check
          %p817 = pneg %p482
        $region150: #{compute_coeffs_forward.1} parent=119 // pred_check_branch
          %819 = sbr.rel (%p817) target = $region152
        $region151: #{compute_coeffs_forward.1} parent=119 // pred_region
          %821 = dma.done [#allocation17], 1536
        $region152: #{compute_coeffs_forward.1} parent=119 // pred_fallthru
          _
        %p822 = scmp.lt.s32.totalorder %s41, 1
        %s823 = scalar_select %p822, %s41, 1
        %s824 = smul.addr %s823, 10
        %s825 = smul.addr %s824, 8
        %s826 = scalar_lea.vmem %s0, %s825
        %p827 = pneg %p62
        %p828 = pneg %p59
        %p829 = pneg %p83
        %p830 = pneg %p80
        %p831 = pneg %p104
        %p832 = pneg %p101
        %p833 = pneg %p125
        %p834 = pneg %p122
        %p835 = pneg %p146
        %p836 = pneg %p143
        %p837 = pneg %p167
        %p838 = pneg %p164
        %p839 = pneg %p188
        %p840 = pneg %p185
        %p841 = pneg %p209
        %p842 = pneg %p206
        %p843 = pneg %p230
        %p844 = pneg %p227
        %p845 = pneg %p251
        %p846 = pneg %p248
        %p847 = pneg %p272
        %p848 = pneg %p269
        %p849 = pneg %p293
        %p850 = pneg %p290
        %p851 = pneg %p314
        %p852 = pneg %p311
        %p853 = pneg %p335
        %p854 = pneg %p332
        %p855 = pneg %p356
        %p856 = pneg %p353
        %p857 = pneg %p377
        %p858 = pneg %p374
        %p859 = pneg %p398
        %p860 = pneg %p395
        %p861 = pneg %p419
        %p862 = pneg %p416
        %p863 = pneg %p440
        %p864 = pneg %p437
        %p865 = pneg %p461
        %p866 = pneg %p458
        %p867 = pneg %p482
        %p868 = pneg %p479
        %p869 = pneg %p503
        %p870 = pneg %p500
        %p871 = pneg %p524
        %p872 = pneg %p521
        %p873 = pneg %p545
        %p874 = pneg %p542
        %p875 = pneg %p566
        %p876 = pneg %p563
        %p877 = pneg %p592
        %p878 = pneg %p589
        %p879 = scmp.lt.s32.totalorder %s41, 1
        %s880 = scalar_select %p879, %s41, 1
        %s881 = smul.addr %s880, 6
        %s882 = smul.addr %s881, 8
        %s883 = scalar_lea.vmem %s25, %s882
        %p884 = scmp.lt.s32.totalorder %s41, 1
        %s885 = scalar_select %p884, %s41, 1
        %s886 = smul.addr %s885, 10
        %s887 = smul.addr %s886, 8
        %s888 = scalar_lea.vmem %s0, %s887
        %p889 = scmp.lt.s32.totalorder %s41, 1
        %s890 = scalar_select %p889, %s41, 1
        %s891 = smul.addr %s890, 6
        %s892 = smul.addr %s891, 8
        %s893 = scalar_lea.vmem %s25, %s892
        %v894 = vld [vmem:[%s888] sm:$0xff]
        %v895 = vld [vmem:[%s888 + $0x8] sm:$0xff]
        %v896 = vld [vmem:[%s888 + $0x10] sm:$0xff]
        %v897 = vld [vmem:[%s888 + $0x18] sm:$0xff]
        %v898 = vld [vmem:[%s888 + $0x20] sm:$0xff]
        %v899 = vld [vmem:[%s888 + $0x28] sm:$0xff]
        %v900 = vld [vmem:[%s888 + $0x30] sm:$0xff]
        %v901 = vld [vmem:[%s888 + $0x38] sm:$0xff]
        %v902 = vld [vmem:[%s888 + $0x40] sm:$0xff]
        %v903 = vld [vmem:[%s888 + $0x48] sm:$0xff]
        %914 = vrot.lane.b32.xlu0 %v894, 127
        %v915 = vpop.permute.xlu0 %914
        %916 = vrot.lane.b32.xlu0 %v895, 127
        %v917 = vpop.permute.xlu0 %916
        %918 = vrot.lane.b32.xlu0 %v896, 127
        %v919 = vpop.permute.xlu0 %918
        %920 = vrot.lane.b32.xlu0 %v897, 127
        %v921 = vpop.permute.xlu0 %920
        %922 = vrot.lane.b32.xlu0 %v898, 127
        %v923 = vpop.permute.xlu0 %922
        %924 = vrot.lane.b32.xlu0 %v899, 127
        %v925 = vpop.permute.xlu0 %924
        %926 = vrot.lane.b32.xlu0 %v900, 127
        %v927 = vpop.permute.xlu0 %926
        %928 = vrot.lane.b32.xlu0 %v901, 127
        %v929 = vpop.permute.xlu0 %928
        %930 = vrot.lane.b32.xlu0 %v902, 127
        %v931 = vpop.permute.xlu0 %930
        %932 = vrot.lane.b32.xlu0 %v903, 127
        %v933 = vpop.permute.xlu0 %932
        %vm934 = vcmask 1039360
        %v935 = vsel %vm934, %v915, %v917
        %v936 = vsel %vm934, %v917, %v919
        %v937 = vsel %vm934, %v919, %v921
        %v938 = vsel %vm934, %v921, %v923
        %v939 = vsel %vm934, %v923, %v925
        %v940 = vsel %vm934, %v925, %v927
        %v941 = vsel %vm934, %v927, %v929
        %v942 = vsel %vm934, %v929, %v931
        %v943 = vsel %vm934, %v931, %v933
        %954 = vrot.lane.b32.xlu0 %v894, 126
        %v955 = vpop.permute.xlu0 %954
        %956 = vrot.lane.b32.xlu0 %v895, 126
        %v957 = vpop.permute.xlu0 %956
        %958 = vrot.lane.b32.xlu0 %v896, 126
        %v959 = vpop.permute.xlu0 %958
        %960 = vrot.lane.b32.xlu0 %v897, 126
        %v961 = vpop.permute.xlu0 %960
        %962 = vrot.lane.b32.xlu0 %v898, 126
        %v963 = vpop.permute.xlu0 %962
        %964 = vrot.lane.b32.xlu0 %v899, 126
        %v965 = vpop.permute.xlu0 %964
        %966 = vrot.lane.b32.xlu0 %v900, 126
        %v967 = vpop.permute.xlu0 %966
        %968 = vrot.lane.b32.xlu0 %v901, 126
        %v969 = vpop.permute.xlu0 %968
        %970 = vrot.lane.b32.xlu0 %v902, 126
        %v971 = vpop.permute.xlu0 %970
        %972 = vrot.lane.b32.xlu0 %v903, 126
        %v973 = vpop.permute.xlu0 %972
        %vm974 = vcmask 1031168
        %v975 = vsel %vm974, %v955, %v957
        %v976 = vsel %vm974, %v957, %v959
        %v977 = vsel %vm974, %v959, %v961
        %v978 = vsel %vm974, %v961, %v963
        %v979 = vsel %vm974, %v963, %v965
        %v980 = vsel %vm974, %v965, %v967
        %v981 = vsel %vm974, %v967, %v969
        %v982 = vsel %vm974, %v969, %v971
        %v983 = vsel %vm974, %v971, %v973
        %994 = vrot.lane.b32.xlu0 %v894, 94
        %v995 = vpop.permute.xlu0 %994
        %996 = vrot.lane.b32.xlu0 %v895, 94
        %v997 = vpop.permute.xlu0 %996
        %998 = vrot.lane.b32.xlu0 %v896, 94
        %v999 = vpop.permute.xlu0 %998
        %1000 = vrot.lane.b32.xlu0 %v897, 94
        %v1001 = vpop.permute.xlu0 %1000
        %1002 = vrot.lane.b32.xlu0 %v898, 94
        %v1003 = vpop.permute.xlu0 %1002
        %1004 = vrot.lane.b32.xlu0 %v899, 94
        %v1005 = vpop.permute.xlu0 %1004
        %1006 = vrot.lane.b32.xlu0 %v900, 94
        %v1007 = vpop.permute.xlu0 %1006
        %1008 = vrot.lane.b32.xlu0 %v901, 94
        %v1009 = vpop.permute.xlu0 %1008
        %1010 = vrot.lane.b32.xlu0 %v902, 94
        %v1011 = vpop.permute.xlu0 %1010
        %1012 = vrot.lane.b32.xlu0 %v903, 94
        %v1013 = vpop.permute.xlu0 %1012
        %vm1014 = vcmask 769024
        %v1015 = vsel %vm1014, %v995, %v997
        %v1016 = vsel %vm1014, %v997, %v999
        %v1017 = vsel %vm1014, %v999, %v1001
        %v1018 = vsel %vm1014, %v1001, %v1003
        %v1019 = vsel %vm1014, %v1003, %v1005
        %v1020 = vsel %vm1014, %v1005, %v1007
        %v1021 = vsel %vm1014, %v1007, %v1009
        %v1022 = vsel %vm1014, %v1009, %v1011
        %v1023 = vsel %vm1014, %v1011, %v1013
        %1034 = vrot.lane.b32.xlu0 %v894, 93
        %v1035 = vpop.permute.xlu0 %1034
        %1036 = vrot.lane.b32.xlu0 %v895, 93
        %v1037 = vpop.permute.xlu0 %1036
        %1038 = vrot.lane.b32.xlu0 %v896, 93
        %v1039 = vpop.permute.xlu0 %1038
        %1040 = vrot.lane.b32.xlu0 %v897, 93
        %v1041 = vpop.permute.xlu0 %1040
        %1042 = vrot.lane.b32.xlu0 %v898, 93
        %v1043 = vpop.permute.xlu0 %1042
        %1044 = vrot.lane.b32.xlu0 %v899, 93
        %v1045 = vpop.permute.xlu0 %1044
        %1046 = vrot.lane.b32.xlu0 %v900, 93
        %v1047 = vpop.permute.xlu0 %1046
        %1048 = vrot.lane.b32.xlu0 %v901, 93
        %v1049 = vpop.permute.xlu0 %1048
        %1050 = vrot.lane.b32.xlu0 %v902, 93
        %v1051 = vpop.permute.xlu0 %1050
        %1052 = vrot.lane.b32.xlu0 %v903, 93
        %v1053 = vpop.permute.xlu0 %1052
        %vm1054 = vcmask 760832
        %v1055 = vsel %vm1054, %v1035, %v1037
        %v1056 = vsel %vm1054, %v1037, %v1039
        %v1057 = vsel %vm1054, %v1039, %v1041
        %v1058 = vsel %vm1054, %v1041, %v1043
        %v1059 = vsel %vm1054, %v1043, %v1045
        %v1060 = vsel %vm1054, %v1045, %v1047
        %v1061 = vsel %vm1054, %v1047, %v1049
        %v1062 = vsel %vm1054, %v1049, %v1051
        %v1063 = vsel %vm1054, %v1051, %v1053
        %1074 = vrot.lane.b32.xlu0 %v894, 92
        %v1075 = vpop.permute.xlu0 %1074
        %1076 = vrot.lane.b32.xlu0 %v895, 92
        %v1077 = vpop.permute.xlu0 %1076
        %1078 = vrot.lane.b32.xlu0 %v896, 92
        %v1079 = vpop.permute.xlu0 %1078
        %1080 = vrot.lane.b32.xlu0 %v897, 92
        %v1081 = vpop.permute.xlu0 %1080
        %1082 = vrot.lane.b32.xlu0 %v898, 92
        %v1083 = vpop.permute.xlu0 %1082
        %1084 = vrot.lane.b32.xlu0 %v899, 92
        %v1085 = vpop.permute.xlu0 %1084
        %1086 = vrot.lane.b32.xlu0 %v900, 92
        %v1087 = vpop.permute.xlu0 %1086
        %1088 = vrot.lane.b32.xlu0 %v901, 92
        %v1089 = vpop.permute.xlu0 %1088
        %1090 = vrot.lane.b32.xlu0 %v902, 92
        %v1091 = vpop.permute.xlu0 %1090
        %1092 = vrot.lane.b32.xlu0 %v903, 92
        %v1093 = vpop.permute.xlu0 %1092
        %vm1094 = vcmask 752640
        %v1095 = vsel %vm1094, %v1075, %v1077
        %v1096 = vsel %vm1094, %v1077, %v1079
        %v1097 = vsel %vm1094, %v1079, %v1081
        %v1098 = vsel %vm1094, %v1081, %v1083
        %v1099 = vsel %vm1094, %v1083, %v1085
        %v1100 = vsel %vm1094, %v1085, %v1087
        %v1101 = vsel %vm1094, %v1087, %v1089
        %v1102 = vsel %vm1094, %v1089, %v1091
        %v1103 = vsel %vm1094, %v1091, %v1093
        %1114 = vrot.lane.b32.xlu0 %v894, 60
        %v1115 = vpop.permute.xlu0 %1114
        %1116 = vrot.lane.b32.xlu0 %v895, 60
        %v1117 = vpop.permute.xlu0 %1116
        %1118 = vrot.lane.b32.xlu0 %v896, 60
        %v1119 = vpop.permute.xlu0 %1118
        %1120 = vrot.lane.b32.xlu0 %v897, 60
        %v1121 = vpop.permute.xlu0 %1120
        %1122 = vrot.lane.b32.xlu0 %v898, 60
        %v1123 = vpop.permute.xlu0 %1122
        %1124 = vrot.lane.b32.xlu0 %v899, 60
        %v1125 = vpop.permute.xlu0 %1124
        %1126 = vrot.lane.b32.xlu0 %v900, 60
        %v1127 = vpop.permute.xlu0 %1126
        %1128 = vrot.lane.b32.xlu0 %v901, 60
        %v1129 = vpop.permute.xlu0 %1128
        %1130 = vrot.lane.b32.xlu0 %v902, 60
        %v1131 = vpop.permute.xlu0 %1130
        %1132 = vrot.lane.b32.xlu0 %v903, 60
        %v1133 = vpop.permute.xlu0 %1132
        %vm1134 = vcmask 490496
        %v1135 = vsel %vm1134, %v1115, %v1117
        %v1136 = vsel %vm1134, %v1117, %v1119
        %v1137 = vsel %vm1134, %v1119, %v1121
        %v1138 = vsel %vm1134, %v1121, %v1123
        %v1139 = vsel %vm1134, %v1123, %v1125
        %v1140 = vsel %vm1134, %v1125, %v1127
        %v1141 = vsel %vm1134, %v1127, %v1129
        %v1142 = vsel %vm1134, %v1129, %v1131
        %v1143 = vsel %vm1134, %v1131, %v1133
        %1154 = vrot.lane.b32.xlu0 %v894, 59
        %v1155 = vpop.permute.xlu0 %1154
        %1156 = vrot.lane.b32.xlu0 %v895, 59
        %v1157 = vpop.permute.xlu0 %1156
        %1158 = vrot.lane.b32.xlu0 %v896, 59
        %v1159 = vpop.permute.xlu0 %1158
        %1160 = vrot.lane.b32.xlu0 %v897, 59
        %v1161 = vpop.permute.xlu0 %1160
        %1162 = vrot.lane.b32.xlu0 %v898, 59
        %v1163 = vpop.permute.xlu0 %1162
        %1164 = vrot.lane.b32.xlu0 %v899, 59
        %v1165 = vpop.permute.xlu0 %1164
        %1166 = vrot.lane.b32.xlu0 %v900, 59
        %v1167 = vpop.permute.xlu0 %1166
        %1168 = vrot.lane.b32.xlu0 %v901, 59
        %v1169 = vpop.permute.xlu0 %1168
        %1170 = vrot.lane.b32.xlu0 %v902, 59
        %v1171 = vpop.permute.xlu0 %1170
        %1172 = vrot.lane.b32.xlu0 %v903, 59
        %v1173 = vpop.permute.xlu0 %1172
        %vm1174 = vcmask 482304
        %v1175 = vsel %vm1174, %v1155, %v1157
        %v1176 = vsel %vm1174, %v1157, %v1159
        %v1177 = vsel %vm1174, %v1159, %v1161
        %v1178 = vsel %vm1174, %v1161, %v1163
        %v1179 = vsel %vm1174, %v1163, %v1165
        %v1180 = vsel %vm1174, %v1165, %v1167
        %v1181 = vsel %vm1174, %v1167, %v1169
        %v1182 = vsel %vm1174, %v1169, %v1171
        %v1183 = vsel %vm1174, %v1171, %v1173
        %1194 = vrot.lane.b32.xlu0 %v894, 58
        %v1195 = vpop.permute.xlu0 %1194
        %1196 = vrot.lane.b32.xlu0 %v895, 58
        %v1197 = vpop.permute.xlu0 %1196
        %1198 = vrot.lane.b32.xlu0 %v896, 58
        %v1199 = vpop.permute.xlu0 %1198
        %1200 = vrot.lane.b32.xlu0 %v897, 58
        %v1201 = vpop.permute.xlu0 %1200
        %1202 = vrot.lane.b32.xlu0 %v898, 58
        %v1203 = vpop.permute.xlu0 %1202
        %1204 = vrot.lane.b32.xlu0 %v899, 58
        %v1205 = vpop.permute.xlu0 %1204
        %1206 = vrot.lane.b32.xlu0 %v900, 58
        %v1207 = vpop.permute.xlu0 %1206
        %1208 = vrot.lane.b32.xlu0 %v901, 58
        %v1209 = vpop.permute.xlu0 %1208
        %1210 = vrot.lane.b32.xlu0 %v902, 58
        %v1211 = vpop.permute.xlu0 %1210
        %1212 = vrot.lane.b32.xlu0 %v903, 58
        %v1213 = vpop.permute.xlu0 %1212
        %vm1214 = vcmask 474112
        %v1215 = vsel %vm1214, %v1195, %v1197
        %v1216 = vsel %vm1214, %v1197, %v1199
        %v1217 = vsel %vm1214, %v1199, %v1201
        %v1218 = vsel %vm1214, %v1201, %v1203
        %v1219 = vsel %vm1214, %v1203, %v1205
        %v1220 = vsel %vm1214, %v1205, %v1207
        %v1221 = vsel %vm1214, %v1207, %v1209
        %v1222 = vsel %vm1214, %v1209, %v1211
        %v1223 = vsel %vm1214, %v1211, %v1213
        %v1234 = vld [vmem:[#allocation5] sm:$0xff]
        %v1235 = vld [vmem:[%s2] sm:$0xff]
        %1237 = vset.pattern.permute.xlu0 0
        %1238 = vperm.xlu0 %1237, %v1235
        %v1239 = vpop.permute.xlu0 %1238
        %vm1241 = vcmask 588800
        %v1243 = vsel %vm1241, %v1234, 0
        %1245 = vmatpush.msra.mxu0 0.0
        %1246 = vmatpush.msra.mxu0 0.0
        %1247 = vmatpush.msra.mxu0 0.0
        %1248 = vmatpush.msra.mxu0 0.0
        %1249 = vmatpush.msra.mxu0 0.0
        %1250 = vmatpush.msra.mxu0 0.0
        %1251 = vmatpush.msra.mxu0 0.0
        %1252 = vmatpush.msra.mxu0 %v1215
        %1253 = vmatpush.msra.mxu0 %v1175
        %1254 = vmatpush.msra.mxu0 %v1135
        %1255 = vmatpush.msra.mxu0 %v1095
        %1256 = vmatpush.msra.mxu0 %v1055
        %1257 = vmatpush.msra.mxu0 %v1015
        %1258 = vmatpush.msra.mxu0 %v975
        %1259 = vmatpush.msra.mxu0 %v935
        %1260 = vmatpush.msra.mxu0 %v894
        %1261 = vmatmul.f32.gmra.mxu0 %v1243
        %v1262 = vpop.f32.mrf.mxu0
        %v1263 = vadd.f32 %v1239, %v1262
        %1264 = vdwg.mxu0
        %1265 = vmatpush.msra.mxu0 0.0
        %1266 = vmatpush.msra.mxu0 0.0
        %1267 = vmatpush.msra.mxu0 0.0
        %1268 = vmatpush.msra.mxu0 0.0
        %1269 = vmatpush.msra.mxu0 0.0
        %1270 = vmatpush.msra.mxu0 0.0
        %1271 = vmatpush.msra.mxu0 0.0
        %1272 = vmatpush.msra.mxu0 %v1216
        %1273 = vmatpush.msra.mxu0 %v1176
        %1274 = vmatpush.msra.mxu0 %v1136
        %1275 = vmatpush.msra.mxu0 %v1096
        %1276 = vmatpush.msra.mxu0 %v1056
        %1277 = vmatpush.msra.mxu0 %v1016
        %1278 = vmatpush.msra.mxu0 %v976
        %1279 = vmatpush.msra.mxu0 %v936
        %1280 = vmatpush.msra.mxu0 %v895
        %1281 = vmatmul.f32.gmra.mxu0 %v1243
        %v1282 = vpop.f32.mrf.mxu0
        %v1283 = vadd.f32 %v1239, %v1282
        %1284 = vdwg.mxu0
        %1285 = vmatpush.msra.mxu0 0.0
        %1286 = vmatpush.msra.mxu0 0.0
        %1287 = vmatpush.msra.mxu0 0.0
        %1288 = vmatpush.msra.mxu0 0.0
        %1289 = vmatpush.msra.mxu0 0.0
        %1290 = vmatpush.msra.mxu0 0.0
        %1291 = vmatpush.msra.mxu0 0.0
        %1292 = vmatpush.msra.mxu0 %v1217
        %1293 = vmatpush.msra.mxu0 %v1177
        %1294 = vmatpush.msra.mxu0 %v1137
        %1295 = vmatpush.msra.mxu0 %v1097
        %1296 = vmatpush.msra.mxu0 %v1057
        %1297 = vmatpush.msra.mxu0 %v1017
        %1298 = vmatpush.msra.mxu0 %v977
        %1299 = vmatpush.msra.mxu0 %v937
        %1300 = vmatpush.msra.mxu0 %v896
        %1301 = vmatmul.f32.gmra.mxu0 %v1243
        %v1302 = vpop.f32.mrf.mxu0
        %v1303 = vadd.f32 %v1239, %v1302
        %1304 = vdwg.mxu0
        %1305 = vmatpush.msra.mxu0 0.0
        %1306 = vmatpush.msra.mxu0 0.0
        %1307 = vmatpush.msra.mxu0 0.0
        %1308 = vmatpush.msra.mxu0 0.0
        %1309 = vmatpush.msra.mxu0 0.0
        %1310 = vmatpush.msra.mxu0 0.0
        %1311 = vmatpush.msra.mxu0 0.0
        %1312 = vmatpush.msra.mxu0 %v1218
        %1313 = vmatpush.msra.mxu0 %v1178
        %1314 = vmatpush.msra.mxu0 %v1138
        %1315 = vmatpush.msra.mxu0 %v1098
        %1316 = vmatpush.msra.mxu0 %v1058
        %1317 = vmatpush.msra.mxu0 %v1018
        %1318 = vmatpush.msra.mxu0 %v978
        %1319 = vmatpush.msra.mxu0 %v938
        %1320 = vmatpush.msra.mxu0 %v897
        %1321 = vmatmul.f32.gmra.mxu0 %v1243
        %v1322 = vpop.f32.mrf.mxu0
        %v1323 = vadd.f32 %v1239, %v1322
        %1324 = vdwg.mxu0
        %1325 = vmatpush.msra.mxu0 0.0
        %1326 = vmatpush.msra.mxu0 0.0
        %1327 = vmatpush.msra.mxu0 0.0
        %1328 = vmatpush.msra.mxu0 0.0
        %1329 = vmatpush.msra.mxu0 0.0
        %1330 = vmatpush.msra.mxu0 0.0
        %1331 = vmatpush.msra.mxu0 0.0
        %1332 = vmatpush.msra.mxu0 %v1219
        %1333 = vmatpush.msra.mxu0 %v1179
        %1334 = vmatpush.msra.mxu0 %v1139
        %1335 = vmatpush.msra.mxu0 %v1099
        %1336 = vmatpush.msra.mxu0 %v1059
        %1337 = vmatpush.msra.mxu0 %v1019
        %1338 = vmatpush.msra.mxu0 %v979
        %1339 = vmatpush.msra.mxu0 %v939
        %1340 = vmatpush.msra.mxu0 %v898
        %1341 = vmatmul.f32.gmra.mxu0 %v1243
        %v1342 = vpop.f32.mrf.mxu0
        %v1343 = vadd.f32 %v1239, %v1342
        %1344 = vdwg.mxu0
        %1345 = vmatpush.msra.mxu0 0.0
        %1346 = vmatpush.msra.mxu0 0.0
        %1347 = vmatpush.msra.mxu0 0.0
        %1348 = vmatpush.msra.mxu0 0.0
        %1349 = vmatpush.msra.mxu0 0.0
        %1350 = vmatpush.msra.mxu0 0.0
        %1351 = vmatpush.msra.mxu0 0.0
        %1352 = vmatpush.msra.mxu0 %v1220
        %1353 = vmatpush.msra.mxu0 %v1180
        %1354 = vmatpush.msra.mxu0 %v1140
        %1355 = vmatpush.msra.mxu0 %v1100
        %1356 = vmatpush.msra.mxu0 %v1060
        %1357 = vmatpush.msra.mxu0 %v1020
        %1358 = vmatpush.msra.mxu0 %v980
        %1359 = vmatpush.msra.mxu0 %v940
        %1360 = vmatpush.msra.mxu0 %v899
        %1361 = vmatmul.f32.gmra.mxu0 %v1243
        %v1362 = vpop.f32.mrf.mxu0
        %v1363 = vadd.f32 %v1239, %v1362
        %1364 = vdwg.mxu0
        %1365 = vmatpush.msra.mxu0 0.0
        %1366 = vmatpush.msra.mxu0 0.0
        %1367 = vmatpush.msra.mxu0 0.0
        %1368 = vmatpush.msra.mxu0 0.0
        %1369 = vmatpush.msra.mxu0 0.0
        %1370 = vmatpush.msra.mxu0 0.0
        %1371 = vmatpush.msra.mxu0 0.0
        %1372 = vmatpush.msra.mxu0 %v1221
        %1373 = vmatpush.msra.mxu0 %v1181
        %1374 = vmatpush.msra.mxu0 %v1141
        %1375 = vmatpush.msra.mxu0 %v1101
        %1376 = vmatpush.msra.mxu0 %v1061
        %1377 = vmatpush.msra.mxu0 %v1021
        %1378 = vmatpush.msra.mxu0 %v981
        %1379 = vmatpush.msra.mxu0 %v941
        %1380 = vmatpush.msra.mxu0 %v900
        %1381 = vmatmul.f32.gmra.mxu0 %v1243
        %v1382 = vpop.f32.mrf.mxu0
        %v1383 = vadd.f32 %v1239, %v1382
        %1384 = vdwg.mxu0
        %1385 = vmatpush.msra.mxu0 0.0
        %1386 = vmatpush.msra.mxu0 0.0
        %1387 = vmatpush.msra.mxu0 0.0
        %1388 = vmatpush.msra.mxu0 0.0
        %1389 = vmatpush.msra.mxu0 0.0
        %1390 = vmatpush.msra.mxu0 0.0
        %1391 = vmatpush.msra.mxu0 0.0
        %1392 = vmatpush.msra.mxu0 %v1222
        %1393 = vmatpush.msra.mxu0 %v1182
        %1394 = vmatpush.msra.mxu0 %v1142
        %1395 = vmatpush.msra.mxu0 %v1102
        %1396 = vmatpush.msra.mxu0 %v1062
        %1397 = vmatpush.msra.mxu0 %v1022
        %1398 = vmatpush.msra.mxu0 %v982
        %1399 = vmatpush.msra.mxu0 %v942
        %1400 = vmatpush.msra.mxu0 %v901
        %1401 = vmatmul.f32.gmra.mxu0 %v1243
        %v1402 = vpop.f32.mrf.mxu0
        %v1403 = vadd.f32 %v1239, %v1402
        %1404 = vdwg.mxu0
        %1405 = vmatpush.msra.mxu0 0.0
        %1406 = vmatpush.msra.mxu0 0.0
        %1407 = vmatpush.msra.mxu0 0.0
        %1408 = vmatpush.msra.mxu0 0.0
        %1409 = vmatpush.msra.mxu0 0.0
        %1410 = vmatpush.msra.mxu0 0.0
        %1411 = vmatpush.msra.mxu0 0.0
        %1412 = vmatpush.msra.mxu0 %v1223
        %1413 = vmatpush.msra.mxu0 %v1183
        %1414 = vmatpush.msra.mxu0 %v1143
        %1415 = vmatpush.msra.mxu0 %v1103
        %1416 = vmatpush.msra.mxu0 %v1063
        %1417 = vmatpush.msra.mxu0 %v1023
        %1418 = vmatpush.msra.mxu0 %v983
        %1419 = vmatpush.msra.mxu0 %v943
        %1420 = vmatpush.msra.mxu0 %v902
        %1421 = vmatmul.f32.gmra.mxu0 %v1243
        %v1422 = vpop.f32.mrf.mxu0
        %v1423 = vadd.f32 %v1239, %v1422
        %1424 = vdwg.mxu0
        %1425 = vmatpush.msra.mxu0 0.0
        %1426 = vmatpush.msra.mxu0 0.0
        %1427 = vmatpush.msra.mxu0 0.0
        %1428 = vmatpush.msra.mxu0 0.0
        %1429 = vmatpush.msra.mxu0 0.0
        %1430 = vmatpush.msra.mxu0 0.0
        %1431 = vmatpush.msra.mxu0 0.0
        %1432 = vmatpush.msra.mxu0 %v1213
        %1433 = vmatpush.msra.mxu0 %v1173
        %1434 = vmatpush.msra.mxu0 %v1133
        %1435 = vmatpush.msra.mxu0 %v1093
        %1436 = vmatpush.msra.mxu0 %v1053
        %1437 = vmatpush.msra.mxu0 %v1013
        %1438 = vmatpush.msra.mxu0 %v973
        %1439 = vmatpush.msra.mxu0 %v933
        %1440 = vmatpush.msra.mxu0 %v903
        %1441 = vmatmul.f32.gmra.mxu0 %v1243
        %v1442 = vpop.f32.mrf.mxu0
        %v1443 = vadd.f32 %v1239, %v1442
        %1444 = vdwg.mxu0
        %v1445 = vmax.f32 %v1263, 0.0
        %v1446 = vmax.f32 %v1283, 0.0
        %v1447 = vmax.f32 %v1303, 0.0
        %v1448 = vmax.f32 %v1323, 0.0
        %v1449 = vmax.f32 %v1343, 0.0
        %v1450 = vmax.f32 %v1363, 0.0
        %v1451 = vmax.f32 %v1383, 0.0
        %v1452 = vmax.f32 %v1403, 0.0
        %v1453 = vmax.f32 %v1423, 0.0
        %v1454 = vmax.f32 %v1443, 0.0
        %v1455 = vld [vmem:[%s3] sm:$0xff]
        %v1456 = vld [vmem:[%s3 + $0x8] sm:$0xff]
        %v1457 = vld [vmem:[%s3 + $0x10] sm:$0xff]
        %v1458 = vld [vmem:[%s3 + $0x18] sm:$0xff]
        %v1459 = vld [vmem:[%s3 + $0x20] sm:$0xff]
        %v1460 = vld [vmem:[%s3 + $0x28] sm:$0xff]
        %v1461 = vld [vmem:[%s3 + $0x30] sm:$0xff]
        %v1462 = vld [vmem:[%s3 + $0x38] sm:$0xff]
        %v1463 = vld [vmem:[%s3 + $0x40] sm:$0xff]
        %v1464 = vld [vmem:[%s3 + $0x48] sm:$0xff]
        %v1465 = vld [vmem:[%s3 + $0x50] sm:$0xff]
        %v1466 = vld [vmem:[%s3 + $0x58] sm:$0xff]
        %v1467 = vld [vmem:[%s3 + $0x60] sm:$0xff]
        %v1468 = vld [vmem:[%s3 + $0x68] sm:$0xff]
        %v1469 = vld [vmem:[%s3 + $0x70] sm:$0xff]
        %v1470 = vld [vmem:[%s3 + $0x78] sm:$0xff]
        %v1471 = vld [vmem:[%s3 + $0x80] sm:$0xff]
        %v1472 = vld [vmem:[%s3 + $0x88] sm:$0xff]
        %v1473 = vld [vmem:[%s3 + $0x90] sm:$0xff]
        %v1474 = vld [vmem:[%s3 + $0x98] sm:$0xff]
        %v1475 = vld [vmem:[%s3 + $0xa0] sm:$0xff]
        %v1476 = vld [vmem:[%s3 + $0xa8] sm:$0xff]
        %v1477 = vld [vmem:[%s3 + $0xb0] sm:$0xff]
        %v1478 = vld [vmem:[%s3 + $0xb8] sm:$0xff]
        %v1479 = vld [vmem:[%s3 + $0xc0] sm:$0xff]
        %v1480 = vld [vmem:[%s3 + $0xc8] sm:$0xff]
        %v1481 = vld [vmem:[%s3 + $0xd0] sm:$0xff]
        %v1482 = vld [vmem:[%s3 + $0xd8] sm:$0xff]
        %v1483 = vld [vmem:[%s3 + $0xe0] sm:$0xff]
        %v1484 = vld [vmem:[%s3 + $0xe8] sm:$0xff]
        %v1485 = vld [vmem:[%s3 + $0xf0] sm:$0xff]
        %v1486 = vld [vmem:[%s3 + $0xf8] sm:$0xff]
        %v1487 = vld [vmem:[%s3 + $0x100] sm:$0xff]
        %v1488 = vld [vmem:[%s3 + $0x108] sm:$0xff]
        %v1489 = vld [vmem:[%s3 + $0x110] sm:$0xff]
        %v1490 = vld [vmem:[%s3 + $0x118] sm:$0xff]
        %v1491 = vld [vmem:[%s3 + $0x120] sm:$0xff]
        %v1492 = vld [vmem:[%s3 + $0x128] sm:$0xff]
        %v1493 = vld [vmem:[%s3 + $0x130] sm:$0xff]
        %v1494 = vld [vmem:[%s3 + $0x138] sm:$0xff]
        %v1495 = vld [vmem:[%s3 + $0x140] sm:$0xff]
        %v1496 = vld [vmem:[%s3 + $0x148] sm:$0xff]
        %v1497 = vld [vmem:[%s3 + $0x150] sm:$0xff]
        %v1498 = vld [vmem:[%s3 + $0x158] sm:$0xff]
        %v1499 = vld [vmem:[%s3 + $0x160] sm:$0xff]
        %v1500 = vld [vmem:[%s3 + $0x168] sm:$0xff]
        %v1501 = vld [vmem:[%s3 + $0x170] sm:$0xff]
        %v1502 = vld [vmem:[%s3 + $0x178] sm:$0xff]
        %v1503 = vld [vmem:[%s3 + $0x180] sm:$0xff]
        %v1504 = vld [vmem:[%s3 + $0x188] sm:$0xff]
        %v1505 = vld [vmem:[%s3 + $0x190] sm:$0xff]
        %v1506 = vld [vmem:[%s3 + $0x198] sm:$0xff]
        %v1507 = vld [vmem:[%s3 + $0x1a0] sm:$0xff]
        %v1508 = vld [vmem:[%s3 + $0x1a8] sm:$0xff]
        %v1509 = vld [vmem:[%s3 + $0x1b0] sm:$0xff]
        %v1510 = vld [vmem:[%s3 + $0x1b8] sm:$0xff]
        %v1511 = vld [vmem:[%s3 + $0x1c0] sm:$0xff]
        %v1512 = vld [vmem:[%s3 + $0x1c8] sm:$0xff]
        %v1513 = vld [vmem:[%s3 + $0x1d0] sm:$0xff]
        %v1514 = vld [vmem:[%s3 + $0x1d8] sm:$0xff]
        %v1515 = vld [vmem:[%s3 + $0x1e0] sm:$0xff]
        %v1516 = vld [vmem:[%s3 + $0x1e8] sm:$0xff]
        %v1517 = vld [vmem:[%s3 + $0x1f0] sm:$0xff]
        %v1518 = vld [vmem:[%s3 + $0x1f8] sm:$0xff]
        %v1519 = vld [vmem:[%s3 + $0x200] sm:$0xff]
        %v1520 = vld [vmem:[%s3 + $0x208] sm:$0xff]
        %v1521 = vld [vmem:[%s3 + $0x210] sm:$0xff]
        %v1522 = vld [vmem:[%s3 + $0x218] sm:$0xff]
        %v1523 = vld [vmem:[%s3 + $0x220] sm:$0xff]
        %v1524 = vld [vmem:[%s3 + $0x228] sm:$0xff]
        %v1525 = vld [vmem:[%s3 + $0x230] sm:$0xff]
        %v1526 = vld [vmem:[%s3 + $0x238] sm:$0xff]
        %v1527 = vld [vmem:[%s3 + $0x240] sm:$0xff]
        %v1528 = vld [vmem:[%s3 + $0x248] sm:$0xff]
        %v1529 = vld [vmem:[%s3 + $0x250] sm:$0xff]
        %v1530 = vld [vmem:[%s3 + $0x258] sm:$0xff]
        %v1531 = vld [vmem:[%s3 + $0x260] sm:$0xff]
        %v1532 = vld [vmem:[%s3 + $0x268] sm:$0xff]
        %v1533 = vld [vmem:[%s3 + $0x270] sm:$0xff]
        %v1534 = vld [vmem:[%s3 + $0x278] sm:$0xff]
        %v1535 = vld [vmem:[%s3 + $0x280] sm:$0xff]
        %v1536 = vld [vmem:[%s3 + $0x288] sm:$0xff]
        %v1537 = vld [vmem:[%s3 + $0x290] sm:$0xff]
        %v1538 = vld [vmem:[%s3 + $0x298] sm:$0xff]
        %v1539 = vld [vmem:[%s3 + $0x2a0] sm:$0xff]
        %v1540 = vld [vmem:[%s3 + $0x2a8] sm:$0xff]
        %v1541 = vld [vmem:[%s3 + $0x2b0] sm:$0xff]
        %v1542 = vld [vmem:[%s3 + $0x2b8] sm:$0xff]
        %v1543 = vld [vmem:[%s3 + $0x2c0] sm:$0xff]
        %v1544 = vld [vmem:[%s3 + $0x2c8] sm:$0xff]
        %v1545 = vld [vmem:[%s3 + $0x2d0] sm:$0xff]
        %v1546 = vld [vmem:[%s3 + $0x2d8] sm:$0xff]
        %v1547 = vld [vmem:[%s3 + $0x2e0] sm:$0xff]
        %v1548 = vld [vmem:[%s3 + $0x2e8] sm:$0xff]
        %v1549 = vld [vmem:[%s3 + $0x2f0] sm:$0xff]
        %v1550 = vld [vmem:[%s3 + $0x2f8] sm:$0xff]
        %v1551 = vld [vmem:[%s3 + $0x300] sm:$0xff]
        %v1552 = vld [vmem:[%s3 + $0x308] sm:$0xff]
        %v1553 = vld [vmem:[%s3 + $0x310] sm:$0xff]
        %v1554 = vld [vmem:[%s3 + $0x318] sm:$0xff]
        %v1555 = vld [vmem:[%s3 + $0x320] sm:$0xff]
        %v1556 = vld [vmem:[%s3 + $0x328] sm:$0xff]
        %v1557 = vld [vmem:[%s3 + $0x330] sm:$0xff]
        %v1558 = vld [vmem:[%s3 + $0x338] sm:$0xff]
        %v1559 = vld [vmem:[%s3 + $0x340] sm:$0xff]
        %v1560 = vld [vmem:[%s3 + $0x348] sm:$0xff]
        %v1561 = vld [vmem:[%s3 + $0x350] sm:$0xff]
        %v1562 = vld [vmem:[%s3 + $0x358] sm:$0xff]
        %v1563 = vld [vmem:[%s3 + $0x360] sm:$0xff]
        %v1564 = vld [vmem:[%s3 + $0x368] sm:$0xff]
        %v1565 = vld [vmem:[%s3 + $0x370] sm:$0xff]
        %v1566 = vld [vmem:[%s3 + $0x378] sm:$0xff]
        %v1567 = vld [vmem:[%s3 + $0x380] sm:$0xff]
        %v1568 = vld [vmem:[%s3 + $0x388] sm:$0xff]
        %v1569 = vld [vmem:[%s3 + $0x390] sm:$0xff]
        %v1570 = vld [vmem:[%s3 + $0x398] sm:$0xff]
        %v1571 = vld [vmem:[%s3 + $0x3a0] sm:$0xff]
        %v1572 = vld [vmem:[%s3 + $0x3a8] sm:$0xff]
        %v1573 = vld [vmem:[%s3 + $0x3b0] sm:$0xff]
        %v1574 = vld [vmem:[%s3 + $0x3b8] sm:$0xff]
        %v1575 = vld [vmem:[%s3 + $0x3c0] sm:$0xff]
        %v1576 = vld [vmem:[%s3 + $0x3c8] sm:$0xff]
        %v1577 = vld [vmem:[%s3 + $0x3d0] sm:$0xff]
        %v1578 = vld [vmem:[%s3 + $0x3d8] sm:$0xff]
        %v1579 = vld [vmem:[%s3 + $0x3e0] sm:$0xff]
        %v1580 = vld [vmem:[%s3 + $0x3e8] sm:$0xff]
        %v1581 = vld [vmem:[%s3 + $0x3f0] sm:$0xff]
        %v1582 = vld [vmem:[%s3 + $0x3f8] sm:$0xff]
        %v1583 = vld [vmem:[%s3 + $0x400] sm:$0xff]
        %v1584 = vld [vmem:[%s3 + $0x408] sm:$0xff]
        %v1585 = vld [vmem:[%s3 + $0x410] sm:$0xff]
        %v1586 = vld [vmem:[%s3 + $0x418] sm:$0xff]
        %v1587 = vld [vmem:[%s3 + $0x420] sm:$0xff]
        %v1588 = vld [vmem:[%s3 + $0x428] sm:$0xff]
        %v1589 = vld [vmem:[%s3 + $0x430] sm:$0xff]
        %v1590 = vld [vmem:[%s3 + $0x438] sm:$0xff]
        %v1591 = vld [vmem:[%s3 + $0x440] sm:$0xff]
        %v1592 = vld [vmem:[%s3 + $0x448] sm:$0xff]
        %v1593 = vld [vmem:[%s3 + $0x450] sm:$0xff]
        %v1594 = vld [vmem:[%s3 + $0x458] sm:$0xff]
        %v1595 = vld [vmem:[%s3 + $0x460] sm:$0xff]
        %v1596 = vld [vmem:[%s3 + $0x468] sm:$0xff]
        %v1597 = vld [vmem:[%s3 + $0x470] sm:$0xff]
        %v1598 = vld [vmem:[%s3 + $0x478] sm:$0xff]
        %v1599 = vld [vmem:[%s3 + $0x480] sm:$0xff]
        %v1600 = vld [vmem:[%s3 + $0x488] sm:$0xff]
        %v1601 = vld [vmem:[%s3 + $0x490] sm:$0xff]
        %v1602 = vld [vmem:[%s3 + $0x498] sm:$0xff]
        %v1603 = vld [vmem:[%s3 + $0x4a0] sm:$0xff]
        %v1604 = vld [vmem:[%s3 + $0x4a8] sm:$0xff]
        %v1605 = vld [vmem:[%s3 + $0x4b0] sm:$0xff]
        %v1606 = vld [vmem:[%s3 + $0x4b8] sm:$0xff]
        %v1607 = vld [vmem:[%s3 + $0x4c0] sm:$0xff]
        %v1608 = vld [vmem:[%s3 + $0x4c8] sm:$0xff]
        %v1609 = vld [vmem:[%s3 + $0x4d0] sm:$0xff]
        %v1610 = vld [vmem:[%s3 + $0x4d8] sm:$0xff]
        %v1611 = vld [vmem:[%s3 + $0x4e0] sm:$0xff]
        %v1612 = vld [vmem:[%s3 + $0x4e8] sm:$0xff]
        %v1613 = vld [vmem:[%s3 + $0x4f0] sm:$0xff]
        %v1614 = vld [vmem:[%s3 + $0x4f8] sm:$0xff]
        %v1615 = vld [vmem:[%s3 + $0x500] sm:$0xff]
        %v1616 = vld [vmem:[%s3 + $0x508] sm:$0xff]
        %v1617 = vld [vmem:[%s3 + $0x510] sm:$0xff]
        %v1618 = vld [vmem:[%s3 + $0x518] sm:$0xff]
        %v1619 = vld [vmem:[%s3 + $0x520] sm:$0xff]
        %v1620 = vld [vmem:[%s3 + $0x528] sm:$0xff]
        %v1621 = vld [vmem:[%s3 + $0x530] sm:$0xff]
        %v1622 = vld [vmem:[%s3 + $0x538] sm:$0xff]
        %v1623 = vld [vmem:[%s3 + $0x540] sm:$0xff]
        %v1624 = vld [vmem:[%s3 + $0x548] sm:$0xff]
        %v1625 = vld [vmem:[%s3 + $0x550] sm:$0xff]
        %v1626 = vld [vmem:[%s3 + $0x558] sm:$0xff]
        %v1627 = vld [vmem:[%s3 + $0x560] sm:$0xff]
        %v1628 = vld [vmem:[%s3 + $0x568] sm:$0xff]
        %v1629 = vld [vmem:[%s3 + $0x570] sm:$0xff]
        %v1630 = vld [vmem:[%s3 + $0x578] sm:$0xff]
        %v1631 = vld [vmem:[%s3 + $0x580] sm:$0xff]
        %v1632 = vld [vmem:[%s3 + $0x588] sm:$0xff]
        %v1633 = vld [vmem:[%s3 + $0x590] sm:$0xff]
        %v1634 = vld [vmem:[%s3 + $0x598] sm:$0xff]
        %v1635 = vld [vmem:[%s3 + $0x5a0] sm:$0xff]
        %v1636 = vld [vmem:[%s3 + $0x5a8] sm:$0xff]
        %v1637 = vld [vmem:[%s3 + $0x5b0] sm:$0xff]
        %v1638 = vld [vmem:[%s3 + $0x5b8] sm:$0xff]
        %v1639 = vld [vmem:[%s3 + $0x5c0] sm:$0xff]
        %v1640 = vld [vmem:[%s3 + $0x5c8] sm:$0xff]
        %v1641 = vld [vmem:[%s3 + $0x5d0] sm:$0xff]
        %v1642 = vld [vmem:[%s3 + $0x5d8] sm:$0xff]
        %v1643 = vld [vmem:[%s3 + $0x5e0] sm:$0xff]
        %v1644 = vld [vmem:[%s3 + $0x5e8] sm:$0xff]
        %v1645 = vld [vmem:[%s3 + $0x5f0] sm:$0xff]
        %v1646 = vld [vmem:[%s3 + $0x5f8] sm:$0xff]
        %v1647 = vld [vmem:[%s3 + $0x600] sm:$0xff]
        %v1648 = vld [vmem:[%s3 + $0x608] sm:$0xff]
        %v1649 = vld [vmem:[%s3 + $0x610] sm:$0xff]
        %v1650 = vld [vmem:[%s3 + $0x618] sm:$0xff]
        %v1651 = vld [vmem:[%s3 + $0x620] sm:$0xff]
        %v1652 = vld [vmem:[%s3 + $0x628] sm:$0xff]
        %v1653 = vld [vmem:[%s3 + $0x630] sm:$0xff]
        %v1654 = vld [vmem:[%s3 + $0x638] sm:$0xff]
        %v1655 = vld [vmem:[%s3 + $0x640] sm:$0xff]
        %v1656 = vld [vmem:[%s3 + $0x648] sm:$0xff]
        %v1657 = vld [vmem:[%s3 + $0x650] sm:$0xff]
        %v1658 = vld [vmem:[%s3 + $0x658] sm:$0xff]
        %v1659 = vld [vmem:[%s3 + $0x660] sm:$0xff]
        %v1660 = vld [vmem:[%s3 + $0x668] sm:$0xff]
        %v1661 = vld [vmem:[%s3 + $0x670] sm:$0xff]
        %v1662 = vld [vmem:[%s3 + $0x678] sm:$0xff]
        %v1663 = vld [vmem:[%s3 + $0x680] sm:$0xff]
        %v1664 = vld [vmem:[%s3 + $0x688] sm:$0xff]
        %v1665 = vld [vmem:[%s3 + $0x690] sm:$0xff]
        %v1666 = vld [vmem:[%s3 + $0x698] sm:$0xff]
        %v1667 = vld [vmem:[%s3 + $0x6a0] sm:$0xff]
        %v1668 = vld [vmem:[%s3 + $0x6a8] sm:$0xff]
        %v1669 = vld [vmem:[%s3 + $0x6b0] sm:$0xff]
        %v1670 = vld [vmem:[%s3 + $0x6b8] sm:$0xff]
        %v1671 = vld [vmem:[%s3 + $0x6c0] sm:$0xff]
        %v1672 = vld [vmem:[%s3 + $0x6c8] sm:$0xff]
        %v1673 = vld [vmem:[%s3 + $0x6d0] sm:$0xff]
        %v1674 = vld [vmem:[%s3 + $0x6d8] sm:$0xff]
        %v1675 = vld [vmem:[%s3 + $0x6e0] sm:$0xff]
        %v1676 = vld [vmem:[%s3 + $0x6e8] sm:$0xff]
        %v1677 = vld [vmem:[%s3 + $0x6f0] sm:$0xff]
        %v1678 = vld [vmem:[%s3 + $0x6f8] sm:$0xff]
        %v1679 = vld [vmem:[%s3 + $0x700] sm:$0xff]
        %v1680 = vld [vmem:[%s3 + $0x708] sm:$0xff]
        %v1681 = vld [vmem:[%s3 + $0x710] sm:$0xff]
        %v1682 = vld [vmem:[%s3 + $0x718] sm:$0xff]
        %v1683 = vld [vmem:[%s3 + $0x720] sm:$0xff]
        %v1684 = vld [vmem:[%s3 + $0x728] sm:$0xff]
        %v1685 = vld [vmem:[%s3 + $0x730] sm:$0xff]
        %v1686 = vld [vmem:[%s3 + $0x738] sm:$0xff]
        %v1687 = vld [vmem:[%s3 + $0x740] sm:$0xff]
        %v1688 = vld [vmem:[%s3 + $0x748] sm:$0xff]
        %v1689 = vld [vmem:[%s3 + $0x750] sm:$0xff]
        %v1690 = vld [vmem:[%s3 + $0x758] sm:$0xff]
        %v1691 = vld [vmem:[%s3 + $0x760] sm:$0xff]
        %v1692 = vld [vmem:[%s3 + $0x768] sm:$0xff]
        %v1693 = vld [vmem:[%s3 + $0x770] sm:$0xff]
        %v1694 = vld [vmem:[%s3 + $0x778] sm:$0xff]
        %v1695 = vld [vmem:[%s3 + $0x780] sm:$0xff]
        %v1696 = vld [vmem:[%s3 + $0x788] sm:$0xff]
        %v1697 = vld [vmem:[%s3 + $0x790] sm:$0xff]
        %v1698 = vld [vmem:[%s3 + $0x798] sm:$0xff]
        %v1699 = vld [vmem:[%s3 + $0x7a0] sm:$0xff]
        %v1700 = vld [vmem:[%s3 + $0x7a8] sm:$0xff]
        %v1701 = vld [vmem:[%s3 + $0x7b0] sm:$0xff]
        %v1702 = vld [vmem:[%s3 + $0x7b8] sm:$0xff]
        %v1703 = vld [vmem:[%s3 + $0x7c0] sm:$0xff]
        %v1704 = vld [vmem:[%s3 + $0x7c8] sm:$0xff]
        %v1705 = vld [vmem:[%s3 + $0x7d0] sm:$0xff]
        %v1706 = vld [vmem:[%s3 + $0x7d8] sm:$0xff]
        %v1707 = vld [vmem:[%s3 + $0x7e0] sm:$0xff]
        %v1708 = vld [vmem:[%s3 + $0x7e8] sm:$0xff]
        %v1709 = vld [vmem:[%s3 + $0x7f0] sm:$0xff]
        %v1710 = vld [vmem:[%s3 + $0x7f8] sm:$0xff]
        %v1711 = vld [vmem:[%s3 + $0x800] sm:$0xff]
        %v1712 = vld [vmem:[%s3 + $0x808] sm:$0xff]
        %v1713 = vld [vmem:[%s3 + $0x810] sm:$0xff]
        %v1714 = vld [vmem:[%s3 + $0x818] sm:$0xff]
        %v1715 = vld [vmem:[%s3 + $0x820] sm:$0xff]
        %v1716 = vld [vmem:[%s3 + $0x828] sm:$0xff]
        %v1717 = vld [vmem:[%s3 + $0x830] sm:$0xff]
        %v1718 = vld [vmem:[%s3 + $0x838] sm:$0xff]
        %v1719 = vld [vmem:[%s3 + $0x840] sm:$0xff]
        %v1720 = vld [vmem:[%s3 + $0x848] sm:$0xff]
        %v1721 = vld [vmem:[%s3 + $0x850] sm:$0xff]
        %v1722 = vld [vmem:[%s3 + $0x858] sm:$0xff]
        %v1723 = vld [vmem:[%s3 + $0x860] sm:$0xff]
        %v1724 = vld [vmem:[%s3 + $0x868] sm:$0xff]
        %v1725 = vld [vmem:[%s3 + $0x870] sm:$0xff]
        %v1726 = vld [vmem:[%s3 + $0x878] sm:$0xff]
        %v1727 = vld [vmem:[%s3 + $0x880] sm:$0xff]
        %v1728 = vld [vmem:[%s3 + $0x888] sm:$0xff]
        %v1729 = vld [vmem:[%s3 + $0x890] sm:$0xff]
        %v1730 = vld [vmem:[%s3 + $0x898] sm:$0xff]
        %v1731 = vld [vmem:[%s3 + $0x8a0] sm:$0xff]
        %v1732 = vld [vmem:[%s3 + $0x8a8] sm:$0xff]
        %v1733 = vld [vmem:[%s3 + $0x8b0] sm:$0xff]
        %v1734 = vld [vmem:[%s3 + $0x8b8] sm:$0xff]
        %v1735 = vld [vmem:[%s3 + $0x8c0] sm:$0xff]
        %v1736 = vld [vmem:[%s3 + $0x8c8] sm:$0xff]
        %v1737 = vld [vmem:[%s3 + $0x8d0] sm:$0xff]
        %v1738 = vld [vmem:[%s3 + $0x8d8] sm:$0xff]
        %v1739 = vld [vmem:[%s3 + $0x8e0] sm:$0xff]
        %v1740 = vld [vmem:[%s3 + $0x8e8] sm:$0xff]
        %v1741 = vld [vmem:[%s3 + $0x8f0] sm:$0xff]
        %v1742 = vld [vmem:[%s3 + $0x8f8] sm:$0xff]
        %v1743 = vld [vmem:[%s3 + $0x900] sm:$0xff]
        %v1744 = vld [vmem:[%s3 + $0x908] sm:$0xff]
        %v1745 = vld [vmem:[%s3 + $0x910] sm:$0xff]
        %v1746 = vld [vmem:[%s3 + $0x918] sm:$0xff]
        %v1747 = vld [vmem:[%s3 + $0x920] sm:$0xff]
        %v1748 = vld [vmem:[%s3 + $0x928] sm:$0xff]
        %v1749 = vld [vmem:[%s3 + $0x930] sm:$0xff]
        %v1750 = vld [vmem:[%s3 + $0x938] sm:$0xff]
        %v1751 = vld [vmem:[%s3 + $0x940] sm:$0xff]
        %v1752 = vld [vmem:[%s3 + $0x948] sm:$0xff]
        %v1753 = vld [vmem:[%s3 + $0x950] sm:$0xff]
        %v1754 = vld [vmem:[%s3 + $0x958] sm:$0xff]
        %v1755 = vld [vmem:[%s3 + $0x960] sm:$0xff]
        %v1756 = vld [vmem:[%s3 + $0x968] sm:$0xff]
        %v1757 = vld [vmem:[%s3 + $0x970] sm:$0xff]
        %v1758 = vld [vmem:[%s3 + $0x978] sm:$0xff]
        %v1759 = vld [vmem:[%s3 + $0x980] sm:$0xff]
        %v1760 = vld [vmem:[%s3 + $0x988] sm:$0xff]
        %v1761 = vld [vmem:[%s3 + $0x990] sm:$0xff]
        %v1762 = vld [vmem:[%s3 + $0x998] sm:$0xff]
        %v1763 = vld [vmem:[%s3 + $0x9a0] sm:$0xff]
        %v1764 = vld [vmem:[%s3 + $0x9a8] sm:$0xff]
        %v1765 = vld [vmem:[%s3 + $0x9b0] sm:$0xff]
        %v1766 = vld [vmem:[%s3 + $0x9b8] sm:$0xff]
        %v1767 = vld [vmem:[%s3 + $0x9c0] sm:$0xff]
        %v1768 = vld [vmem:[%s3 + $0x9c8] sm:$0xff]
        %v1769 = vld [vmem:[%s3 + $0x9d0] sm:$0xff]
        %v1770 = vld [vmem:[%s3 + $0x9d8] sm:$0xff]
        %v1771 = vld [vmem:[%s3 + $0x9e0] sm:$0xff]
        %v1772 = vld [vmem:[%s3 + $0x9e8] sm:$0xff]
        %v1773 = vld [vmem:[%s3 + $0x9f0] sm:$0xff]
        %v1774 = vld [vmem:[%s3 + $0x9f8] sm:$0xff]
        %v1775 = vld [vmem:[%s3 + $0xa00] sm:$0xff]
        %v1776 = vld [vmem:[%s3 + $0xa08] sm:$0xff]
        %v1777 = vld [vmem:[%s3 + $0xa10] sm:$0xff]
        %v1778 = vld [vmem:[%s3 + $0xa18] sm:$0xff]
        %v1779 = vld [vmem:[%s3 + $0xa20] sm:$0xff]
        %v1780 = vld [vmem:[%s3 + $0xa28] sm:$0xff]
        %v1781 = vld [vmem:[%s3 + $0xa30] sm:$0xff]
        %v1782 = vld [vmem:[%s3 + $0xa38] sm:$0xff]
        %v1783 = vld [vmem:[%s3 + $0xa40] sm:$0xff]
        %v1784 = vld [vmem:[%s3 + $0xa48] sm:$0xff]
        %v1785 = vld [vmem:[%s3 + $0xa50] sm:$0xff]
        %v1786 = vld [vmem:[%s3 + $0xa58] sm:$0xff]
        %v1787 = vld [vmem:[%s3 + $0xa60] sm:$0xff]
        %v1788 = vld [vmem:[%s3 + $0xa68] sm:$0xff]
        %v1789 = vld [vmem:[%s3 + $0xa70] sm:$0xff]
        %v1790 = vld [vmem:[%s3 + $0xa78] sm:$0xff]
        %v1791 = vld [vmem:[%s3 + $0xa80] sm:$0xff]
        %v1792 = vld [vmem:[%s3 + $0xa88] sm:$0xff]
        %v1793 = vld [vmem:[%s3 + $0xa90] sm:$0xff]
        %v1794 = vld [vmem:[%s3 + $0xa98] sm:$0xff]
        %v1795 = vld [vmem:[%s3 + $0xaa0] sm:$0xff]
        %v1796 = vld [vmem:[%s3 + $0xaa8] sm:$0xff]
        %v1797 = vld [vmem:[%s3 + $0xab0] sm:$0xff]
        %v1798 = vld [vmem:[%s3 + $0xab8] sm:$0xff]
        %v1799 = vld [vmem:[%s3 + $0xac0] sm:$0xff]
        %v1800 = vld [vmem:[%s3 + $0xac8] sm:$0xff]
        %v1801 = vld [vmem:[%s3 + $0xad0] sm:$0xff]
        %v1802 = vld [vmem:[%s3 + $0xad8] sm:$0xff]
        %v1803 = vld [vmem:[%s3 + $0xae0] sm:$0xff]
        %v1804 = vld [vmem:[%s3 + $0xae8] sm:$0xff]
        %v1805 = vld [vmem:[%s3 + $0xaf0] sm:$0xff]
        %v1806 = vld [vmem:[%s3 + $0xaf8] sm:$0xff]
        %v1807 = vld [vmem:[%s3 + $0xb00] sm:$0xff]
        %v1808 = vld [vmem:[%s3 + $0xb08] sm:$0xff]
        %v1809 = vld [vmem:[%s3 + $0xb10] sm:$0xff]
        %v1810 = vld [vmem:[%s3 + $0xb18] sm:$0xff]
        %v1811 = vld [vmem:[%s3 + $0xb20] sm:$0xff]
        %v1812 = vld [vmem:[%s3 + $0xb28] sm:$0xff]
        %v1813 = vld [vmem:[%s3 + $0xb30] sm:$0xff]
        %v1814 = vld [vmem:[%s3 + $0xb38] sm:$0xff]
        %v1815 = vld [vmem:[%s3 + $0xb40] sm:$0xff]
        %v1816 = vld [vmem:[%s3 + $0xb48] sm:$0xff]
        %v1817 = vld [vmem:[%s3 + $0xb50] sm:$0xff]
        %v1818 = vld [vmem:[%s3 + $0xb58] sm:$0xff]
        %v1819 = vld [vmem:[%s3 + $0xb60] sm:$0xff]
        %v1820 = vld [vmem:[%s3 + $0xb68] sm:$0xff]
        %v1821 = vld [vmem:[%s3 + $0xb70] sm:$0xff]
        %v1822 = vld [vmem:[%s3 + $0xb78] sm:$0xff]
        %v1823 = vld [vmem:[%s3 + $0xb80] sm:$0xff]
        %v1824 = vld [vmem:[%s3 + $0xb88] sm:$0xff]
        %v1825 = vld [vmem:[%s3 + $0xb90] sm:$0xff]
        %v1826 = vld [vmem:[%s3 + $0xb98] sm:$0xff]
        %v1827 = vld [vmem:[%s3 + $0xba0] sm:$0xff]
        %v1828 = vld [vmem:[%s3 + $0xba8] sm:$0xff]
        %v1829 = vld [vmem:[%s3 + $0xbb0] sm:$0xff]
        %v1830 = vld [vmem:[%s3 + $0xbb8] sm:$0xff]
        %v1831 = vld [vmem:[%s3 + $0xbc0] sm:$0xff]
        %v1832 = vld [vmem:[%s3 + $0xbc8] sm:$0xff]
        %v1833 = vld [vmem:[%s3 + $0xbd0] sm:$0xff]
        %v1834 = vld [vmem:[%s3 + $0xbd8] sm:$0xff]
        %v1835 = vld [vmem:[%s3 + $0xbe0] sm:$0xff]
        %v1836 = vld [vmem:[%s3 + $0xbe8] sm:$0xff]
        %v1837 = vld [vmem:[%s3 + $0xbf0] sm:$0xff]
        %v1838 = vld [vmem:[%s3 + $0xbf8] sm:$0xff]
        %v1839 = vld [vmem:[%s3 + $0xc00] sm:$0xff]
        %v1840 = vld [vmem:[%s3 + $0xc08] sm:$0xff]
        %v1841 = vld [vmem:[%s3 + $0xc10] sm:$0xff]
        %v1842 = vld [vmem:[%s3 + $0xc18] sm:$0xff]
        %v1843 = vld [vmem:[%s3 + $0xc20] sm:$0xff]
        %v1844 = vld [vmem:[%s3 + $0xc28] sm:$0xff]
        %v1845 = vld [vmem:[%s3 + $0xc30] sm:$0xff]
        %v1846 = vld [vmem:[%s3 + $0xc38] sm:$0xff]
        %v1847 = vld [vmem:[%s3 + $0xc40] sm:$0xff]
        %v1848 = vld [vmem:[%s3 + $0xc48] sm:$0xff]
        %v1849 = vld [vmem:[%s3 + $0xc50] sm:$0xff]
        %v1850 = vld [vmem:[%s3 + $0xc58] sm:$0xff]
        %v1851 = vld [vmem:[%s3 + $0xc60] sm:$0xff]
        %v1852 = vld [vmem:[%s3 + $0xc68] sm:$0xff]
        %v1853 = vld [vmem:[%s3 + $0xc70] sm:$0xff]
        %v1854 = vld [vmem:[%s3 + $0xc78] sm:$0xff]
        %v1855 = vld [vmem:[%s3 + $0xc80] sm:$0xff]
        %v1856 = vld [vmem:[%s3 + $0xc88] sm:$0xff]
        %v1857 = vld [vmem:[%s3 + $0xc90] sm:$0xff]
        %v1858 = vld [vmem:[%s3 + $0xc98] sm:$0xff]
        %v1859 = vld [vmem:[%s3 + $0xca0] sm:$0xff]
        %v1860 = vld [vmem:[%s3 + $0xca8] sm:$0xff]
        %v1861 = vld [vmem:[%s3 + $0xcb0] sm:$0xff]
        %v1862 = vld [vmem:[%s3 + $0xcb8] sm:$0xff]
        %v1863 = vld [vmem:[%s3 + $0xcc0] sm:$0xff]
        %v1864 = vld [vmem:[%s3 + $0xcc8] sm:$0xff]
        %v1865 = vld [vmem:[%s3 + $0xcd0] sm:$0xff]
        %v1866 = vld [vmem:[%s3 + $0xcd8] sm:$0xff]
        %v1867 = vld [vmem:[%s3 + $0xce0] sm:$0xff]
        %v1868 = vld [vmem:[%s3 + $0xce8] sm:$0xff]
        %v1869 = vld [vmem:[%s3 + $0xcf0] sm:$0xff]
        %v1870 = vld [vmem:[%s3 + $0xcf8] sm:$0xff]
        %v1871 = vld [vmem:[%s3 + $0xd00] sm:$0xff]
        %v1872 = vld [vmem:[%s3 + $0xd08] sm:$0xff]
        %v1873 = vld [vmem:[%s3 + $0xd10] sm:$0xff]
        %v1874 = vld [vmem:[%s3 + $0xd18] sm:$0xff]
        %v1875 = vld [vmem:[%s3 + $0xd20] sm:$0xff]
        %v1876 = vld [vmem:[%s3 + $0xd28] sm:$0xff]
        %v1877 = vld [vmem:[%s3 + $0xd30] sm:$0xff]
        %v1878 = vld [vmem:[%s3 + $0xd38] sm:$0xff]
        %v1879 = vld [vmem:[%s3 + $0xd40] sm:$0xff]
        %v1880 = vld [vmem:[%s3 + $0xd48] sm:$0xff]
        %v1881 = vld [vmem:[%s3 + $0xd50] sm:$0xff]
        %v1882 = vld [vmem:[%s3 + $0xd58] sm:$0xff]
        %v1883 = vld [vmem:[%s3 + $0xd60] sm:$0xff]
        %v1884 = vld [vmem:[%s3 + $0xd68] sm:$0xff]
        %v1885 = vld [vmem:[%s3 + $0xd70] sm:$0xff]
        %v1886 = vld [vmem:[%s3 + $0xd78] sm:$0xff]
        %v1887 = vld [vmem:[%s3 + $0xd80] sm:$0xf]
        %v1888 = vld [vmem:[%s3 + $0xd88] sm:$0xf]
        %v1889 = vld [vmem:[%s3 + $0xd90] sm:$0xf]
        %vm1890 = vcmask 31744
        %v1892 = vsel %vm1890, %v1454, 0
        %vm1894 = vcmask 1043456
        %v1896 = vsel %vm1894, %v1887, 0
        %v1899 = vsel %vm1894, %v1888, 0
        %v1902 = vsel %vm1894, %v1889, 0
        %1904 = vmatpush.msra.mxu0 %v1500
        %1905 = vmatpush.msra.mxu0 %v1497
        %1906 = vmatpush.msra.mxu0 %v1494
        %1907 = vmatpush.msra.mxu0 %v1491
        %1908 = vmatpush.msra.mxu0 %v1488
        %1909 = vmatpush.msra.mxu0 %v1485
        %1910 = vmatpush.msra.mxu0 %v1482
        %1911 = vmatpush.msra.mxu0 %v1479
        %1912 = vmatpush.msra.mxu0 %v1476
        %1913 = vmatpush.msra.mxu0 %v1473
        %1914 = vmatpush.msra.mxu0 %v1470
        %1915 = vmatpush.msra.mxu0 %v1467
        %1916 = vmatpush.msra.mxu0 %v1464
        %1917 = vmatpush.msra.mxu0 %v1461
        %1918 = vmatpush.msra.mxu0 %v1458
        %1919 = vmatpush.msra.mxu0 %v1455
        %1920 = vmatmul.f32.gmra.mxu0 %v1445
        %v1921 = vpop.f32.mrf.mxu0
        %v1922 = vadd.f32 0.0, %v1921
        %1923 = vdwg.mxu0
        %1924 = vmatpush.msra.mxu0 %v1548
        %1925 = vmatpush.msra.mxu0 %v1545
        %1926 = vmatpush.msra.mxu0 %v1542
        %1927 = vmatpush.msra.mxu0 %v1539
        %1928 = vmatpush.msra.mxu0 %v1536
        %1929 = vmatpush.msra.mxu0 %v1533
        %1930 = vmatpush.msra.mxu0 %v1530
        %1931 = vmatpush.msra.mxu0 %v1527
        %1932 = vmatpush.msra.mxu0 %v1524
        %1933 = vmatpush.msra.mxu0 %v1521
        %1934 = vmatpush.msra.mxu0 %v1518
        %1935 = vmatpush.msra.mxu0 %v1515
        %1936 = vmatpush.msra.mxu0 %v1512
        %1937 = vmatpush.msra.mxu0 %v1509
        %1938 = vmatpush.msra.mxu0 %v1506
        %1939 = vmatpush.msra.mxu0 %v1503
        %1940 = vmatmul.f32.gmra.mxu0 %v1446
        %v1941 = vpop.f32.mrf.mxu0
        %v1942 = vadd.f32 %v1922, %v1941
        %1943 = vdwg.mxu0
        %1944 = vmatpush.msra.mxu0 %v1596
        %1945 = vmatpush.msra.mxu0 %v1593
        %1946 = vmatpush.msra.mxu0 %v1590
        %1947 = vmatpush.msra.mxu0 %v1587
        %1948 = vmatpush.msra.mxu0 %v1584
        %1949 = vmatpush.msra.mxu0 %v1581
        %1950 = vmatpush.msra.mxu0 %v1578
        %1951 = vmatpush.msra.mxu0 %v1575
        %1952 = vmatpush.msra.mxu0 %v1572
        %1953 = vmatpush.msra.mxu0 %v1569
        %1954 = vmatpush.msra.mxu0 %v1566
        %1955 = vmatpush.msra.mxu0 %v1563
        %1956 = vmatpush.msra.mxu0 %v1560
        %1957 = vmatpush.msra.mxu0 %v1557
        %1958 = vmatpush.msra.mxu0 %v1554
        %1959 = vmatpush.msra.mxu0 %v1551
        %1960 = vmatmul.f32.gmra.mxu0 %v1447
        %v1961 = vpop.f32.mrf.mxu0
        %v1962 = vadd.f32 %v1942, %v1961
        %1963 = vdwg.mxu0
        %1964 = vmatpush.msra.mxu0 %v1644
        %1965 = vmatpush.msra.mxu0 %v1641
        %1966 = vmatpush.msra.mxu0 %v1638
        %1967 = vmatpush.msra.mxu0 %v1635
        %1968 = vmatpush.msra.mxu0 %v1632
        %1969 = vmatpush.msra.mxu0 %v1629
        %1970 = vmatpush.msra.mxu0 %v1626
        %1971 = vmatpush.msra.mxu0 %v1623
        %1972 = vmatpush.msra.mxu0 %v1620
        %1973 = vmatpush.msra.mxu0 %v1617
        %1974 = vmatpush.msra.mxu0 %v1614
        %1975 = vmatpush.msra.mxu0 %v1611
        %1976 = vmatpush.msra.mxu0 %v1608
        %1977 = vmatpush.msra.mxu0 %v1605
        %1978 = vmatpush.msra.mxu0 %v1602
        %1979 = vmatpush.msra.mxu0 %v1599
        %1980 = vmatmul.f32.gmra.mxu0 %v1448
        %v1981 = vpop.f32.mrf.mxu0
        %v1982 = vadd.f32 %v1962, %v1981
        %1983 = vdwg.mxu0
        %1984 = vmatpush.msra.mxu0 %v1692
        %1985 = vmatpush.msra.mxu0 %v1689
        %1986 = vmatpush.msra.mxu0 %v1686
        %1987 = vmatpush.msra.mxu0 %v1683
        %1988 = vmatpush.msra.mxu0 %v1680
        %1989 = vmatpush.msra.mxu0 %v1677
        %1990 = vmatpush.msra.mxu0 %v1674
        %1991 = vmatpush.msra.mxu0 %v1671
        %1992 = vmatpush.msra.mxu0 %v1668
        %1993 = vmatpush.msra.mxu0 %v1665
        %1994 = vmatpush.msra.mxu0 %v1662
        %1995 = vmatpush.msra.mxu0 %v1659
        %1996 = vmatpush.msra.mxu0 %v1656
        %1997 = vmatpush.msra.mxu0 %v1653
        %1998 = vmatpush.msra.mxu0 %v1650
        %1999 = vmatpush.msra.mxu0 %v1647
        %2000 = vmatmul.f32.gmra.mxu0 %v1449
        %v2001 = vpop.f32.mrf.mxu0
        %v2002 = vadd.f32 %v1982, %v2001
        %2003 = vdwg.mxu0
        %2004 = vmatpush.msra.mxu0 %v1740
        %2005 = vmatpush.msra.mxu0 %v1737
        %2006 = vmatpush.msra.mxu0 %v1734
        %2007 = vmatpush.msra.mxu0 %v1731
        %2008 = vmatpush.msra.mxu0 %v1728
        %2009 = vmatpush.msra.mxu0 %v1725
        %2010 = vmatpush.msra.mxu0 %v1722
        %2011 = vmatpush.msra.mxu0 %v1719
        %2012 = vmatpush.msra.mxu0 %v1716
        %2013 = vmatpush.msra.mxu0 %v1713
        %2014 = vmatpush.msra.mxu0 %v1710
        %2015 = vmatpush.msra.mxu0 %v1707
        %2016 = vmatpush.msra.mxu0 %v1704
        %2017 = vmatpush.msra.mxu0 %v1701
        %2018 = vmatpush.msra.mxu0 %v1698
        %2019 = vmatpush.msra.mxu0 %v1695
        %2020 = vmatmul.f32.gmra.mxu0 %v1450
        %v2021 = vpop.f32.mrf.mxu0
        %v2022 = vadd.f32 %v2002, %v2021
        %2023 = vdwg.mxu0
        %2024 = vmatpush.msra.mxu0 %v1788
        %2025 = vmatpush.msra.mxu0 %v1785
        %2026 = vmatpush.msra.mxu0 %v1782
        %2027 = vmatpush.msra.mxu0 %v1779
        %2028 = vmatpush.msra.mxu0 %v1776
        %2029 = vmatpush.msra.mxu0 %v1773
        %2030 = vmatpush.msra.mxu0 %v1770
        %2031 = vmatpush.msra.mxu0 %v1767
        %2032 = vmatpush.msra.mxu0 %v1764
        %2033 = vmatpush.msra.mxu0 %v1761
        %2034 = vmatpush.msra.mxu0 %v1758
        %2035 = vmatpush.msra.mxu0 %v1755
        %2036 = vmatpush.msra.mxu0 %v1752
        %2037 = vmatpush.msra.mxu0 %v1749
        %2038 = vmatpush.msra.mxu0 %v1746
        %2039 = vmatpush.msra.mxu0 %v1743
        %2040 = vmatmul.f32.gmra.mxu0 %v1451
        %v2041 = vpop.f32.mrf.mxu0
        %v2042 = vadd.f32 %v2022, %v2041
        %2043 = vdwg.mxu0
        %2044 = vmatpush.msra.mxu0 %v1836
        %2045 = vmatpush.msra.mxu0 %v1833
        %2046 = vmatpush.msra.mxu0 %v1830
        %2047 = vmatpush.msra.mxu0 %v1827
        %2048 = vmatpush.msra.mxu0 %v1824
        %2049 = vmatpush.msra.mxu0 %v1821
        %2050 = vmatpush.msra.mxu0 %v1818
        %2051 = vmatpush.msra.mxu0 %v1815
        %2052 = vmatpush.msra.mxu0 %v1812
        %2053 = vmatpush.msra.mxu0 %v1809
        %2054 = vmatpush.msra.mxu0 %v1806
        %2055 = vmatpush.msra.mxu0 %v1803
        %2056 = vmatpush.msra.mxu0 %v1800
        %2057 = vmatpush.msra.mxu0 %v1797
        %2058 = vmatpush.msra.mxu0 %v1794
        %2059 = vmatpush.msra.mxu0 %v1791
        %2060 = vmatmul.f32.gmra.mxu0 %v1452
        %v2061 = vpop.f32.mrf.mxu0
        %v2062 = vadd.f32 %v2042, %v2061
        %2063 = vdwg.mxu0
        %2064 = vmatpush.msra.mxu0 %v1884
        %2065 = vmatpush.msra.mxu0 %v1881
        %2066 = vmatpush.msra.mxu0 %v1878
        %2067 = vmatpush.msra.mxu0 %v1875
        %2068 = vmatpush.msra.mxu0 %v1872
        %2069 = vmatpush.msra.mxu0 %v1869
        %2070 = vmatpush.msra.mxu0 %v1866
        %2071 = vmatpush.msra.mxu0 %v1863
        %2072 = vmatpush.msra.mxu0 %v1860
        %2073 = vmatpush.msra.mxu0 %v1857
        %2074 = vmatpush.msra.mxu0 %v1854
        %2075 = vmatpush.msra.mxu0 %v1851
        %2076 = vmatpush.msra.mxu0 %v1848
        %2077 = vmatpush.msra.mxu0 %v1845
        %2078 = vmatpush.msra.mxu0 %v1842
        %2079 = vmatpush.msra.mxu0 %v1839
        %2080 = vmatmul.f32.gmra.mxu0 %v1453
        %v2081 = vpop.f32.mrf.mxu0
        %v2082 = vadd.f32 %v2062, %v2081
        %2083 = vdwg.mxu0
        %2084 = vmatpush.msra.mxu0 0.0
        %2085 = vmatpush.msra.mxu0 0.0
        %2086 = vmatpush.msra.mxu0 0.0
        %2087 = vmatpush.msra.mxu0 0.0
        %2088 = vmatpush.msra.mxu0 0.0
        %2089 = vmatpush.msra.mxu0 0.0
        %2090 = vmatpush.msra.mxu0 0.0
        %2091 = vmatpush.msra.mxu0 0.0
        %2092 = vmatpush.msra.mxu0 0.0
        %2093 = vmatpush.msra.mxu0 0.0
        %2094 = vmatpush.msra.mxu0 0.0
        %2095 = vmatpush.msra.mxu0 0.0
        %2096 = vmatpush.msra.mxu0 0.0
        %2097 = vmatpush.msra.mxu0 0.0
        %2098 = vmatpush.msra.mxu0 0.0
        %2099 = vmatpush.msra.mxu0 %v1896
        %2100 = vmatmul.f32.gmra.mxu0 %v1892
        %v2101 = vpop.f32.mrf.mxu0
        %v2102 = vadd.f32 %v2082, %v2101
        %2103 = vdwg.mxu0
        %2104 = vmatpush.msra.mxu0 %v1501
        %2105 = vmatpush.msra.mxu0 %v1498
        %2106 = vmatpush.msra.mxu0 %v1495
        %2107 = vmatpush.msra.mxu0 %v1492
        %2108 = vmatpush.msra.mxu0 %v1489
        %2109 = vmatpush.msra.mxu0 %v1486
        %2110 = vmatpush.msra.mxu0 %v1483
        %2111 = vmatpush.msra.mxu0 %v1480
        %2112 = vmatpush.msra.mxu0 %v1477
        %2113 = vmatpush.msra.mxu0 %v1474
        %2114 = vmatpush.msra.mxu0 %v1471
        %2115 = vmatpush.msra.mxu0 %v1468
        %2116 = vmatpush.msra.mxu0 %v1465
        %2117 = vmatpush.msra.mxu0 %v1462
        %2118 = vmatpush.msra.mxu0 %v1459
        %2119 = vmatpush.msra.mxu0 %v1456
        %2120 = vmatmul.f32.gmra.mxu0 %v1445
        %v2121 = vpop.f32.mrf.mxu0
        %v2122 = vadd.f32 0.0, %v2121
        %2123 = vdwg.mxu0
        %2124 = vmatpush.msra.mxu0 %v1549
        %2125 = vmatpush.msra.mxu0 %v1546
        %2126 = vmatpush.msra.mxu0 %v1543
        %2127 = vmatpush.msra.mxu0 %v1540
        %2128 = vmatpush.msra.mxu0 %v1537
        %2129 = vmatpush.msra.mxu0 %v1534
        %2130 = vmatpush.msra.mxu0 %v1531
        %2131 = vmatpush.msra.mxu0 %v1528
        %2132 = vmatpush.msra.mxu0 %v1525
        %2133 = vmatpush.msra.mxu0 %v1522
        %2134 = vmatpush.msra.mxu0 %v1519
        %2135 = vmatpush.msra.mxu0 %v1516
        %2136 = vmatpush.msra.mxu0 %v1513
        %2137 = vmatpush.msra.mxu0 %v1510
        %2138 = vmatpush.msra.mxu0 %v1507
        %2139 = vmatpush.msra.mxu0 %v1504
        %2140 = vmatmul.f32.gmra.mxu0 %v1446
        %v2141 = vpop.f32.mrf.mxu0
        %v2142 = vadd.f32 %v2122, %v2141
        %2143 = vdwg.mxu0
        %2144 = vmatpush.msra.mxu0 %v1597
        %2145 = vmatpush.msra.mxu0 %v1594
        %2146 = vmatpush.msra.mxu0 %v1591
        %2147 = vmatpush.msra.mxu0 %v1588
        %2148 = vmatpush.msra.mxu0 %v1585
        %2149 = vmatpush.msra.mxu0 %v1582
        %2150 = vmatpush.msra.mxu0 %v1579
        %2151 = vmatpush.msra.mxu0 %v1576
        %2152 = vmatpush.msra.mxu0 %v1573
        %2153 = vmatpush.msra.mxu0 %v1570
        %2154 = vmatpush.msra.mxu0 %v1567
        %2155 = vmatpush.msra.mxu0 %v1564
        %2156 = vmatpush.msra.mxu0 %v1561
        %2157 = vmatpush.msra.mxu0 %v1558
        %2158 = vmatpush.msra.mxu0 %v1555
        %2159 = vmatpush.msra.mxu0 %v1552
        %2160 = vmatmul.f32.gmra.mxu0 %v1447
        %v2161 = vpop.f32.mrf.mxu0
        %v2162 = vadd.f32 %v2142, %v2161
        %2163 = vdwg.mxu0
        %2164 = vmatpush.msra.mxu0 %v1645
        %2165 = vmatpush.msra.mxu0 %v1642
        %2166 = vmatpush.msra.mxu0 %v1639
        %2167 = vmatpush.msra.mxu0 %v1636
        %2168 = vmatpush.msra.mxu0 %v1633
        %2169 = vmatpush.msra.mxu0 %v1630
        %2170 = vmatpush.msra.mxu0 %v1627
        %2171 = vmatpush.msra.mxu0 %v1624
        %2172 = vmatpush.msra.mxu0 %v1621
        %2173 = vmatpush.msra.mxu0 %v1618
        %2174 = vmatpush.msra.mxu0 %v1615
        %2175 = vmatpush.msra.mxu0 %v1612
        %2176 = vmatpush.msra.mxu0 %v1609
        %2177 = vmatpush.msra.mxu0 %v1606
        %2178 = vmatpush.msra.mxu0 %v1603
        %2179 = vmatpush.msra.mxu0 %v1600
        %2180 = vmatmul.f32.gmra.mxu0 %v1448
        %v2181 = vpop.f32.mrf.mxu0
        %v2182 = vadd.f32 %v2162, %v2181
        %2183 = vdwg.mxu0
        %2184 = vmatpush.msra.mxu0 %v1693
        %2185 = vmatpush.msra.mxu0 %v1690
        %2186 = vmatpush.msra.mxu0 %v1687
        %2187 = vmatpush.msra.mxu0 %v1684
        %2188 = vmatpush.msra.mxu0 %v1681
        %2189 = vmatpush.msra.mxu0 %v1678
        %2190 = vmatpush.msra.mxu0 %v1675
        %2191 = vmatpush.msra.mxu0 %v1672
        %2192 = vmatpush.msra.mxu0 %v1669
        %2193 = vmatpush.msra.mxu0 %v1666
        %2194 = vmatpush.msra.mxu0 %v1663
        %2195 = vmatpush.msra.mxu0 %v1660
        %2196 = vmatpush.msra.mxu0 %v1657
        %2197 = vmatpush.msra.mxu0 %v1654
        %2198 = vmatpush.msra.mxu0 %v1651
        %2199 = vmatpush.msra.mxu0 %v1648
        %2200 = vmatmul.f32.gmra.mxu0 %v1449
        %v2201 = vpop.f32.mrf.mxu0
        %v2202 = vadd.f32 %v2182, %v2201
        %2203 = vdwg.mxu0
        %2204 = vmatpush.msra.mxu0 %v1741
        %2205 = vmatpush.msra.mxu0 %v1738
        %2206 = vmatpush.msra.mxu0 %v1735
        %2207 = vmatpush.msra.mxu0 %v1732
        %2208 = vmatpush.msra.mxu0 %v1729
        %2209 = vmatpush.msra.mxu0 %v1726
        %2210 = vmatpush.msra.mxu0 %v1723
        %2211 = vmatpush.msra.mxu0 %v1720
        %2212 = vmatpush.msra.mxu0 %v1717
        %2213 = vmatpush.msra.mxu0 %v1714
        %2214 = vmatpush.msra.mxu0 %v1711
        %2215 = vmatpush.msra.mxu0 %v1708
        %2216 = vmatpush.msra.mxu0 %v1705
        %2217 = vmatpush.msra.mxu0 %v1702
        %2218 = vmatpush.msra.mxu0 %v1699
        %2219 = vmatpush.msra.mxu0 %v1696
        %2220 = vmatmul.f32.gmra.mxu0 %v1450
        %v2221 = vpop.f32.mrf.mxu0
        %v2222 = vadd.f32 %v2202, %v2221
        %2223 = vdwg.mxu0
        %2224 = vmatpush.msra.mxu0 %v1789
        %2225 = vmatpush.msra.mxu0 %v1786
        %2226 = vmatpush.msra.mxu0 %v1783
        %2227 = vmatpush.msra.mxu0 %v1780
        %2228 = vmatpush.msra.mxu0 %v1777
        %2229 = vmatpush.msra.mxu0 %v1774
        %2230 = vmatpush.msra.mxu0 %v1771
        %2231 = vmatpush.msra.mxu0 %v1768
        %2232 = vmatpush.msra.mxu0 %v1765
        %2233 = vmatpush.msra.mxu0 %v1762
        %2234 = vmatpush.msra.mxu0 %v1759
        %2235 = vmatpush.msra.mxu0 %v1756
        %2236 = vmatpush.msra.mxu0 %v1753
        %2237 = vmatpush.msra.mxu0 %v1750
        %2238 = vmatpush.msra.mxu0 %v1747
        %2239 = vmatpush.msra.mxu0 %v1744
        %2240 = vmatmul.f32.gmra.mxu0 %v1451
        %v2241 = vpop.f32.mrf.mxu0
        %v2242 = vadd.f32 %v2222, %v2241
        %2243 = vdwg.mxu0
        %2244 = vmatpush.msra.mxu0 %v1837
        %2245 = vmatpush.msra.mxu0 %v1834
        %2246 = vmatpush.msra.mxu0 %v1831
        %2247 = vmatpush.msra.mxu0 %v1828
        %2248 = vmatpush.msra.mxu0 %v1825
        %2249 = vmatpush.msra.mxu0 %v1822
        %2250 = vmatpush.msra.mxu0 %v1819
        %2251 = vmatpush.msra.mxu0 %v1816
        %2252 = vmatpush.msra.mxu0 %v1813
        %2253 = vmatpush.msra.mxu0 %v1810
        %2254 = vmatpush.msra.mxu0 %v1807
        %2255 = vmatpush.msra.mxu0 %v1804
        %2256 = vmatpush.msra.mxu0 %v1801
        %2257 = vmatpush.msra.mxu0 %v1798
        %2258 = vmatpush.msra.mxu0 %v1795
        %2259 = vmatpush.msra.mxu0 %v1792
        %2260 = vmatmul.f32.gmra.mxu0 %v1452
        %v2261 = vpop.f32.mrf.mxu0
        %v2262 = vadd.f32 %v2242, %v2261
        %2263 = vdwg.mxu0
        %2264 = vmatpush.msra.mxu0 %v1885
        %2265 = vmatpush.msra.mxu0 %v1882
        %2266 = vmatpush.msra.mxu0 %v1879
        %2267 = vmatpush.msra.mxu0 %v1876
        %2268 = vmatpush.msra.mxu0 %v1873
        %2269 = vmatpush.msra.mxu0 %v1870
        %2270 = vmatpush.msra.mxu0 %v1867
        %2271 = vmatpush.msra.mxu0 %v1864
        %2272 = vmatpush.msra.mxu0 %v1861
        %2273 = vmatpush.msra.mxu0 %v1858
        %2274 = vmatpush.msra.mxu0 %v1855
        %2275 = vmatpush.msra.mxu0 %v1852
        %2276 = vmatpush.msra.mxu0 %v1849
        %2277 = vmatpush.msra.mxu0 %v1846
        %2278 = vmatpush.msra.mxu0 %v1843
        %2279 = vmatpush.msra.mxu0 %v1840
        %2280 = vmatmul.f32.gmra.mxu0 %v1453
        %v2281 = vpop.f32.mrf.mxu0
        %v2282 = vadd.f32 %v2262, %v2281
        %2283 = vdwg.mxu0
        %2284 = vmatpush.msra.mxu0 0.0
        %2285 = vmatpush.msra.mxu0 0.0
        %2286 = vmatpush.msra.mxu0 0.0
        %2287 = vmatpush.msra.mxu0 0.0
        %2288 = vmatpush.msra.mxu0 0.0
        %2289 = vmatpush.msra.mxu0 0.0
        %2290 = vmatpush.msra.mxu0 0.0
        %2291 = vmatpush.msra.mxu0 0.0
        %2292 = vmatpush.msra.mxu0 0.0
        %2293 = vmatpush.msra.mxu0 0.0
        %2294 = vmatpush.msra.mxu0 0.0
        %2295 = vmatpush.msra.mxu0 0.0
        %2296 = vmatpush.msra.mxu0 0.0
        %2297 = vmatpush.msra.mxu0 0.0
        %2298 = vmatpush.msra.mxu0 0.0
        %2299 = vmatpush.msra.mxu0 %v1899
        %2300 = vmatmul.f32.gmra.mxu0 %v1892
        %v2301 = vpop.f32.mrf.mxu0
        %v2302 = vadd.f32 %v2282, %v2301
        %2303 = vdwg.mxu0
        %2304 = vmatpush.msra.mxu0 %v1502
        %2305 = vmatpush.msra.mxu0 %v1499
        %2306 = vmatpush.msra.mxu0 %v1496
        %2307 = vmatpush.msra.mxu0 %v1493
        %2308 = vmatpush.msra.mxu0 %v1490
        %2309 = vmatpush.msra.mxu0 %v1487
        %2310 = vmatpush.msra.mxu0 %v1484
        %2311 = vmatpush.msra.mxu0 %v1481
        %2312 = vmatpush.msra.mxu0 %v1478
        %2313 = vmatpush.msra.mxu0 %v1475
        %2314 = vmatpush.msra.mxu0 %v1472
        %2315 = vmatpush.msra.mxu0 %v1469
        %2316 = vmatpush.msra.mxu0 %v1466
        %2317 = vmatpush.msra.mxu0 %v1463
        %2318 = vmatpush.msra.mxu0 %v1460
        %2319 = vmatpush.msra.mxu0 %v1457
        %2320 = vmatmul.f32.gmra.mxu0 %v1445
        %v2321 = vpop.f32.mrf.mxu0
        %v2322 = vadd.f32 0.0, %v2321
        %2323 = vdwg.mxu0
        %2324 = vmatpush.msra.mxu0 %v1550
        %2325 = vmatpush.msra.mxu0 %v1547
        %2326 = vmatpush.msra.mxu0 %v1544
        %2327 = vmatpush.msra.mxu0 %v1541
        %2328 = vmatpush.msra.mxu0 %v1538
        %2329 = vmatpush.msra.mxu0 %v1535
        %2330 = vmatpush.msra.mxu0 %v1532
        %2331 = vmatpush.msra.mxu0 %v1529
        %2332 = vmatpush.msra.mxu0 %v1526
        %2333 = vmatpush.msra.mxu0 %v1523
        %2334 = vmatpush.msra.mxu0 %v1520
        %2335 = vmatpush.msra.mxu0 %v1517
        %2336 = vmatpush.msra.mxu0 %v1514
        %2337 = vmatpush.msra.mxu0 %v1511
        %2338 = vmatpush.msra.mxu0 %v1508
        %2339 = vmatpush.msra.mxu0 %v1505
        %2340 = vmatmul.f32.gmra.mxu0 %v1446
        %v2341 = vpop.f32.mrf.mxu0
        %v2342 = vadd.f32 %v2322, %v2341
        %2343 = vdwg.mxu0
        %2344 = vmatpush.msra.mxu0 %v1598
        %2345 = vmatpush.msra.mxu0 %v1595
        %2346 = vmatpush.msra.mxu0 %v1592
        %2347 = vmatpush.msra.mxu0 %v1589
        %2348 = vmatpush.msra.mxu0 %v1586
        %2349 = vmatpush.msra.mxu0 %v1583
        %2350 = vmatpush.msra.mxu0 %v1580
        %2351 = vmatpush.msra.mxu0 %v1577
        %2352 = vmatpush.msra.mxu0 %v1574
        %2353 = vmatpush.msra.mxu0 %v1571
        %2354 = vmatpush.msra.mxu0 %v1568
        %2355 = vmatpush.msra.mxu0 %v1565
        %2356 = vmatpush.msra.mxu0 %v1562
        %2357 = vmatpush.msra.mxu0 %v1559
        %2358 = vmatpush.msra.mxu0 %v1556
        %2359 = vmatpush.msra.mxu0 %v1553
        %2360 = vmatmul.f32.gmra.mxu0 %v1447
        %v2361 = vpop.f32.mrf.mxu0
        %v2362 = vadd.f32 %v2342, %v2361
        %2363 = vdwg.mxu0
        %2364 = vmatpush.msra.mxu0 %v1646
        %2365 = vmatpush.msra.mxu0 %v1643
        %2366 = vmatpush.msra.mxu0 %v1640
        %2367 = vmatpush.msra.mxu0 %v1637
        %2368 = vmatpush.msra.mxu0 %v1634
        %2369 = vmatpush.msra.mxu0 %v1631
        %2370 = vmatpush.msra.mxu0 %v1628
        %2371 = vmatpush.msra.mxu0 %v1625
        %2372 = vmatpush.msra.mxu0 %v1622
        %2373 = vmatpush.msra.mxu0 %v1619
        %2374 = vmatpush.msra.mxu0 %v1616
        %2375 = vmatpush.msra.mxu0 %v1613
        %2376 = vmatpush.msra.mxu0 %v1610
        %2377 = vmatpush.msra.mxu0 %v1607
        %2378 = vmatpush.msra.mxu0 %v1604
        %2379 = vmatpush.msra.mxu0 %v1601
        %2380 = vmatmul.f32.gmra.mxu0 %v1448
        %v2381 = vpop.f32.mrf.mxu0
        %v2382 = vadd.f32 %v2362, %v2381
        %2383 = vdwg.mxu0
        %2384 = vmatpush.msra.mxu0 %v1694
        %2385 = vmatpush.msra.mxu0 %v1691
        %2386 = vmatpush.msra.mxu0 %v1688
        %2387 = vmatpush.msra.mxu0 %v1685
        %2388 = vmatpush.msra.mxu0 %v1682
        %2389 = vmatpush.msra.mxu0 %v1679
        %2390 = vmatpush.msra.mxu0 %v1676
        %2391 = vmatpush.msra.mxu0 %v1673
        %2392 = vmatpush.msra.mxu0 %v1670
        %2393 = vmatpush.msra.mxu0 %v1667
        %2394 = vmatpush.msra.mxu0 %v1664
        %2395 = vmatpush.msra.mxu0 %v1661
        %2396 = vmatpush.msra.mxu0 %v1658
        %2397 = vmatpush.msra.mxu0 %v1655
        %2398 = vmatpush.msra.mxu0 %v1652
        %2399 = vmatpush.msra.mxu0 %v1649
        %2400 = vmatmul.f32.gmra.mxu0 %v1449
        %v2401 = vpop.f32.mrf.mxu0
        %v2402 = vadd.f32 %v2382, %v2401
        %2403 = vdwg.mxu0
        %2404 = vmatpush.msra.mxu0 %v1742
        %2405 = vmatpush.msra.mxu0 %v1739
        %2406 = vmatpush.msra.mxu0 %v1736
        %2407 = vmatpush.msra.mxu0 %v1733
        %2408 = vmatpush.msra.mxu0 %v1730
        %2409 = vmatpush.msra.mxu0 %v1727
        %2410 = vmatpush.msra.mxu0 %v1724
        %2411 = vmatpush.msra.mxu0 %v1721
        %2412 = vmatpush.msra.mxu0 %v1718
        %2413 = vmatpush.msra.mxu0 %v1715
        %2414 = vmatpush.msra.mxu0 %v1712
        %2415 = vmatpush.msra.mxu0 %v1709
        %2416 = vmatpush.msra.mxu0 %v1706
        %2417 = vmatpush.msra.mxu0 %v1703
        %2418 = vmatpush.msra.mxu0 %v1700
        %2419 = vmatpush.msra.mxu0 %v1697
        %2420 = vmatmul.f32.gmra.mxu0 %v1450
        %v2421 = vpop.f32.mrf.mxu0
        %v2422 = vadd.f32 %v2402, %v2421
        %2423 = vdwg.mxu0
        %2424 = vmatpush.msra.mxu0 %v1790
        %2425 = vmatpush.msra.mxu0 %v1787
        %2426 = vmatpush.msra.mxu0 %v1784
        %2427 = vmatpush.msra.mxu0 %v1781
        %2428 = vmatpush.msra.mxu0 %v1778
        %2429 = vmatpush.msra.mxu0 %v1775
        %2430 = vmatpush.msra.mxu0 %v1772
        %2431 = vmatpush.msra.mxu0 %v1769
        %2432 = vmatpush.msra.mxu0 %v1766
        %2433 = vmatpush.msra.mxu0 %v1763
        %2434 = vmatpush.msra.mxu0 %v1760
        %2435 = vmatpush.msra.mxu0 %v1757
        %2436 = vmatpush.msra.mxu0 %v1754
        %2437 = vmatpush.msra.mxu0 %v1751
        %2438 = vmatpush.msra.mxu0 %v1748
        %2439 = vmatpush.msra.mxu0 %v1745
        %2440 = vmatmul.f32.gmra.mxu0 %v1451
        %v2441 = vpop.f32.mrf.mxu0
        %v2442 = vadd.f32 %v2422, %v2441
        %2443 = vdwg.mxu0
        %2444 = vmatpush.msra.mxu0 %v1838
        %2445 = vmatpush.msra.mxu0 %v1835
        %2446 = vmatpush.msra.mxu0 %v1832
        %2447 = vmatpush.msra.mxu0 %v1829
        %2448 = vmatpush.msra.mxu0 %v1826
        %2449 = vmatpush.msra.mxu0 %v1823
        %2450 = vmatpush.msra.mxu0 %v1820
        %2451 = vmatpush.msra.mxu0 %v1817
        %2452 = vmatpush.msra.mxu0 %v1814
        %2453 = vmatpush.msra.mxu0 %v1811
        %2454 = vmatpush.msra.mxu0 %v1808
        %2455 = vmatpush.msra.mxu0 %v1805
        %2456 = vmatpush.msra.mxu0 %v1802
        %2457 = vmatpush.msra.mxu0 %v1799
        %2458 = vmatpush.msra.mxu0 %v1796
        %2459 = vmatpush.msra.mxu0 %v1793
        %2460 = vmatmul.f32.gmra.mxu0 %v1452
        %v2461 = vpop.f32.mrf.mxu0
        %v2462 = vadd.f32 %v2442, %v2461
        %2463 = vdwg.mxu0
        %2464 = vmatpush.msra.mxu0 %v1886
        %2465 = vmatpush.msra.mxu0 %v1883
        %2466 = vmatpush.msra.mxu0 %v1880
        %2467 = vmatpush.msra.mxu0 %v1877
        %2468 = vmatpush.msra.mxu0 %v1874
        %2469 = vmatpush.msra.mxu0 %v1871
        %2470 = vmatpush.msra.mxu0 %v1868
        %2471 = vmatpush.msra.mxu0 %v1865
        %2472 = vmatpush.msra.mxu0 %v1862
        %2473 = vmatpush.msra.mxu0 %v1859
        %2474 = vmatpush.msra.mxu0 %v1856
        %2475 = vmatpush.msra.mxu0 %v1853
        %2476 = vmatpush.msra.mxu0 %v1850
        %2477 = vmatpush.msra.mxu0 %v1847
        %2478 = vmatpush.msra.mxu0 %v1844
        %2479 = vmatpush.msra.mxu0 %v1841
        %2480 = vmatmul.f32.gmra.mxu0 %v1453
        %v2481 = vpop.f32.mrf.mxu0
        %v2482 = vadd.f32 %v2462, %v2481
        %2483 = vdwg.mxu0
        %2484 = vmatpush.msra.mxu0 0.0
        %2485 = vmatpush.msra.mxu0 0.0
        %2486 = vmatpush.msra.mxu0 0.0
        %2487 = vmatpush.msra.mxu0 0.0
        %2488 = vmatpush.msra.mxu0 0.0
        %2489 = vmatpush.msra.mxu0 0.0
        %2490 = vmatpush.msra.mxu0 0.0
        %2491 = vmatpush.msra.mxu0 0.0
        %2492 = vmatpush.msra.mxu0 0.0
        %2493 = vmatpush.msra.mxu0 0.0
        %2494 = vmatpush.msra.mxu0 0.0
        %2495 = vmatpush.msra.mxu0 0.0
        %2496 = vmatpush.msra.mxu0 0.0
        %2497 = vmatpush.msra.mxu0 0.0
        %2498 = vmatpush.msra.mxu0 0.0
        %2499 = vmatpush.msra.mxu0 %v1902
        %2500 = vmatmul.f32.gmra.mxu0 %v1892
        %v2501 = vpop.f32.mrf.mxu0
        %v2502 = vadd.f32 %v2482, %v2501
        %2503 = vdwg.mxu0
        %2504 = vst [vmem:[#allocation2] sm:$0xff] %v2102
        %2505 = vst [vmem:[#allocation2 + $0x8] sm:$0xff] %v2302
        %vm2506 = vcmask 867328
        %2507 = vst.msk [vmem:[#allocation2 + $0x10] sm:$0xff] %vm2506, %v2502
        %v2508 = vld [vmem:[#allocation2] sm:$0xff]
        %v2509 = vld [vmem:[#allocation2 + $0x8] sm:$0xff]
        %v2510 = vld [vmem:[#allocation2 + $0x10] sm:$0xff]
        %2514 = vrot.lane.b32.xlu0 %v2508, 127
        %v2515 = vpop.permute.xlu0 %2514
        %2516 = vrot.lane.b32.xlu0 %v2509, 127
        %v2517 = vpop.permute.xlu0 %2516
        %2518 = vrot.lane.b32.xlu0 %v2510, 127
        %v2519 = vpop.permute.xlu0 %2518
        %v2520 = vsel %vm934, %v2515, %v2517
        %v2521 = vsel %vm934, %v2517, %v2519
        %2525 = vrot.lane.b32.xlu0 %v2508, 126
        %v2526 = vpop.permute.xlu0 %2525
        %2527 = vrot.lane.b32.xlu0 %v2509, 126
        %v2528 = vpop.permute.xlu0 %2527
        %2529 = vrot.lane.b32.xlu0 %v2510, 126
        %v2530 = vpop.permute.xlu0 %2529
        %v2531 = vsel %vm974, %v2526, %v2528
        %v2532 = vsel %vm974, %v2528, %v2530
        %2536 = vrot.lane.b32.xlu0 %v2508, 110
        %v2537 = vpop.permute.xlu0 %2536
        %2538 = vrot.lane.b32.xlu0 %v2509, 110
        %v2539 = vpop.permute.xlu0 %2538
        %2540 = vrot.lane.b32.xlu0 %v2510, 110
        %v2541 = vpop.permute.xlu0 %2540
        %vm2542 = vcmask 900096
        %v2543 = vsel %vm2542, %v2537, %v2539
        %v2544 = vsel %vm2542, %v2539, %v2541
        %2548 = vrot.lane.b32.xlu0 %v2508, 109
        %v2549 = vpop.permute.xlu0 %2548
        %2550 = vrot.lane.b32.xlu0 %v2509, 109
        %v2551 = vpop.permute.xlu0 %2550
        %2552 = vrot.lane.b32.xlu0 %v2510, 109
        %v2553 = vpop.permute.xlu0 %2552
        %vm2554 = vcmask 891904
        %v2555 = vsel %vm2554, %v2549, %v2551
        %v2556 = vsel %vm2554, %v2551, %v2553
        %2560 = vrot.lane.b32.xlu0 %v2508, 108
        %v2561 = vpop.permute.xlu0 %2560
        %2562 = vrot.lane.b32.xlu0 %v2509, 108
        %v2563 = vpop.permute.xlu0 %2562
        %2564 = vrot.lane.b32.xlu0 %v2510, 108
        %v2565 = vpop.permute.xlu0 %2564
        %vm2566 = vcmask 883712
        %v2567 = vsel %vm2566, %v2561, %v2563
        %v2568 = vsel %vm2566, %v2563, %v2565
        %2572 = vrot.lane.b32.xlu0 %v2508, 92
        %v2573 = vpop.permute.xlu0 %2572
        %2574 = vrot.lane.b32.xlu0 %v2509, 92
        %v2575 = vpop.permute.xlu0 %2574
        %2576 = vrot.lane.b32.xlu0 %v2510, 92
        %v2577 = vpop.permute.xlu0 %2576
        %v2578 = vsel %vm1094, %v2573, %v2575
        %v2579 = vsel %vm1094, %v2575, %v2577
        %2583 = vrot.lane.b32.xlu0 %v2508, 91
        %v2584 = vpop.permute.xlu0 %2583
        %2585 = vrot.lane.b32.xlu0 %v2509, 91
        %v2586 = vpop.permute.xlu0 %2585
        %2587 = vrot.lane.b32.xlu0 %v2510, 91
        %v2588 = vpop.permute.xlu0 %2587
        %vm2589 = vcmask 744448
        %v2590 = vsel %vm2589, %v2584, %v2586
        %v2591 = vsel %vm2589, %v2586, %v2588
        %2595 = vrot.lane.b32.xlu0 %v2508, 90
        %v2596 = vpop.permute.xlu0 %2595
        %2597 = vrot.lane.b32.xlu0 %v2509, 90
        %v2598 = vpop.permute.xlu0 %2597
        %2599 = vrot.lane.b32.xlu0 %v2510, 90
        %v2600 = vpop.permute.xlu0 %2599
        %vm2601 = vcmask 736256
        %v2602 = vsel %vm2601, %v2596, %v2598
        %v2603 = vsel %vm2601, %v2598, %v2600
        %v2607 = vld [vmem:[#allocation7] sm:$0xff]
        %v2608 = vld [vmem:[%s5] sm:$0xff]
        %2610 = vset.pattern.permute.xlu0 0
        %2611 = vperm.xlu0 %2610, %v2608
        %v2612 = vpop.permute.xlu0 %2611
        %v2615 = vsel %vm1241, %v2607, 0
        %2617 = vmatpush.msra.mxu0 0.0
        %2618 = vmatpush.msra.mxu0 0.0
        %2619 = vmatpush.msra.mxu0 0.0
        %2620 = vmatpush.msra.mxu0 0.0
        %2621 = vmatpush.msra.mxu0 0.0
        %2622 = vmatpush.msra.mxu0 0.0
        %2623 = vmatpush.msra.mxu0 0.0
        %2624 = vmatpush.msra.mxu0 %v2602
        %2625 = vmatpush.msra.mxu0 %v2590
        %2626 = vmatpush.msra.mxu0 %v2578
        %2627 = vmatpush.msra.mxu0 %v2567
        %2628 = vmatpush.msra.mxu0 %v2555
        %2629 = vmatpush.msra.mxu0 %v2543
        %2630 = vmatpush.msra.mxu0 %v2531
        %2631 = vmatpush.msra.mxu0 %v2520
        %2632 = vmatpush.msra.mxu0 %v2508
        %2633 = vmatmul.f32.gmra.mxu0 %v2615
        %v2634 = vpop.f32.mrf.mxu0
        %v2635 = vadd.f32 %v2612, %v2634
        %2636 = vdwg.mxu0
        %2637 = vmatpush.msra.mxu0 0.0
        %2638 = vmatpush.msra.mxu0 0.0
        %2639 = vmatpush.msra.mxu0 0.0
        %2640 = vmatpush.msra.mxu0 0.0
        %2641 = vmatpush.msra.mxu0 0.0
        %2642 = vmatpush.msra.mxu0 0.0
        %2643 = vmatpush.msra.mxu0 0.0
        %2644 = vmatpush.msra.mxu0 %v2603
        %2645 = vmatpush.msra.mxu0 %v2591
        %2646 = vmatpush.msra.mxu0 %v2579
        %2647 = vmatpush.msra.mxu0 %v2568
        %2648 = vmatpush.msra.mxu0 %v2556
        %2649 = vmatpush.msra.mxu0 %v2544
        %2650 = vmatpush.msra.mxu0 %v2532
        %2651 = vmatpush.msra.mxu0 %v2521
        %2652 = vmatpush.msra.mxu0 %v2509
        %2653 = vmatmul.f32.gmra.mxu0 %v2615
        %v2654 = vpop.f32.mrf.mxu0
        %v2655 = vadd.f32 %v2612, %v2654
        %2656 = vdwg.mxu0
        %2657 = vmatpush.msra.mxu0 0.0
        %2658 = vmatpush.msra.mxu0 0.0
        %2659 = vmatpush.msra.mxu0 0.0
        %2660 = vmatpush.msra.mxu0 0.0
        %2661 = vmatpush.msra.mxu0 0.0
        %2662 = vmatpush.msra.mxu0 0.0
        %2663 = vmatpush.msra.mxu0 0.0
        %2664 = vmatpush.msra.mxu0 %v2600
        %2665 = vmatpush.msra.mxu0 %v2588
        %2666 = vmatpush.msra.mxu0 %v2577
        %2667 = vmatpush.msra.mxu0 %v2565
        %2668 = vmatpush.msra.mxu0 %v2553
        %2669 = vmatpush.msra.mxu0 %v2541
        %2670 = vmatpush.msra.mxu0 %v2530
        %2671 = vmatpush.msra.mxu0 %v2519
        %2672 = vmatpush.msra.mxu0 %v2510
        %2673 = vmatmul.f32.gmra.mxu0 %v2615
        %v2674 = vpop.f32.mrf.mxu0
        %v2675 = vadd.f32 %v2612, %v2674
        %2676 = vdwg.mxu0
        %v2677 = vmax.f32 %v2635, 0.0
        %v2678 = vmax.f32 %v2655, 0.0
        %v2679 = vmax.f32 %v2675, 0.0
        %v2680 = vld [vmem:[#allocation9] sm:$0xff]
        %v2681 = vld [vmem:[#allocation9 + $0x8] sm:$0xff]
        %v2682 = vld [vmem:[#allocation9 + $0x10] sm:$0xff]
        %v2683 = vld [vmem:[#allocation9 + $0x18] sm:$0xff]
        %v2684 = vld [vmem:[#allocation9 + $0x20] sm:$0xff]
        %v2685 = vld [vmem:[#allocation9 + $0x28] sm:$0xff]
        %v2686 = vld [vmem:[#allocation9 + $0x30] sm:$0xff]
        %v2687 = vld [vmem:[#allocation9 + $0x38] sm:$0xff]
        %v2688 = vld [vmem:[#allocation9 + $0x40] sm:$0xff]
        %v2689 = vld [vmem:[#allocation9 + $0x48] sm:$0xff]
        %v2690 = vld [vmem:[#allocation9 + $0x50] sm:$0xff]
        %v2691 = vld [vmem:[#allocation9 + $0x58] sm:$0xff]
        %v2692 = vld [vmem:[#allocation9 + $0x60] sm:$0xff]
        %v2693 = vld [vmem:[#allocation9 + $0x68] sm:$0xff]
        %v2694 = vld [vmem:[#allocation9 + $0x70] sm:$0xff]
        %v2695 = vld [vmem:[#allocation9 + $0x78] sm:$0xff]
        %v2696 = vld [vmem:[#allocation9 + $0x80] sm:$0xff]
        %v2697 = vld [vmem:[#allocation9 + $0x88] sm:$0xff]
        %v2698 = vld [vmem:[#allocation9 + $0x90] sm:$0xff]
        %v2699 = vld [vmem:[#allocation9 + $0x98] sm:$0xff]
        %v2700 = vld [vmem:[#allocation9 + $0xa0] sm:$0xff]
        %v2701 = vld [vmem:[#allocation9 + $0xa8] sm:$0xff]
        %v2702 = vld [vmem:[#allocation9 + $0xb0] sm:$0xff]
        %v2703 = vld [vmem:[#allocation9 + $0xb8] sm:$0xff]
        %v2704 = vld [vmem:[#allocation9 + $0xc0] sm:$0xff]
        %v2705 = vld [vmem:[#allocation9 + $0xc8] sm:$0xff]
        %v2706 = vld [vmem:[#allocation9 + $0xd0] sm:$0xff]
        %v2707 = vld [vmem:[#allocation9 + $0xd8] sm:$0xff]
        %v2708 = vld [vmem:[#allocation9 + $0xe0] sm:$0xff]
        %v2709 = vld [vmem:[#allocation9 + $0xe8] sm:$0xff]
        %v2710 = vld [vmem:[#allocation9 + $0xf0] sm:$0xff]
        %v2711 = vld [vmem:[#allocation9 + $0xf8] sm:$0xff]
        %v2712 = vld [vmem:[#allocation9 + $0x100] sm:$0xff]
        %v2713 = vld [vmem:[#allocation9 + $0x108] sm:$0xff]
        %v2714 = vld [vmem:[#allocation9 + $0x110] sm:$0xff]
        %v2715 = vld [vmem:[#allocation9 + $0x118] sm:$0xff]
        %v2716 = vld [vmem:[#allocation9 + $0x120] sm:$0xff]
        %v2717 = vld [vmem:[#allocation9 + $0x128] sm:$0xff]
        %v2718 = vld [vmem:[#allocation9 + $0x130] sm:$0xff]
        %v2719 = vld [vmem:[#allocation9 + $0x138] sm:$0xff]
        %v2720 = vld [vmem:[#allocation9 + $0x140] sm:$0xf]
        %vm2721 = vcmask 556032
        %v2723 = vsel %vm2721, %v2679, 0
        %v2726 = vsel %vm1894, %v2720, 0
        %2728 = vmatpush.msra.mxu0 %v2695
        %2729 = vmatpush.msra.mxu0 %v2694
        %2730 = vmatpush.msra.mxu0 %v2693
        %2731 = vmatpush.msra.mxu0 %v2692
        %2732 = vmatpush.msra.mxu0 %v2691
        %2733 = vmatpush.msra.mxu0 %v2690
        %2734 = vmatpush.msra.mxu0 %v2689
        %2735 = vmatpush.msra.mxu0 %v2688
        %2736 = vmatpush.msra.mxu0 %v2687
        %2737 = vmatpush.msra.mxu0 %v2686
        %2738 = vmatpush.msra.mxu0 %v2685
        %2739 = vmatpush.msra.mxu0 %v2684
        %2740 = vmatpush.msra.mxu0 %v2683
        %2741 = vmatpush.msra.mxu0 %v2682
        %2742 = vmatpush.msra.mxu0 %v2681
        %2743 = vmatpush.msra.mxu0 %v2680
        %2744 = vmatmul.f32.gmra.mxu0 %v2677
        %v2745 = vpop.f32.mrf.mxu0
        %v2746 = vadd.f32 0.0, %v2745
        %2747 = vdwg.mxu0
        %2748 = vmatpush.msra.mxu0 %v2711
        %2749 = vmatpush.msra.mxu0 %v2710
        %2750 = vmatpush.msra.mxu0 %v2709
        %2751 = vmatpush.msra.mxu0 %v2708
        %2752 = vmatpush.msra.mxu0 %v2707
        %2753 = vmatpush.msra.mxu0 %v2706
        %2754 = vmatpush.msra.mxu0 %v2705
        %2755 = vmatpush.msra.mxu0 %v2704
        %2756 = vmatpush.msra.mxu0 %v2703
        %2757 = vmatpush.msra.mxu0 %v2702
        %2758 = vmatpush.msra.mxu0 %v2701
        %2759 = vmatpush.msra.mxu0 %v2700
        %2760 = vmatpush.msra.mxu0 %v2699
        %2761 = vmatpush.msra.mxu0 %v2698
        %2762 = vmatpush.msra.mxu0 %v2697
        %2763 = vmatpush.msra.mxu0 %v2696
        %2764 = vmatmul.f32.gmra.mxu0 %v2678
        %v2765 = vpop.f32.mrf.mxu0
        %v2766 = vadd.f32 %v2746, %v2765
        %2767 = vdwg.mxu0
        %2768 = vmatpush.msra.mxu0 0.0
        %2769 = vmatpush.msra.mxu0 0.0
        %2770 = vmatpush.msra.mxu0 0.0
        %2771 = vmatpush.msra.mxu0 0.0
        %2772 = vmatpush.msra.mxu0 0.0
        %2773 = vmatpush.msra.mxu0 0.0
        %2774 = vmatpush.msra.mxu0 0.0
        %2775 = vmatpush.msra.mxu0 %v2726
        %2776 = vmatpush.msra.mxu0 %v2719
        %2777 = vmatpush.msra.mxu0 %v2718
        %2778 = vmatpush.msra.mxu0 %v2717
        %2779 = vmatpush.msra.mxu0 %v2716
        %2780 = vmatpush.msra.mxu0 %v2715
        %2781 = vmatpush.msra.mxu0 %v2714
        %2782 = vmatpush.msra.mxu0 %v2713
        %2783 = vmatpush.msra.mxu0 %v2712
        %2784 = vmatmul.f32.gmra.mxu0 %v2723
        %v2785 = vpop.f32.mrf.mxu0
        %v2786 = vadd.f32 %v2766, %v2785
        %2787 = vdwg.mxu0
        %vm2788 = vcmask 998400
        %2789 = vst.msk [vmem:[#allocation3] sm:$0xff] %vm2788, %v2786
        %v2790 = vld [vmem:[#allocation3] sm:$0xff]
        %2792 = vrot.lane.b32.xlu0 %v2790, 127
        %v2793 = vpop.permute.xlu0 %2792
        %2795 = vrot.lane.b32.xlu0 %v2790, 126
        %v2796 = vpop.permute.xlu0 %2795
        %2798 = vrot.lane.b32.xlu0 %v2790, 118
        %v2799 = vpop.permute.xlu0 %2798
        %2801 = vrot.lane.b32.xlu0 %v2790, 117
        %v2802 = vpop.permute.xlu0 %2801
        %2804 = vrot.lane.b32.xlu0 %v2790, 116
        %v2805 = vpop.permute.xlu0 %2804
        %2807 = vrot.lane.b32.xlu0 %v2790, 108
        %v2808 = vpop.permute.xlu0 %2807
        %2810 = vrot.lane.b32.xlu0 %v2790, 107
        %v2811 = vpop.permute.xlu0 %2810
        %2813 = vrot.lane.b32.xlu0 %v2790, 106
        %v2814 = vpop.permute.xlu0 %2813
        %v2816 = vld [vmem:[#allocation10] sm:$0xff]
        %v2817 = vld [vmem:[#allocation10 + $0x8] sm:$0xff]
        %v2818 = vld [vmem:[#allocation10 + $0x10] sm:$0xff]
        %v2819 = vld [vmem:[#allocation10 + $0x18] sm:$0xff]
        %v2820 = vld [vmem:[%s8] sm:$0xff]
        %v2821 = vld [vmem:[%s8 + $0x8] sm:$0xff]
        %v2822 = vld [vmem:[%s8 + $0x10] sm:$0xff]
        %v2823 = vld [vmem:[%s8 + $0x18] sm:$0xff]
        %2825 = vset.pattern.permute.xlu0 0
        %2826 = vperm.xlu0 %2825, %v2820
        %v2827 = vpop.permute.xlu0 %2826
        %2830 = vset.pattern.permute.xlu0 0
        %2831 = vperm.xlu0 %2830, %v2821
        %v2832 = vpop.permute.xlu0 %2831
        %2835 = vset.pattern.permute.xlu0 0
        %2836 = vperm.xlu0 %2835, %v2822
        %v2837 = vpop.permute.xlu0 %2836
        %2840 = vset.pattern.permute.xlu0 0
        %2841 = vperm.xlu0 %2840, %v2823
        %v2842 = vpop.permute.xlu0 %2841
        %v2845 = vsel %vm1241, %v2816, 0
        %v2848 = vsel %vm1241, %v2817, 0
        %v2851 = vsel %vm1241, %v2818, 0
        %v2854 = vsel %vm1241, %v2819, 0
        %2856 = vmatpush.msra.mxu0 0.0
        %2857 = vmatpush.msra.mxu0 0.0
        %2858 = vmatpush.msra.mxu0 0.0
        %2859 = vmatpush.msra.mxu0 0.0
        %2860 = vmatpush.msra.mxu0 0.0
        %2861 = vmatpush.msra.mxu0 0.0
        %2862 = vmatpush.msra.mxu0 0.0
        %2863 = vmatpush.msra.mxu0 %v2814
        %2864 = vmatpush.msra.mxu0 %v2811
        %2865 = vmatpush.msra.mxu0 %v2808
        %2866 = vmatpush.msra.mxu0 %v2805
        %2867 = vmatpush.msra.mxu0 %v2802
        %2868 = vmatpush.msra.mxu0 %v2799
        %2869 = vmatpush.msra.mxu0 %v2796
        %2870 = vmatpush.msra.mxu0 %v2793
        %2871 = vmatpush.msra.mxu0 %v2790
        %2872 = vmatmul.f32.gmra.mxu0 %v2845
        %v2873 = vpop.f32.mrf.mxu0
        %v2874 = vadd.f32 %v2827, %v2873
        %2875 = vmatmul.f32.gmra.mxu0 %v2848
        %v2876 = vpop.f32.mrf.mxu0
        %v2877 = vadd.f32 %v2832, %v2876
        %2878 = vmatmul.f32.gmra.mxu0 %v2851
        %v2879 = vpop.f32.mrf.mxu0
        %v2880 = vadd.f32 %v2837, %v2879
        %2881 = vmatmul.f32.gmra.mxu0 %v2854
        %v2882 = vpop.f32.mrf.mxu0
        %v2883 = vadd.f32 %v2842, %v2882
        %2884 = vdwg.mxu0
        %v2885 = vmax.f32 %v2874, 0.0
        %v2886 = vmax.f32 %v2877, 0.0
        %v2887 = vmax.f32 %v2880, 0.0
        %v2888 = vmax.f32 %v2883, 0.0
        %v2889 = vld [vmem:[%s9] sm:$0xff]
        %v2890 = vld [vmem:[%s9 + $0x8] sm:$0xff]
        %v2891 = vld [vmem:[%s9 + $0x10] sm:$0xff]
        %v2892 = vld [vmem:[%s9 + $0x18] sm:$0xff]
        %v2893 = vld [vmem:[%s9 + $0x20] sm:$0xff]
        %v2894 = vld [vmem:[%s9 + $0x28] sm:$0xff]
        %v2895 = vld [vmem:[%s9 + $0x30] sm:$0xff]
        %v2896 = vld [vmem:[%s9 + $0x38] sm:$0xff]
        %v2897 = vld [vmem:[%s9 + $0x40] sm:$0xff]
        %v2898 = vld [vmem:[%s9 + $0x48] sm:$0xff]
        %v2899 = vld [vmem:[%s9 + $0x50] sm:$0xff]
        %v2900 = vld [vmem:[%s9 + $0x58] sm:$0xff]
        %v2901 = vld [vmem:[%s9 + $0x60] sm:$0xf]
        %vm2902 = vcmask 818176
        %v2904 = vsel %vm2902, %v2885, 0
        %v2907 = vsel %vm2902, %v2886, 0
        %v2910 = vsel %vm2902, %v2887, 0
        %v2913 = vsel %vm2902, %v2888, 0
        %v2916 = vsel %vm1894, %v2901, 0
        %2918 = vmatpush.msra.mxu0 0.0
        %2919 = vmatpush.msra.mxu0 0.0
        %2920 = vmatpush.msra.mxu0 0.0
        %2921 = vmatpush.msra.mxu0 %v2916
        %2922 = vmatpush.msra.mxu0 %v2900
        %2923 = vmatpush.msra.mxu0 %v2899
        %2924 = vmatpush.msra.mxu0 %v2898
        %2925 = vmatpush.msra.mxu0 %v2897
        %2926 = vmatpush.msra.mxu0 %v2896
        %2927 = vmatpush.msra.mxu0 %v2895
        %2928 = vmatpush.msra.mxu0 %v2894
        %2929 = vmatpush.msra.mxu0 %v2893
        %2930 = vmatpush.msra.mxu0 %v2892
        %2931 = vmatpush.msra.mxu0 %v2891
        %2932 = vmatpush.msra.mxu0 %v2890
        %2933 = vmatpush.msra.mxu0 %v2889
        %2934 = vmatmul.f32.gmra.mxu0 %v2904
        %v2935 = vpop.f32.mrf.mxu0
        %v2936 = vadd.f32 0.0, %v2935
        %2937 = vmatmul.f32.gmra.mxu0 %v2907
        %v2938 = vpop.f32.mrf.mxu0
        %v2939 = vadd.f32 0.0, %v2938
        %2940 = vmatmul.f32.gmra.mxu0 %v2910
        %v2941 = vpop.f32.mrf.mxu0
        %v2942 = vadd.f32 0.0, %v2941
        %2943 = vmatmul.f32.gmra.mxu0 %v2913
        %v2944 = vpop.f32.mrf.mxu0
        %v2945 = vadd.f32 0.0, %v2944
        %2946 = vdwg.mxu0
        %s2947 = scalar_lea.vmem %s9, 104
        %v2948 = vld [vmem:[%s2947] sm:$0xff]
        %v2949 = vld [vmem:[%s2947 + $0x8] sm:$0xff]
        %v2950 = vld [vmem:[%s2947 + $0x10] sm:$0xff]
        %v2951 = vld [vmem:[%s2947 + $0x18] sm:$0xff]
        %v2952 = vld [vmem:[%s2947 + $0x20] sm:$0xff]
        %v2953 = vld [vmem:[%s2947 + $0x28] sm:$0xff]
        %v2954 = vld [vmem:[%s2947 + $0x30] sm:$0xff]
        %v2955 = vld [vmem:[%s2947 + $0x38] sm:$0xff]
        %v2956 = vld [vmem:[%s2947 + $0x40] sm:$0xff]
        %v2957 = vld [vmem:[%s2947 + $0x48] sm:$0xff]
        %v2958 = vld [vmem:[%s2947 + $0x50] sm:$0xff]
        %v2959 = vld [vmem:[%s2947 + $0x58] sm:$0xff]
        %v2960 = vld [vmem:[%s2947 + $0x60] sm:$0xf]
        %v2962 = vsel %vm1894, %v2960, 0
        %2964 = vmatpush.msra.mxu0 0.0
        %2965 = vmatpush.msra.mxu0 0.0
        %2966 = vmatpush.msra.mxu0 0.0
        %2967 = vmatpush.msra.mxu0 %v2962
        %2968 = vmatpush.msra.mxu0 %v2959
        %2969 = vmatpush.msra.mxu0 %v2958
        %2970 = vmatpush.msra.mxu0 %v2957
        %2971 = vmatpush.msra.mxu0 %v2956
        %2972 = vmatpush.msra.mxu0 %v2955
        %2973 = vmatpush.msra.mxu0 %v2954
        %2974 = vmatpush.msra.mxu0 %v2953
        %2975 = vmatpush.msra.mxu0 %v2952
        %2976 = vmatpush.msra.mxu0 %v2951
        %2977 = vmatpush.msra.mxu0 %v2950
        %2978 = vmatpush.msra.mxu0 %v2949
        %2979 = vmatpush.msra.mxu0 %v2948
        %2980 = vmatmul.f32.gmra.mxu0 %v2904
        %v2981 = vpop.f32.mrf.mxu0
        %v2982 = vadd.f32 0.0, %v2981
        %2983 = vmatmul.f32.gmra.mxu0 %v2907
        %v2984 = vpop.f32.mrf.mxu0
        %v2985 = vadd.f32 0.0, %v2984
        %2986 = vmatmul.f32.gmra.mxu0 %v2910
        %v2987 = vpop.f32.mrf.mxu0
        %v2988 = vadd.f32 0.0, %v2987
        %2989 = vmatmul.f32.gmra.mxu0 %v2913
        %v2990 = vpop.f32.mrf.mxu0
        %v2991 = vadd.f32 0.0, %v2990
        %2992 = vdwg.mxu0
        %s2993 = scalar_lea.vmem %s9, 208
        %v2994 = vld [vmem:[%s2993] sm:$0xff]
        %v2995 = vld [vmem:[%s2993 + $0x8] sm:$0xff]
        %v2996 = vld [vmem:[%s2993 + $0x10] sm:$0xff]
        %v2997 = vld [vmem:[%s2993 + $0x18] sm:$0xff]
        %v2998 = vld [vmem:[%s2993 + $0x20] sm:$0xff]
        %v2999 = vld [vmem:[%s2993 + $0x28] sm:$0xff]
        %v3000 = vld [vmem:[%s2993 + $0x30] sm:$0xff]
        %v3001 = vld [vmem:[%s2993 + $0x38] sm:$0xff]
        %v3002 = vld [vmem:[%s2993 + $0x40] sm:$0xff]
        %v3003 = vld [vmem:[%s2993 + $0x48] sm:$0xff]
        %v3004 = vld [vmem:[%s2993 + $0x50] sm:$0xff]
        %v3005 = vld [vmem:[%s2993 + $0x58] sm:$0xff]
        %v3006 = vld [vmem:[%s2993 + $0x60] sm:$0xf]
        %v3008 = vsel %vm1894, %v3006, 0
        %3010 = vmatpush.msra.mxu0 0.0
        %3011 = vmatpush.msra.mxu0 0.0
        %3012 = vmatpush.msra.mxu0 0.0
        %3013 = vmatpush.msra.mxu0 %v3008
        %3014 = vmatpush.msra.mxu0 %v3005
        %3015 = vmatpush.msra.mxu0 %v3004
        %3016 = vmatpush.msra.mxu0 %v3003
        %3017 = vmatpush.msra.mxu0 %v3002
        %3018 = vmatpush.msra.mxu0 %v3001
        %3019 = vmatpush.msra.mxu0 %v3000
        %3020 = vmatpush.msra.mxu0 %v2999
        %3021 = vmatpush.msra.mxu0 %v2998
        %3022 = vmatpush.msra.mxu0 %v2997
        %3023 = vmatpush.msra.mxu0 %v2996
        %3024 = vmatpush.msra.mxu0 %v2995
        %3025 = vmatpush.msra.mxu0 %v2994
        %3026 = vmatmul.f32.gmra.mxu0 %v2904
        %v3027 = vpop.f32.mrf.mxu0
        %v3028 = vadd.f32 0.0, %v3027
        %3029 = vmatmul.f32.gmra.mxu0 %v2907
        %v3030 = vpop.f32.mrf.mxu0
        %v3031 = vadd.f32 0.0, %v3030
        %3032 = vmatmul.f32.gmra.mxu0 %v2910
        %v3033 = vpop.f32.mrf.mxu0
        %v3034 = vadd.f32 0.0, %v3033
        %3035 = vmatmul.f32.gmra.mxu0 %v2913
        %v3036 = vpop.f32.mrf.mxu0
        %v3037 = vadd.f32 0.0, %v3036
        %3038 = vdwg.mxu0
        %s3039 = scalar_lea.vmem %s9, 312
        %v3040 = vld [vmem:[%s3039] sm:$0xff]
        %v3041 = vld [vmem:[%s3039 + $0x8] sm:$0xff]
        %v3042 = vld [vmem:[%s3039 + $0x10] sm:$0xff]
        %v3043 = vld [vmem:[%s3039 + $0x18] sm:$0xff]
        %v3044 = vld [vmem:[%s3039 + $0x20] sm:$0xff]
        %v3045 = vld [vmem:[%s3039 + $0x28] sm:$0xff]
        %v3046 = vld [vmem:[%s3039 + $0x30] sm:$0xff]
        %v3047 = vld [vmem:[%s3039 + $0x38] sm:$0xff]
        %v3048 = vld [vmem:[%s3039 + $0x40] sm:$0xff]
        %v3049 = vld [vmem:[%s3039 + $0x48] sm:$0xff]
        %v3050 = vld [vmem:[%s3039 + $0x50] sm:$0xff]
        %v3051 = vld [vmem:[%s3039 + $0x58] sm:$0xff]
        %v3052 = vld [vmem:[%s3039 + $0x60] sm:$0xf]
        %v3054 = vsel %vm1894, %v3052, 0
        %3056 = vmatpush.msra.mxu0 0.0
        %3057 = vmatpush.msra.mxu0 0.0
        %3058 = vmatpush.msra.mxu0 0.0
        %3059 = vmatpush.msra.mxu0 %v3054
        %3060 = vmatpush.msra.mxu0 %v3051
        %3061 = vmatpush.msra.mxu0 %v3050
        %3062 = vmatpush.msra.mxu0 %v3049
        %3063 = vmatpush.msra.mxu0 %v3048
        %3064 = vmatpush.msra.mxu0 %v3047
        %3065 = vmatpush.msra.mxu0 %v3046
        %3066 = vmatpush.msra.mxu0 %v3045
        %3067 = vmatpush.msra.mxu0 %v3044
        %3068 = vmatpush.msra.mxu0 %v3043
        %3069 = vmatpush.msra.mxu0 %v3042
        %3070 = vmatpush.msra.mxu0 %v3041
        %3071 = vmatpush.msra.mxu0 %v3040
        %3072 = vmatmul.f32.gmra.mxu0 %v2904
        %v3073 = vpop.f32.mrf.mxu0
        %v3074 = vadd.f32 0.0, %v3073
        %3075 = vmatmul.f32.gmra.mxu0 %v2907
        %v3076 = vpop.f32.mrf.mxu0
        %v3077 = vadd.f32 0.0, %v3076
        %3078 = vmatmul.f32.gmra.mxu0 %v2910
        %v3079 = vpop.f32.mrf.mxu0
        %v3080 = vadd.f32 0.0, %v3079
        %3081 = vmatmul.f32.gmra.mxu0 %v2913
        %v3082 = vpop.f32.mrf.mxu0
        %v3083 = vadd.f32 0.0, %v3082
        %3084 = vdwg.mxu0
        %s3085 = scalar_lea.vmem %s9, 416
        %v3086 = vld [vmem:[%s3085] sm:$0xff]
        %v3087 = vld [vmem:[%s3085 + $0x8] sm:$0xff]
        %v3088 = vld [vmem:[%s3085 + $0x10] sm:$0xff]
        %v3089 = vld [vmem:[%s3085 + $0x18] sm:$0xff]
        %v3090 = vld [vmem:[%s3085 + $0x20] sm:$0xff]
        %v3091 = vld [vmem:[%s3085 + $0x28] sm:$0xff]
        %v3092 = vld [vmem:[%s3085 + $0x30] sm:$0xff]
        %v3093 = vld [vmem:[%s3085 + $0x38] sm:$0xff]
        %v3094 = vld [vmem:[%s3085 + $0x40] sm:$0xff]
        %v3095 = vld [vmem:[%s3085 + $0x48] sm:$0xff]
        %v3096 = vld [vmem:[%s3085 + $0x50] sm:$0xff]
        %v3097 = vld [vmem:[%s3085 + $0x58] sm:$0xff]
        %v3098 = vld [vmem:[%s3085 + $0x60] sm:$0xf]
        %v3100 = vsel %vm1894, %v3098, 0
        %3102 = vmatpush.msra.mxu0 0.0
        %3103 = vmatpush.msra.mxu0 0.0
        %3104 = vmatpush.msra.mxu0 0.0
        %3105 = vmatpush.msra.mxu0 %v3100
        %3106 = vmatpush.msra.mxu0 %v3097
        %3107 = vmatpush.msra.mxu0 %v3096
        %3108 = vmatpush.msra.mxu0 %v3095
        %3109 = vmatpush.msra.mxu0 %v3094
        %3110 = vmatpush.msra.mxu0 %v3093
        %3111 = vmatpush.msra.mxu0 %v3092
        %3112 = vmatpush.msra.mxu0 %v3091
        %3113 = vmatpush.msra.mxu0 %v3090
        %3114 = vmatpush.msra.mxu0 %v3089
        %3115 = vmatpush.msra.mxu0 %v3088
        %3116 = vmatpush.msra.mxu0 %v3087
        %3117 = vmatpush.msra.mxu0 %v3086
        %3118 = vmatmul.f32.gmra.mxu0 %v2904
        %v3119 = vpop.f32.mrf.mxu0
        %v3120 = vadd.f32 0.0, %v3119
        %3121 = vmatmul.f32.gmra.mxu0 %v2907
        %v3122 = vpop.f32.mrf.mxu0
        %v3123 = vadd.f32 0.0, %v3122
        %3124 = vmatmul.f32.gmra.mxu0 %v2910
        %v3125 = vpop.f32.mrf.mxu0
        %v3126 = vadd.f32 0.0, %v3125
        %3127 = vmatmul.f32.gmra.mxu0 %v2913
        %v3128 = vpop.f32.mrf.mxu0
        %v3129 = vadd.f32 0.0, %v3128
        %3130 = vdwg.mxu0
        %s3131 = scalar_lea.vmem %s9, 520
        %v3132 = vld [vmem:[%s3131] sm:$0xff]
        %v3133 = vld [vmem:[%s3131 + $0x8] sm:$0xff]
        %v3134 = vld [vmem:[%s3131 + $0x10] sm:$0xff]
        %v3135 = vld [vmem:[%s3131 + $0x18] sm:$0xff]
        %v3136 = vld [vmem:[%s3131 + $0x20] sm:$0xff]
        %v3137 = vld [vmem:[%s3131 + $0x28] sm:$0xff]
        %v3138 = vld [vmem:[%s3131 + $0x30] sm:$0xff]
        %v3139 = vld [vmem:[%s3131 + $0x38] sm:$0xff]
        %v3140 = vld [vmem:[%s3131 + $0x40] sm:$0xff]
        %v3141 = vld [vmem:[%s3131 + $0x48] sm:$0xff]
        %v3142 = vld [vmem:[%s3131 + $0x50] sm:$0xff]
        %v3143 = vld [vmem:[%s3131 + $0x58] sm:$0xff]
        %v3144 = vld [vmem:[%s3131 + $0x60] sm:$0xf]
        %v3146 = vsel %vm1894, %v3144, 0
        %3148 = vmatpush.msra.mxu0 0.0
        %3149 = vmatpush.msra.mxu0 0.0
        %3150 = vmatpush.msra.mxu0 0.0
        %3151 = vmatpush.msra.mxu0 %v3146
        %3152 = vmatpush.msra.mxu0 %v3143
        %3153 = vmatpush.msra.mxu0 %v3142
        %3154 = vmatpush.msra.mxu0 %v3141
        %3155 = vmatpush.msra.mxu0 %v3140
        %3156 = vmatpush.msra.mxu0 %v3139
        %3157 = vmatpush.msra.mxu0 %v3138
        %3158 = vmatpush.msra.mxu0 %v3137
        %3159 = vmatpush.msra.mxu0 %v3136
        %3160 = vmatpush.msra.mxu0 %v3135
        %3161 = vmatpush.msra.mxu0 %v3134
        %3162 = vmatpush.msra.mxu0 %v3133
        %3163 = vmatpush.msra.mxu0 %v3132
        %3164 = vmatmul.f32.gmra.mxu0 %v2904
        %v3165 = vpop.f32.mrf.mxu0
        %v3166 = vadd.f32 0.0, %v3165
        %3167 = vmatmul.f32.gmra.mxu0 %v2907
        %v3168 = vpop.f32.mrf.mxu0
        %v3169 = vadd.f32 0.0, %v3168
        %3170 = vmatmul.f32.gmra.mxu0 %v2910
        %v3171 = vpop.f32.mrf.mxu0
        %v3172 = vadd.f32 0.0, %v3171
        %3173 = vmatmul.f32.gmra.mxu0 %v2913
        %v3174 = vpop.f32.mrf.mxu0
        %v3175 = vadd.f32 0.0, %v3174
        %3176 = vdwg.mxu0
        %s3177 = scalar_lea.vmem %s9, 624
        %v3178 = vld [vmem:[%s3177] sm:$0xff]
        %v3179 = vld [vmem:[%s3177 + $0x8] sm:$0xff]
        %v3180 = vld [vmem:[%s3177 + $0x10] sm:$0xff]
        %v3181 = vld [vmem:[%s3177 + $0x18] sm:$0xff]
        %v3182 = vld [vmem:[%s3177 + $0x20] sm:$0xff]
        %v3183 = vld [vmem:[%s3177 + $0x28] sm:$0xff]
        %v3184 = vld [vmem:[%s3177 + $0x30] sm:$0xff]
        %v3185 = vld [vmem:[%s3177 + $0x38] sm:$0xff]
        %v3186 = vld [vmem:[%s3177 + $0x40] sm:$0xff]
        %v3187 = vld [vmem:[%s3177 + $0x48] sm:$0xff]
        %v3188 = vld [vmem:[%s3177 + $0x50] sm:$0xff]
        %v3189 = vld [vmem:[%s3177 + $0x58] sm:$0xff]
        %v3190 = vld [vmem:[%s3177 + $0x60] sm:$0xf]
        %v3192 = vsel %vm1894, %v3190, 0
        %3194 = vmatpush.msra.mxu0 0.0
        %3195 = vmatpush.msra.mxu0 0.0
        %3196 = vmatpush.msra.mxu0 0.0
        %3197 = vmatpush.msra.mxu0 %v3192
        %3198 = vmatpush.msra.mxu0 %v3189
        %3199 = vmatpush.msra.mxu0 %v3188
        %3200 = vmatpush.msra.mxu0 %v3187
        %3201 = vmatpush.msra.mxu0 %v3186
        %3202 = vmatpush.msra.mxu0 %v3185
        %3203 = vmatpush.msra.mxu0 %v3184
        %3204 = vmatpush.msra.mxu0 %v3183
        %3205 = vmatpush.msra.mxu0 %v3182
        %3206 = vmatpush.msra.mxu0 %v3181
        %3207 = vmatpush.msra.mxu0 %v3180
        %3208 = vmatpush.msra.mxu0 %v3179
        %3209 = vmatpush.msra.mxu0 %v3178
        %3210 = vmatmul.f32.gmra.mxu0 %v2904
        %v3211 = vpop.f32.mrf.mxu0
        %v3212 = vadd.f32 0.0, %v3211
        %3213 = vmatmul.f32.gmra.mxu0 %v2907
        %v3214 = vpop.f32.mrf.mxu0
        %v3215 = vadd.f32 0.0, %v3214
        %3216 = vmatmul.f32.gmra.mxu0 %v2910
        %v3217 = vpop.f32.mrf.mxu0
        %v3218 = vadd.f32 0.0, %v3217
        %3219 = vmatmul.f32.gmra.mxu0 %v2913
        %v3220 = vpop.f32.mrf.mxu0
        %v3221 = vadd.f32 0.0, %v3220
        %3222 = vdwg.mxu0
        %s3223 = scalar_lea.vmem %s9, 728
        %v3224 = vld [vmem:[%s3223] sm:$0xff]
        %v3225 = vld [vmem:[%s3223 + $0x8] sm:$0xff]
        %v3226 = vld [vmem:[%s3223 + $0x10] sm:$0xff]
        %v3227 = vld [vmem:[%s3223 + $0x18] sm:$0xff]
        %v3228 = vld [vmem:[%s3223 + $0x20] sm:$0xff]
        %v3229 = vld [vmem:[%s3223 + $0x28] sm:$0xff]
        %v3230 = vld [vmem:[%s3223 + $0x30] sm:$0xff]
        %v3231 = vld [vmem:[%s3223 + $0x38] sm:$0xff]
        %v3232 = vld [vmem:[%s3223 + $0x40] sm:$0xff]
        %v3233 = vld [vmem:[%s3223 + $0x48] sm:$0xff]
        %v3234 = vld [vmem:[%s3223 + $0x50] sm:$0xff]
        %v3235 = vld [vmem:[%s3223 + $0x58] sm:$0xff]
        %v3236 = vld [vmem:[%s3223 + $0x60] sm:$0xf]
        %v3238 = vsel %vm1894, %v3236, 0
        %3240 = vmatpush.msra.mxu0 0.0
        %3241 = vmatpush.msra.mxu0 0.0
        %3242 = vmatpush.msra.mxu0 0.0
        %3243 = vmatpush.msra.mxu0 %v3238
        %3244 = vmatpush.msra.mxu0 %v3235
        %3245 = vmatpush.msra.mxu0 %v3234
        %3246 = vmatpush.msra.mxu0 %v3233
        %3247 = vmatpush.msra.mxu0 %v3232
        %3248 = vmatpush.msra.mxu0 %v3231
        %3249 = vmatpush.msra.mxu0 %v3230
        %3250 = vmatpush.msra.mxu0 %v3229
        %3251 = vmatpush.msra.mxu0 %v3228
        %3252 = vmatpush.msra.mxu0 %v3227
        %3253 = vmatpush.msra.mxu0 %v3226
        %3254 = vmatpush.msra.mxu0 %v3225
        %3255 = vmatpush.msra.mxu0 %v3224
        %3256 = vmatmul.f32.gmra.mxu0 %v2904
        %v3257 = vpop.f32.mrf.mxu0
        %v3258 = vadd.f32 0.0, %v3257
        %3259 = vmatmul.f32.gmra.mxu0 %v2907
        %v3260 = vpop.f32.mrf.mxu0
        %v3261 = vadd.f32 0.0, %v3260
        %3262 = vmatmul.f32.gmra.mxu0 %v2910
        %v3263 = vpop.f32.mrf.mxu0
        %v3264 = vadd.f32 0.0, %v3263
        %3265 = vmatmul.f32.gmra.mxu0 %v2913
        %v3266 = vpop.f32.mrf.mxu0
        %v3267 = vadd.f32 0.0, %v3266
        %3268 = vdwg.mxu0
        %s3269 = scalar_lea.vmem %s9, 832
        %v3270 = vld [vmem:[%s3269] sm:$0xff]
        %v3271 = vld [vmem:[%s3269 + $0x8] sm:$0xff]
        %v3272 = vld [vmem:[%s3269 + $0x10] sm:$0xff]
        %v3273 = vld [vmem:[%s3269 + $0x18] sm:$0xff]
        %v3274 = vld [vmem:[%s3269 + $0x20] sm:$0xff]
        %v3275 = vld [vmem:[%s3269 + $0x28] sm:$0xff]
        %v3276 = vld [vmem:[%s3269 + $0x30] sm:$0xff]
        %v3277 = vld [vmem:[%s3269 + $0x38] sm:$0xff]
        %v3278 = vld [vmem:[%s3269 + $0x40] sm:$0xff]
        %v3279 = vld [vmem:[%s3269 + $0x48] sm:$0xff]
        %v3280 = vld [vmem:[%s3269 + $0x50] sm:$0xff]
        %v3281 = vld [vmem:[%s3269 + $0x58] sm:$0xff]
        %v3282 = vld [vmem:[%s3269 + $0x60] sm:$0xf]
        %v3284 = vsel %vm1894, %v3282, 0
        %3286 = vmatpush.msra.mxu0 0.0
        %3287 = vmatpush.msra.mxu0 0.0
        %3288 = vmatpush.msra.mxu0 0.0
        %3289 = vmatpush.msra.mxu0 %v3284
        %3290 = vmatpush.msra.mxu0 %v3281
        %3291 = vmatpush.msra.mxu0 %v3280
        %3292 = vmatpush.msra.mxu0 %v3279
        %3293 = vmatpush.msra.mxu0 %v3278
        %3294 = vmatpush.msra.mxu0 %v3277
        %3295 = vmatpush.msra.mxu0 %v3276
        %3296 = vmatpush.msra.mxu0 %v3275
        %3297 = vmatpush.msra.mxu0 %v3274
        %3298 = vmatpush.msra.mxu0 %v3273
        %3299 = vmatpush.msra.mxu0 %v3272
        %3300 = vmatpush.msra.mxu0 %v3271
        %3301 = vmatpush.msra.mxu0 %v3270
        %3302 = vmatmul.f32.gmra.mxu0 %v2904
        %v3303 = vpop.f32.mrf.mxu0
        %v3304 = vadd.f32 0.0, %v3303
        %3305 = vmatmul.f32.gmra.mxu0 %v2907
        %v3306 = vpop.f32.mrf.mxu0
        %v3307 = vadd.f32 0.0, %v3306
        %3308 = vmatmul.f32.gmra.mxu0 %v2910
        %v3309 = vpop.f32.mrf.mxu0
        %v3310 = vadd.f32 0.0, %v3309
        %3311 = vmatmul.f32.gmra.mxu0 %v2913
        %v3312 = vpop.f32.mrf.mxu0
        %v3313 = vadd.f32 0.0, %v3312
        %3314 = vdwg.mxu0
        %s3315 = scalar_lea.vmem %s9, 936
        %v3316 = vld [vmem:[%s3315] sm:$0xff]
        %v3317 = vld [vmem:[%s3315 + $0x8] sm:$0xff]
        %v3318 = vld [vmem:[%s3315 + $0x10] sm:$0xff]
        %v3319 = vld [vmem:[%s3315 + $0x18] sm:$0xff]
        %v3320 = vld [vmem:[%s3315 + $0x20] sm:$0xff]
        %v3321 = vld [vmem:[%s3315 + $0x28] sm:$0xff]
        %v3322 = vld [vmem:[%s3315 + $0x30] sm:$0xff]
        %v3323 = vld [vmem:[%s3315 + $0x38] sm:$0xff]
        %v3324 = vld [vmem:[%s3315 + $0x40] sm:$0xff]
        %v3325 = vld [vmem:[%s3315 + $0x48] sm:$0xff]
        %v3326 = vld [vmem:[%s3315 + $0x50] sm:$0xff]
        %v3327 = vld [vmem:[%s3315 + $0x58] sm:$0xff]
        %v3328 = vld [vmem:[%s3315 + $0x60] sm:$0xf]
        %v3330 = vsel %vm1894, %v3328, 0
        %3332 = vmatpush.msra.mxu0 0.0
        %3333 = vmatpush.msra.mxu0 0.0
        %3334 = vmatpush.msra.mxu0 0.0
        %3335 = vmatpush.msra.mxu0 %v3330
        %3336 = vmatpush.msra.mxu0 %v3327
        %3337 = vmatpush.msra.mxu0 %v3326
        %3338 = vmatpush.msra.mxu0 %v3325
        %3339 = vmatpush.msra.mxu0 %v3324
        %3340 = vmatpush.msra.mxu0 %v3323
        %3341 = vmatpush.msra.mxu0 %v3322
        %3342 = vmatpush.msra.mxu0 %v3321
        %3343 = vmatpush.msra.mxu0 %v3320
        %3344 = vmatpush.msra.mxu0 %v3319
        %3345 = vmatpush.msra.mxu0 %v3318
        %3346 = vmatpush.msra.mxu0 %v3317
        %3347 = vmatpush.msra.mxu0 %v3316
        %3348 = vmatmul.f32.gmra.mxu0 %v2904
        %v3349 = vpop.f32.mrf.mxu0
        %v3350 = vadd.f32 0.0, %v3349
        %3351 = vmatmul.f32.gmra.mxu0 %v2907
        %v3352 = vpop.f32.mrf.mxu0
        %v3353 = vadd.f32 0.0, %v3352
        %3354 = vmatmul.f32.gmra.mxu0 %v2910
        %v3355 = vpop.f32.mrf.mxu0
        %v3356 = vadd.f32 0.0, %v3355
        %3357 = vmatmul.f32.gmra.mxu0 %v2913
        %v3358 = vpop.f32.mrf.mxu0
        %v3359 = vadd.f32 0.0, %v3358
        %3360 = vdwg.mxu0
        %s3361 = scalar_lea.vmem %s9, 1040
        %v3362 = vld [vmem:[%s3361] sm:$0xff]
        %v3363 = vld [vmem:[%s3361 + $0x8] sm:$0xff]
        %v3364 = vld [vmem:[%s3361 + $0x10] sm:$0xff]
        %v3365 = vld [vmem:[%s3361 + $0x18] sm:$0xff]
        %v3366 = vld [vmem:[%s3361 + $0x20] sm:$0xff]
        %v3367 = vld [vmem:[%s3361 + $0x28] sm:$0xff]
        %v3368 = vld [vmem:[%s3361 + $0x30] sm:$0xff]
        %v3369 = vld [vmem:[%s3361 + $0x38] sm:$0xff]
        %v3370 = vld [vmem:[%s3361 + $0x40] sm:$0xff]
        %v3371 = vld [vmem:[%s3361 + $0x48] sm:$0xff]
        %v3372 = vld [vmem:[%s3361 + $0x50] sm:$0xff]
        %v3373 = vld [vmem:[%s3361 + $0x58] sm:$0xff]
        %v3374 = vld [vmem:[%s3361 + $0x60] sm:$0xf]
        %v3376 = vsel %vm1894, %v3374, 0
        %3378 = vmatpush.msra.mxu0 0.0
        %3379 = vmatpush.msra.mxu0 0.0
        %3380 = vmatpush.msra.mxu0 0.0
        %3381 = vmatpush.msra.mxu0 %v3376
        %3382 = vmatpush.msra.mxu0 %v3373
        %3383 = vmatpush.msra.mxu0 %v3372
        %3384 = vmatpush.msra.mxu0 %v3371
        %3385 = vmatpush.msra.mxu0 %v3370
        %3386 = vmatpush.msra.mxu0 %v3369
        %3387 = vmatpush.msra.mxu0 %v3368
        %3388 = vmatpush.msra.mxu0 %v3367
        %3389 = vmatpush.msra.mxu0 %v3366
        %3390 = vmatpush.msra.mxu0 %v3365
        %3391 = vmatpush.msra.mxu0 %v3364
        %3392 = vmatpush.msra.mxu0 %v3363
        %3393 = vmatpush.msra.mxu0 %v3362
        %3394 = vmatmul.f32.gmra.mxu0 %v2904
        %v3395 = vpop.f32.mrf.mxu0
        %v3396 = vadd.f32 0.0, %v3395
        %3397 = vmatmul.f32.gmra.mxu0 %v2907
        %v3398 = vpop.f32.mrf.mxu0
        %v3399 = vadd.f32 0.0, %v3398
        %3400 = vmatmul.f32.gmra.mxu0 %v2910
        %v3401 = vpop.f32.mrf.mxu0
        %v3402 = vadd.f32 0.0, %v3401
        %3403 = vmatmul.f32.gmra.mxu0 %v2913
        %v3404 = vpop.f32.mrf.mxu0
        %v3405 = vadd.f32 0.0, %v3404
        %3406 = vdwg.mxu0
        %s3407 = scalar_lea.vmem %s9, 1144
        %v3408 = vld [vmem:[%s3407] sm:$0xff]
        %v3409 = vld [vmem:[%s3407 + $0x8] sm:$0xff]
        %v3410 = vld [vmem:[%s3407 + $0x10] sm:$0xff]
        %v3411 = vld [vmem:[%s3407 + $0x18] sm:$0xff]
        %v3412 = vld [vmem:[%s3407 + $0x20] sm:$0xff]
        %v3413 = vld [vmem:[%s3407 + $0x28] sm:$0xff]
        %v3414 = vld [vmem:[%s3407 + $0x30] sm:$0xff]
        %v3415 = vld [vmem:[%s3407 + $0x38] sm:$0xff]
        %v3416 = vld [vmem:[%s3407 + $0x40] sm:$0xff]
        %v3417 = vld [vmem:[%s3407 + $0x48] sm:$0xff]
        %v3418 = vld [vmem:[%s3407 + $0x50] sm:$0xff]
        %v3419 = vld [vmem:[%s3407 + $0x58] sm:$0xff]
        %v3420 = vld [vmem:[%s3407 + $0x60] sm:$0xf]
        %v3422 = vsel %vm1894, %v3420, 0
        %3424 = vmatpush.msra.mxu0 0.0
        %3425 = vmatpush.msra.mxu0 0.0
        %3426 = vmatpush.msra.mxu0 0.0
        %3427 = vmatpush.msra.mxu0 %v3422
        %3428 = vmatpush.msra.mxu0 %v3419
        %3429 = vmatpush.msra.mxu0 %v3418
        %3430 = vmatpush.msra.mxu0 %v3417
        %3431 = vmatpush.msra.mxu0 %v3416
        %3432 = vmatpush.msra.mxu0 %v3415
        %3433 = vmatpush.msra.mxu0 %v3414
        %3434 = vmatpush.msra.mxu0 %v3413
        %3435 = vmatpush.msra.mxu0 %v3412
        %3436 = vmatpush.msra.mxu0 %v3411
        %3437 = vmatpush.msra.mxu0 %v3410
        %3438 = vmatpush.msra.mxu0 %v3409
        %3439 = vmatpush.msra.mxu0 %v3408
        %3440 = vmatmul.f32.gmra.mxu0 %v2904
        %v3441 = vpop.f32.mrf.mxu0
        %v3442 = vadd.f32 0.0, %v3441
        %3443 = vmatmul.f32.gmra.mxu0 %v2907
        %v3444 = vpop.f32.mrf.mxu0
        %v3445 = vadd.f32 0.0, %v3444
        %3446 = vmatmul.f32.gmra.mxu0 %v2910
        %v3447 = vpop.f32.mrf.mxu0
        %v3448 = vadd.f32 0.0, %v3447
        %3449 = vmatmul.f32.gmra.mxu0 %v2913
        %v3450 = vpop.f32.mrf.mxu0
        %v3451 = vadd.f32 0.0, %v3450
        %3452 = vdwg.mxu0
        %s3453 = scalar_lea.vmem %s9, 1248
        %v3454 = vld [vmem:[%s3453] sm:$0xff]
        %v3455 = vld [vmem:[%s3453 + $0x8] sm:$0xff]
        %v3456 = vld [vmem:[%s3453 + $0x10] sm:$0xff]
        %v3457 = vld [vmem:[%s3453 + $0x18] sm:$0xff]
        %v3458 = vld [vmem:[%s3453 + $0x20] sm:$0xff]
        %v3459 = vld [vmem:[%s3453 + $0x28] sm:$0xff]
        %v3460 = vld [vmem:[%s3453 + $0x30] sm:$0xff]
        %v3461 = vld [vmem:[%s3453 + $0x38] sm:$0xff]
        %v3462 = vld [vmem:[%s3453 + $0x40] sm:$0xff]
        %v3463 = vld [vmem:[%s3453 + $0x48] sm:$0xff]
        %v3464 = vld [vmem:[%s3453 + $0x50] sm:$0xff]
        %v3465 = vld [vmem:[%s3453 + $0x58] sm:$0xff]
        %v3466 = vld [vmem:[%s3453 + $0x60] sm:$0xf]
        %v3468 = vsel %vm1894, %v3466, 0
        %3470 = vmatpush.msra.mxu0 0.0
        %3471 = vmatpush.msra.mxu0 0.0
        %3472 = vmatpush.msra.mxu0 0.0
        %3473 = vmatpush.msra.mxu0 %v3468
        %3474 = vmatpush.msra.mxu0 %v3465
        %3475 = vmatpush.msra.mxu0 %v3464
        %3476 = vmatpush.msra.mxu0 %v3463
        %3477 = vmatpush.msra.mxu0 %v3462
        %3478 = vmatpush.msra.mxu0 %v3461
        %3479 = vmatpush.msra.mxu0 %v3460
        %3480 = vmatpush.msra.mxu0 %v3459
        %3481 = vmatpush.msra.mxu0 %v3458
        %3482 = vmatpush.msra.mxu0 %v3457
        %3483 = vmatpush.msra.mxu0 %v3456
        %3484 = vmatpush.msra.mxu0 %v3455
        %3485 = vmatpush.msra.mxu0 %v3454
        %3486 = vmatmul.f32.gmra.mxu0 %v2904
        %v3487 = vpop.f32.mrf.mxu0
        %v3488 = vadd.f32 0.0, %v3487
        %3489 = vmatmul.f32.gmra.mxu0 %v2907
        %v3490 = vpop.f32.mrf.mxu0
        %v3491 = vadd.f32 0.0, %v3490
        %3492 = vmatmul.f32.gmra.mxu0 %v2910
        %v3493 = vpop.f32.mrf.mxu0
        %v3494 = vadd.f32 0.0, %v3493
        %3495 = vmatmul.f32.gmra.mxu0 %v2913
        %v3496 = vpop.f32.mrf.mxu0
        %v3497 = vadd.f32 0.0, %v3496
        %3498 = vdwg.mxu0
        %s3499 = scalar_lea.vmem %s9, 1352
        %v3500 = vld [vmem:[%s3499] sm:$0xff]
        %v3501 = vld [vmem:[%s3499 + $0x8] sm:$0xff]
        %v3502 = vld [vmem:[%s3499 + $0x10] sm:$0xff]
        %v3503 = vld [vmem:[%s3499 + $0x18] sm:$0xff]
        %v3504 = vld [vmem:[%s3499 + $0x20] sm:$0xff]
        %v3505 = vld [vmem:[%s3499 + $0x28] sm:$0xff]
        %v3506 = vld [vmem:[%s3499 + $0x30] sm:$0xff]
        %v3507 = vld [vmem:[%s3499 + $0x38] sm:$0xff]
        %v3508 = vld [vmem:[%s3499 + $0x40] sm:$0xff]
        %v3509 = vld [vmem:[%s3499 + $0x48] sm:$0xff]
        %v3510 = vld [vmem:[%s3499 + $0x50] sm:$0xff]
        %v3511 = vld [vmem:[%s3499 + $0x58] sm:$0xff]
        %v3512 = vld [vmem:[%s3499 + $0x60] sm:$0xf]
        %v3514 = vsel %vm1894, %v3512, 0
        %3516 = vmatpush.msra.mxu0 0.0
        %3517 = vmatpush.msra.mxu0 0.0
        %3518 = vmatpush.msra.mxu0 0.0
        %3519 = vmatpush.msra.mxu0 %v3514
        %3520 = vmatpush.msra.mxu0 %v3511
        %3521 = vmatpush.msra.mxu0 %v3510
        %3522 = vmatpush.msra.mxu0 %v3509
        %3523 = vmatpush.msra.mxu0 %v3508
        %3524 = vmatpush.msra.mxu0 %v3507
        %3525 = vmatpush.msra.mxu0 %v3506
        %3526 = vmatpush.msra.mxu0 %v3505
        %3527 = vmatpush.msra.mxu0 %v3504
        %3528 = vmatpush.msra.mxu0 %v3503
        %3529 = vmatpush.msra.mxu0 %v3502
        %3530 = vmatpush.msra.mxu0 %v3501
        %3531 = vmatpush.msra.mxu0 %v3500
        %3532 = vmatmul.f32.gmra.mxu0 %v2904
        %v3533 = vpop.f32.mrf.mxu0
        %v3534 = vadd.f32 0.0, %v3533
        %3535 = vmatmul.f32.gmra.mxu0 %v2907
        %v3536 = vpop.f32.mrf.mxu0
        %v3537 = vadd.f32 0.0, %v3536
        %3538 = vmatmul.f32.gmra.mxu0 %v2910
        %v3539 = vpop.f32.mrf.mxu0
        %v3540 = vadd.f32 0.0, %v3539
        %3541 = vmatmul.f32.gmra.mxu0 %v2913
        %v3542 = vpop.f32.mrf.mxu0
        %v3543 = vadd.f32 0.0, %v3542
        %3544 = vdwg.mxu0
        %s3545 = scalar_lea.vmem %s9, 1456
        %v3546 = vld [vmem:[%s3545] sm:$0xff]
        %v3547 = vld [vmem:[%s3545 + $0x8] sm:$0xff]
        %v3548 = vld [vmem:[%s3545 + $0x10] sm:$0xff]
        %v3549 = vld [vmem:[%s3545 + $0x18] sm:$0xff]
        %v3550 = vld [vmem:[%s3545 + $0x20] sm:$0xff]
        %v3551 = vld [vmem:[%s3545 + $0x28] sm:$0xff]
        %v3552 = vld [vmem:[%s3545 + $0x30] sm:$0xff]
        %v3553 = vld [vmem:[%s3545 + $0x38] sm:$0xff]
        %v3554 = vld [vmem:[%s3545 + $0x40] sm:$0xff]
        %v3555 = vld [vmem:[%s3545 + $0x48] sm:$0xff]
        %v3556 = vld [vmem:[%s3545 + $0x50] sm:$0xff]
        %v3557 = vld [vmem:[%s3545 + $0x58] sm:$0xff]
        %v3558 = vld [vmem:[%s3545 + $0x60] sm:$0xf]
        %v3560 = vsel %vm1894, %v3558, 0
        %3562 = vmatpush.msra.mxu0 0.0
        %3563 = vmatpush.msra.mxu0 0.0
        %3564 = vmatpush.msra.mxu0 0.0
        %3565 = vmatpush.msra.mxu0 %v3560
        %3566 = vmatpush.msra.mxu0 %v3557
        %3567 = vmatpush.msra.mxu0 %v3556
        %3568 = vmatpush.msra.mxu0 %v3555
        %3569 = vmatpush.msra.mxu0 %v3554
        %3570 = vmatpush.msra.mxu0 %v3553
        %3571 = vmatpush.msra.mxu0 %v3552
        %3572 = vmatpush.msra.mxu0 %v3551
        %3573 = vmatpush.msra.mxu0 %v3550
        %3574 = vmatpush.msra.mxu0 %v3549
        %3575 = vmatpush.msra.mxu0 %v3548
        %3576 = vmatpush.msra.mxu0 %v3547
        %3577 = vmatpush.msra.mxu0 %v3546
        %3578 = vmatmul.f32.gmra.mxu0 %v2904
        %v3579 = vpop.f32.mrf.mxu0
        %v3580 = vadd.f32 0.0, %v3579
        %3581 = vmatmul.f32.gmra.mxu0 %v2907
        %v3582 = vpop.f32.mrf.mxu0
        %v3583 = vadd.f32 0.0, %v3582
        %3584 = vmatmul.f32.gmra.mxu0 %v2910
        %v3585 = vpop.f32.mrf.mxu0
        %v3586 = vadd.f32 0.0, %v3585
        %3587 = vmatmul.f32.gmra.mxu0 %v2913
        %v3588 = vpop.f32.mrf.mxu0
        %v3589 = vadd.f32 0.0, %v3588
        %3590 = vdwg.mxu0
        %s3591 = scalar_lea.vmem %s9, 1560
        %v3592 = vld [vmem:[%s3591] sm:$0xff]
        %v3593 = vld [vmem:[%s3591 + $0x8] sm:$0xff]
        %v3594 = vld [vmem:[%s3591 + $0x10] sm:$0xff]
        %v3595 = vld [vmem:[%s3591 + $0x18] sm:$0xff]
        %v3596 = vld [vmem:[%s3591 + $0x20] sm:$0xff]
        %v3597 = vld [vmem:[%s3591 + $0x28] sm:$0xff]
        %v3598 = vld [vmem:[%s3591 + $0x30] sm:$0xff]
        %v3599 = vld [vmem:[%s3591 + $0x38] sm:$0xff]
        %v3600 = vld [vmem:[%s3591 + $0x40] sm:$0xff]
        %v3601 = vld [vmem:[%s3591 + $0x48] sm:$0xff]
        %v3602 = vld [vmem:[%s3591 + $0x50] sm:$0xff]
        %v3603 = vld [vmem:[%s3591 + $0x58] sm:$0xff]
        %v3604 = vld [vmem:[%s3591 + $0x60] sm:$0xf]
        %v3606 = vsel %vm1894, %v3604, 0
        %3608 = vmatpush.msra.mxu0 0.0
        %3609 = vmatpush.msra.mxu0 0.0
        %3610 = vmatpush.msra.mxu0 0.0
        %3611 = vmatpush.msra.mxu0 %v3606
        %3612 = vmatpush.msra.mxu0 %v3603
        %3613 = vmatpush.msra.mxu0 %v3602
        %3614 = vmatpush.msra.mxu0 %v3601
        %3615 = vmatpush.msra.mxu0 %v3600
        %3616 = vmatpush.msra.mxu0 %v3599
        %3617 = vmatpush.msra.mxu0 %v3598
        %3618 = vmatpush.msra.mxu0 %v3597
        %3619 = vmatpush.msra.mxu0 %v3596
        %3620 = vmatpush.msra.mxu0 %v3595
        %3621 = vmatpush.msra.mxu0 %v3594
        %3622 = vmatpush.msra.mxu0 %v3593
        %3623 = vmatpush.msra.mxu0 %v3592
        %3624 = vmatmul.f32.gmra.mxu0 %v2904
        %v3625 = vpop.f32.mrf.mxu0
        %v3626 = vadd.f32 0.0, %v3625
        %3627 = vmatmul.f32.gmra.mxu0 %v2907
        %v3628 = vpop.f32.mrf.mxu0
        %v3629 = vadd.f32 0.0, %v3628
        %3630 = vmatmul.f32.gmra.mxu0 %v2910
        %v3631 = vpop.f32.mrf.mxu0
        %v3632 = vadd.f32 0.0, %v3631
        %3633 = vmatmul.f32.gmra.mxu0 %v2913
        %v3634 = vpop.f32.mrf.mxu0
        %v3635 = vadd.f32 0.0, %v3634
        %3636 = vdwg.mxu0
        %v3637 = vld [vmem:[%s10] sm:$0xff]
        %v3638 = vld [vmem:[%s10 + $0x8] sm:$0xff]
        %v3639 = vld [vmem:[%s10 + $0x10] sm:$0xff]
        %v3640 = vld [vmem:[%s10 + $0x18] sm:$0xff]
        %v3641 = vld [vmem:[%s10 + $0x20] sm:$0xff]
        %v3642 = vld [vmem:[%s10 + $0x28] sm:$0xff]
        %v3643 = vld [vmem:[%s10 + $0x30] sm:$0xff]
        %v3644 = vld [vmem:[%s10 + $0x38] sm:$0xff]
        %v3645 = vld [vmem:[%s10 + $0x40] sm:$0xff]
        %v3646 = vld [vmem:[%s10 + $0x48] sm:$0xff]
        %v3647 = vld [vmem:[%s10 + $0x50] sm:$0xff]
        %v3648 = vld [vmem:[%s10 + $0x58] sm:$0xff]
        %v3649 = vld [vmem:[%s10 + $0x60] sm:$0xff]
        %v3650 = vld [vmem:[%s10 + $0x68] sm:$0xff]
        %v3651 = vld [vmem:[%s10 + $0x70] sm:$0xff]
        %v3652 = vld [vmem:[%s10 + $0x78] sm:$0xff]
        %v3653 = vld [vmem:[%s10 + $0x80] sm:$0xff]
        %v3654 = vld [vmem:[%s10 + $0x88] sm:$0xff]
        %v3655 = vld [vmem:[%s10 + $0x90] sm:$0xff]
        %v3656 = vld [vmem:[%s10 + $0x98] sm:$0xff]
        %v3657 = vld [vmem:[%s10 + $0xa0] sm:$0xff]
        %v3658 = vld [vmem:[%s10 + $0xa8] sm:$0xff]
        %v3659 = vld [vmem:[%s10 + $0xb0] sm:$0xff]
        %v3660 = vld [vmem:[%s10 + $0xb8] sm:$0xff]
        %v3661 = vld [vmem:[%s10 + $0xc0] sm:$0xff]
        %v3662 = vld [vmem:[%s10 + $0xc8] sm:$0xff]
        %v3663 = vld [vmem:[%s10 + $0xd0] sm:$0xff]
        %v3664 = vld [vmem:[%s10 + $0xd8] sm:$0xff]
        %v3665 = vld [vmem:[%s10 + $0xe0] sm:$0xff]
        %v3666 = vld [vmem:[%s10 + $0xe8] sm:$0xff]
        %v3667 = vld [vmem:[%s10 + $0xf0] sm:$0xff]
        %v3668 = vld [vmem:[%s10 + $0xf8] sm:$0xff]
        %v3669 = vld [vmem:[%s10 + $0x100] sm:$0xff]
        %v3670 = vld [vmem:[%s10 + $0x108] sm:$0xff]
        %v3671 = vld [vmem:[%s10 + $0x110] sm:$0xff]
        %v3672 = vld [vmem:[%s10 + $0x118] sm:$0xff]
        %v3673 = vld [vmem:[%s10 + $0x120] sm:$0xff]
        %v3674 = vld [vmem:[%s10 + $0x128] sm:$0xff]
        %v3675 = vld [vmem:[%s10 + $0x130] sm:$0xff]
        %v3676 = vld [vmem:[%s10 + $0x138] sm:$0xff]
        %v3677 = vld [vmem:[%s10 + $0x140] sm:$0xff]
        %v3678 = vld [vmem:[%s10 + $0x148] sm:$0xff]
        %v3679 = vld [vmem:[%s10 + $0x150] sm:$0xff]
        %v3680 = vld [vmem:[%s10 + $0x158] sm:$0xff]
        %v3681 = vld [vmem:[%s10 + $0x160] sm:$0xff]
        %v3682 = vld [vmem:[%s10 + $0x168] sm:$0xff]
        %v3683 = vld [vmem:[%s10 + $0x170] sm:$0xff]
        %v3684 = vld [vmem:[%s10 + $0x178] sm:$0xff]
        %v3685 = vld [vmem:[%s10 + $0x180] sm:$0xff]
        %v3686 = vld [vmem:[%s10 + $0x188] sm:$0xff]
        %v3687 = vld [vmem:[%s10 + $0x190] sm:$0xff]
        %v3688 = vld [vmem:[%s10 + $0x198] sm:$0xff]
        %v3689 = vld [vmem:[%s10 + $0x1a0] sm:$0xff]
        %v3690 = vld [vmem:[%s10 + $0x1a8] sm:$0xff]
        %v3691 = vld [vmem:[%s10 + $0x1b0] sm:$0xff]
        %v3692 = vld [vmem:[%s10 + $0x1b8] sm:$0xff]
        %v3693 = vld [vmem:[%s10 + $0x1c0] sm:$0xff]
        %v3694 = vld [vmem:[%s10 + $0x1c8] sm:$0xff]
        %v3695 = vld [vmem:[%s10 + $0x1d0] sm:$0xff]
        %v3696 = vld [vmem:[%s10 + $0x1d8] sm:$0xff]
        %v3697 = vld [vmem:[%s10 + $0x1e0] sm:$0xff]
        %v3698 = vld [vmem:[%s10 + $0x1e8] sm:$0xff]
        %v3699 = vld [vmem:[%s10 + $0x1f0] sm:$0xff]
        %v3700 = vld [vmem:[%s10 + $0x1f8] sm:$0xff]
        %v3701 = vld [vmem:[%s11] sm:$0xff]
        %v3702 = vld [vmem:[%s11 + $0x8] sm:$0xff]
        %v3703 = vld [vmem:[%s11 + $0x10] sm:$0xff]
        %v3704 = vld [vmem:[%s11 + $0x18] sm:$0xff]
        %v3705 = vld [vmem:[%s11 + $0x20] sm:$0xff]
        %v3706 = vld [vmem:[%s11 + $0x28] sm:$0xff]
        %v3707 = vld [vmem:[%s11 + $0x30] sm:$0xff]
        %v3708 = vld [vmem:[%s11 + $0x38] sm:$0xff]
        %v3709 = vld [vmem:[%s11 + $0x40] sm:$0xff]
        %v3710 = vld [vmem:[%s11 + $0x48] sm:$0xff]
        %v3711 = vld [vmem:[%s11 + $0x50] sm:$0xff]
        %v3712 = vld [vmem:[%s11 + $0x58] sm:$0xff]
        %v3713 = vld [vmem:[%s11 + $0x60] sm:$0xff]
        %v3714 = vld [vmem:[%s11 + $0x68] sm:$0xff]
        %v3715 = vld [vmem:[%s11 + $0x70] sm:$0xff]
        %v3716 = vld [vmem:[%s11 + $0x78] sm:$0xff]
        %3717 = vmatpush.msra.mxu0 %v3083
        %3718 = vmatpush.msra.mxu0 %v3080
        %3719 = vmatpush.msra.mxu0 %v3077
        %3720 = vmatpush.msra.mxu0 %v3074
        %3721 = vmatpush.msra.mxu0 %v3037
        %3722 = vmatpush.msra.mxu0 %v3034
        %3723 = vmatpush.msra.mxu0 %v3031
        %3724 = vmatpush.msra.mxu0 %v3028
        %3725 = vmatpush.msra.mxu0 %v2991
        %3726 = vmatpush.msra.mxu0 %v2988
        %3727 = vmatpush.msra.mxu0 %v2985
        %3728 = vmatpush.msra.mxu0 %v2982
        %3729 = vmatpush.msra.mxu0 %v2945
        %3730 = vmatpush.msra.mxu0 %v2942
        %3731 = vmatpush.msra.mxu0 %v2939
        %3732 = vmatpush.msra.mxu0 %v2936
        %3733 = vmatmul.f32.gmra.mxu0 %v3637
        %v3734 = vpop.f32.mrf.mxu0
        %v3735 = vadd.f32 %v3701, %v3734
        %3736 = vmatmul.f32.gmra.mxu0 %v3641
        %v3737 = vpop.f32.mrf.mxu0
        %v3738 = vadd.f32 %v3702, %v3737
        %3739 = vmatmul.f32.gmra.mxu0 %v3645
        %v3740 = vpop.f32.mrf.mxu0
        %v3741 = vadd.f32 %v3703, %v3740
        %3742 = vmatmul.f32.gmra.mxu0 %v3649
        %v3743 = vpop.f32.mrf.mxu0
        %v3744 = vadd.f32 %v3704, %v3743
        %3745 = vmatmul.f32.gmra.mxu0 %v3653
        %v3746 = vpop.f32.mrf.mxu0
        %v3747 = vadd.f32 %v3705, %v3746
        %3748 = vmatmul.f32.gmra.mxu0 %v3657
        %v3749 = vpop.f32.mrf.mxu0
        %v3750 = vadd.f32 %v3706, %v3749
        %3751 = vmatmul.f32.gmra.mxu0 %v3661
        %v3752 = vpop.f32.mrf.mxu0
        %v3753 = vadd.f32 %v3707, %v3752
        %3754 = vmatmul.f32.gmra.mxu0 %v3665
        %v3755 = vpop.f32.mrf.mxu0
        %v3756 = vadd.f32 %v3708, %v3755
        %3757 = vmatmul.f32.gmra.mxu0 %v3669
        %v3758 = vpop.f32.mrf.mxu0
        %v3759 = vadd.f32 %v3709, %v3758
        %3760 = vmatmul.f32.gmra.mxu0 %v3673
        %v3761 = vpop.f32.mrf.mxu0
        %v3762 = vadd.f32 %v3710, %v3761
        %3763 = vmatmul.f32.gmra.mxu0 %v3677
        %v3764 = vpop.f32.mrf.mxu0
        %v3765 = vadd.f32 %v3711, %v3764
        %3766 = vmatmul.f32.gmra.mxu0 %v3681
        %v3767 = vpop.f32.mrf.mxu0
        %v3768 = vadd.f32 %v3712, %v3767
        %3769 = vmatmul.f32.gmra.mxu0 %v3685
        %v3770 = vpop.f32.mrf.mxu0
        %v3771 = vadd.f32 %v3713, %v3770
        %3772 = vmatmul.f32.gmra.mxu0 %v3689
        %v3773 = vpop.f32.mrf.mxu0
        %v3774 = vadd.f32 %v3714, %v3773
        %3775 = vmatmul.f32.gmra.mxu0 %v3693
        %v3776 = vpop.f32.mrf.mxu0
        %v3777 = vadd.f32 %v3715, %v3776
        %3778 = vmatmul.f32.gmra.mxu0 %v3697
        %v3779 = vpop.f32.mrf.mxu0
        %v3780 = vadd.f32 %v3716, %v3779
        %3781 = vdwg.mxu0
        %3782 = vmatpush.msra.mxu0 %v3267
        %3783 = vmatpush.msra.mxu0 %v3264
        %3784 = vmatpush.msra.mxu0 %v3261
        %3785 = vmatpush.msra.mxu0 %v3258
        %3786 = vmatpush.msra.mxu0 %v3221
        %3787 = vmatpush.msra.mxu0 %v3218
        %3788 = vmatpush.msra.mxu0 %v3215
        %3789 = vmatpush.msra.mxu0 %v3212
        %3790 = vmatpush.msra.mxu0 %v3175
        %3791 = vmatpush.msra.mxu0 %v3172
        %3792 = vmatpush.msra.mxu0 %v3169
        %3793 = vmatpush.msra.mxu0 %v3166
        %3794 = vmatpush.msra.mxu0 %v3129
        %3795 = vmatpush.msra.mxu0 %v3126
        %3796 = vmatpush.msra.mxu0 %v3123
        %3797 = vmatpush.msra.mxu0 %v3120
        %3798 = vmatmul.f32.gmra.mxu0 %v3638
        %v3799 = vpop.f32.mrf.mxu0
        %v3800 = vadd.f32 %v3735, %v3799
        %3801 = vmatmul.f32.gmra.mxu0 %v3642
        %v3802 = vpop.f32.mrf.mxu0
        %v3803 = vadd.f32 %v3738, %v3802
        %3804 = vmatmul.f32.gmra.mxu0 %v3646
        %v3805 = vpop.f32.mrf.mxu0
        %v3806 = vadd.f32 %v3741, %v3805
        %3807 = vmatmul.f32.gmra.mxu0 %v3650
        %v3808 = vpop.f32.mrf.mxu0
        %v3809 = vadd.f32 %v3744, %v3808
        %3810 = vmatmul.f32.gmra.mxu0 %v3654
        %v3811 = vpop.f32.mrf.mxu0
        %v3812 = vadd.f32 %v3747, %v3811
        %3813 = vmatmul.f32.gmra.mxu0 %v3658
        %v3814 = vpop.f32.mrf.mxu0
        %v3815 = vadd.f32 %v3750, %v3814
        %3816 = vmatmul.f32.gmra.mxu0 %v3662
        %v3817 = vpop.f32.mrf.mxu0
        %v3818 = vadd.f32 %v3753, %v3817
        %3819 = vmatmul.f32.gmra.mxu0 %v3666
        %v3820 = vpop.f32.mrf.mxu0
        %v3821 = vadd.f32 %v3756, %v3820
        %3822 = vmatmul.f32.gmra.mxu0 %v3670
        %v3823 = vpop.f32.mrf.mxu0
        %v3824 = vadd.f32 %v3759, %v3823
        %3825 = vmatmul.f32.gmra.mxu0 %v3674
        %v3826 = vpop.f32.mrf.mxu0
        %v3827 = vadd.f32 %v3762, %v3826
        %3828 = vmatmul.f32.gmra.mxu0 %v3678
        %v3829 = vpop.f32.mrf.mxu0
        %v3830 = vadd.f32 %v3765, %v3829
        %3831 = vmatmul.f32.gmra.mxu0 %v3682
        %v3832 = vpop.f32.mrf.mxu0
        %v3833 = vadd.f32 %v3768, %v3832
        %3834 = vmatmul.f32.gmra.mxu0 %v3686
        %v3835 = vpop.f32.mrf.mxu0
        %v3836 = vadd.f32 %v3771, %v3835
        %3837 = vmatmul.f32.gmra.mxu0 %v3690
        %v3838 = vpop.f32.mrf.mxu0
        %v3839 = vadd.f32 %v3774, %v3838
        %3840 = vmatmul.f32.gmra.mxu0 %v3694
        %v3841 = vpop.f32.mrf.mxu0
        %v3842 = vadd.f32 %v3777, %v3841
        %3843 = vmatmul.f32.gmra.mxu0 %v3698
        %v3844 = vpop.f32.mrf.mxu0
        %v3845 = vadd.f32 %v3780, %v3844
        %3846 = vdwg.mxu0
        %3847 = vmatpush.msra.mxu0 %v3451
        %3848 = vmatpush.msra.mxu0 %v3448
        %3849 = vmatpush.msra.mxu0 %v3445
        %3850 = vmatpush.msra.mxu0 %v3442
        %3851 = vmatpush.msra.mxu0 %v3405
        %3852 = vmatpush.msra.mxu0 %v3402
        %3853 = vmatpush.msra.mxu0 %v3399
        %3854 = vmatpush.msra.mxu0 %v3396
        %3855 = vmatpush.msra.mxu0 %v3359
        %3856 = vmatpush.msra.mxu0 %v3356
        %3857 = vmatpush.msra.mxu0 %v3353
        %3858 = vmatpush.msra.mxu0 %v3350
        %3859 = vmatpush.msra.mxu0 %v3313
        %3860 = vmatpush.msra.mxu0 %v3310
        %3861 = vmatpush.msra.mxu0 %v3307
        %3862 = vmatpush.msra.mxu0 %v3304
        %3863 = vmatmul.f32.gmra.mxu0 %v3639
        %v3864 = vpop.f32.mrf.mxu0
        %v3865 = vadd.f32 %v3800, %v3864
        %3866 = vmatmul.f32.gmra.mxu0 %v3643
        %v3867 = vpop.f32.mrf.mxu0
        %v3868 = vadd.f32 %v3803, %v3867
        %3869 = vmatmul.f32.gmra.mxu0 %v3647
        %v3870 = vpop.f32.mrf.mxu0
        %v3871 = vadd.f32 %v3806, %v3870
        %3872 = vmatmul.f32.gmra.mxu0 %v3651
        %v3873 = vpop.f32.mrf.mxu0
        %v3874 = vadd.f32 %v3809, %v3873
        %3875 = vmatmul.f32.gmra.mxu0 %v3655
        %v3876 = vpop.f32.mrf.mxu0
        %v3877 = vadd.f32 %v3812, %v3876
        %3878 = vmatmul.f32.gmra.mxu0 %v3659
        %v3879 = vpop.f32.mrf.mxu0
        %v3880 = vadd.f32 %v3815, %v3879
        %3881 = vmatmul.f32.gmra.mxu0 %v3663
        %v3882 = vpop.f32.mrf.mxu0
        %v3883 = vadd.f32 %v3818, %v3882
        %3884 = vmatmul.f32.gmra.mxu0 %v3667
        %v3885 = vpop.f32.mrf.mxu0
        %v3886 = vadd.f32 %v3821, %v3885
        %3887 = vmatmul.f32.gmra.mxu0 %v3671
        %v3888 = vpop.f32.mrf.mxu0
        %v3889 = vadd.f32 %v3824, %v3888
        %3890 = vmatmul.f32.gmra.mxu0 %v3675
        %v3891 = vpop.f32.mrf.mxu0
        %v3892 = vadd.f32 %v3827, %v3891
        %3893 = vmatmul.f32.gmra.mxu0 %v3679
        %v3894 = vpop.f32.mrf.mxu0
        %v3895 = vadd.f32 %v3830, %v3894
        %3896 = vmatmul.f32.gmra.mxu0 %v3683
        %v3897 = vpop.f32.mrf.mxu0
        %v3898 = vadd.f32 %v3833, %v3897
        %3899 = vmatmul.f32.gmra.mxu0 %v3687
        %v3900 = vpop.f32.mrf.mxu0
        %v3901 = vadd.f32 %v3836, %v3900
        %3902 = vmatmul.f32.gmra.mxu0 %v3691
        %v3903 = vpop.f32.mrf.mxu0
        %v3904 = vadd.f32 %v3839, %v3903
        %3905 = vmatmul.f32.gmra.mxu0 %v3695
        %v3906 = vpop.f32.mrf.mxu0
        %v3907 = vadd.f32 %v3842, %v3906
        %3908 = vmatmul.f32.gmra.mxu0 %v3699
        %v3909 = vpop.f32.mrf.mxu0
        %v3910 = vadd.f32 %v3845, %v3909
        %3911 = vdwg.mxu0
        %3912 = vmatpush.msra.mxu0 %v3635
        %3913 = vmatpush.msra.mxu0 %v3632
        %3914 = vmatpush.msra.mxu0 %v3629
        %3915 = vmatpush.msra.mxu0 %v3626
        %3916 = vmatpush.msra.mxu0 %v3589
        %3917 = vmatpush.msra.mxu0 %v3586
        %3918 = vmatpush.msra.mxu0 %v3583
        %3919 = vmatpush.msra.mxu0 %v3580
        %3920 = vmatpush.msra.mxu0 %v3543
        %3921 = vmatpush.msra.mxu0 %v3540
        %3922 = vmatpush.msra.mxu0 %v3537
        %3923 = vmatpush.msra.mxu0 %v3534
        %3924 = vmatpush.msra.mxu0 %v3497
        %3925 = vmatpush.msra.mxu0 %v3494
        %3926 = vmatpush.msra.mxu0 %v3491
        %3927 = vmatpush.msra.mxu0 %v3488
        %3928 = vmatmul.f32.gmra.mxu0 %v3640
        %v3929 = vpop.f32.mrf.mxu0
        %v3930 = vadd.f32 %v3865, %v3929
        %3931 = vmatmul.f32.gmra.mxu0 %v3644
        %v3932 = vpop.f32.mrf.mxu0
        %v3933 = vadd.f32 %v3868, %v3932
        %3934 = vmatmul.f32.gmra.mxu0 %v3648
        %v3935 = vpop.f32.mrf.mxu0
        %v3936 = vadd.f32 %v3871, %v3935
        %3937 = vmatmul.f32.gmra.mxu0 %v3652
        %v3938 = vpop.f32.mrf.mxu0
        %v3939 = vadd.f32 %v3874, %v3938
        %3940 = vmatmul.f32.gmra.mxu0 %v3656
        %v3941 = vpop.f32.mrf.mxu0
        %v3942 = vadd.f32 %v3877, %v3941
        %3943 = vmatmul.f32.gmra.mxu0 %v3660
        %v3944 = vpop.f32.mrf.mxu0
        %v3945 = vadd.f32 %v3880, %v3944
        %3946 = vmatmul.f32.gmra.mxu0 %v3664
        %v3947 = vpop.f32.mrf.mxu0
        %v3948 = vadd.f32 %v3883, %v3947
        %3949 = vmatmul.f32.gmra.mxu0 %v3668
        %v3950 = vpop.f32.mrf.mxu0
        %v3951 = vadd.f32 %v3886, %v3950
        %3952 = vmatmul.f32.gmra.mxu0 %v3672
        %v3953 = vpop.f32.mrf.mxu0
        %v3954 = vadd.f32 %v3889, %v3953
        %3955 = vmatmul.f32.gmra.mxu0 %v3676
        %v3956 = vpop.f32.mrf.mxu0
        %v3957 = vadd.f32 %v3892, %v3956
        %3958 = vmatmul.f32.gmra.mxu0 %v3680
        %v3959 = vpop.f32.mrf.mxu0
        %v3960 = vadd.f32 %v3895, %v3959
        %3961 = vmatmul.f32.gmra.mxu0 %v3684
        %v3962 = vpop.f32.mrf.mxu0
        %v3963 = vadd.f32 %v3898, %v3962
        %3964 = vmatmul.f32.gmra.mxu0 %v3688
        %v3965 = vpop.f32.mrf.mxu0
        %v3966 = vadd.f32 %v3901, %v3965
        %3967 = vmatmul.f32.gmra.mxu0 %v3692
        %v3968 = vpop.f32.mrf.mxu0
        %v3969 = vadd.f32 %v3904, %v3968
        %3970 = vmatmul.f32.gmra.mxu0 %v3696
        %v3971 = vpop.f32.mrf.mxu0
        %v3972 = vadd.f32 %v3907, %v3971
        %3973 = vmatmul.f32.gmra.mxu0 %v3700
        %v3974 = vpop.f32.mrf.mxu0
        %v3975 = vadd.f32 %v3910, %v3974
        %3976 = vdwg.mxu0
        %v3977 = vmax.f32 %v3930, 0.0
        %v3978 = vmax.f32 %v3933, 0.0
        %v3979 = vmax.f32 %v3936, 0.0
        %v3980 = vmax.f32 %v3939, 0.0
        %v3981 = vmax.f32 %v3942, 0.0
        %v3982 = vmax.f32 %v3945, 0.0
        %v3983 = vmax.f32 %v3948, 0.0
        %v3984 = vmax.f32 %v3951, 0.0
        %v3985 = vmax.f32 %v3954, 0.0
        %v3986 = vmax.f32 %v3957, 0.0
        %v3987 = vmax.f32 %v3960, 0.0
        %v3988 = vmax.f32 %v3963, 0.0
        %v3989 = vmax.f32 %v3966, 0.0
        %v3990 = vmax.f32 %v3969, 0.0
        %v3991 = vmax.f32 %v3972, 0.0
        %v3992 = vmax.f32 %v3975, 0.0
        %v3993 = vld [vmem:[%s12] sm:$0xff]
        %v3994 = vld [vmem:[%s12 + $0x8] sm:$0xff]
        %v3995 = vld [vmem:[%s12 + $0x10] sm:$0xff]
        %v3996 = vld [vmem:[%s12 + $0x18] sm:$0xff]
        %v3997 = vld [vmem:[%s12 + $0x20] sm:$0xff]
        %v3998 = vld [vmem:[%s12 + $0x28] sm:$0xff]
        %v3999 = vld [vmem:[%s12 + $0x30] sm:$0xff]
        %v4000 = vld [vmem:[%s12 + $0x38] sm:$0xff]
        %v4001 = vld [vmem:[%s13] sm:$0xff]
        %v4002 = vld [vmem:[%s13 + $0x8] sm:$0xff]
        %v4003 = vld [vmem:[%s13 + $0x10] sm:$0xff]
        %v4004 = vld [vmem:[%s13 + $0x18] sm:$0xff]
        %v4005 = vld [vmem:[%s13 + $0x20] sm:$0xff]
        %v4006 = vld [vmem:[%s13 + $0x28] sm:$0xff]
        %v4007 = vld [vmem:[%s13 + $0x30] sm:$0xff]
        %v4008 = vld [vmem:[%s13 + $0x38] sm:$0xff]
        %4009 = vmatpush.msra.mxu0 %v3992
        %4010 = vmatpush.msra.mxu0 %v3991
        %4011 = vmatpush.msra.mxu0 %v3990
        %4012 = vmatpush.msra.mxu0 %v3989
        %4013 = vmatpush.msra.mxu0 %v3988
        %4014 = vmatpush.msra.mxu0 %v3987
        %4015 = vmatpush.msra.mxu0 %v3986
        %4016 = vmatpush.msra.mxu0 %v3985
        %4017 = vmatpush.msra.mxu0 %v3984
        %4018 = vmatpush.msra.mxu0 %v3983
        %4019 = vmatpush.msra.mxu0 %v3982
        %4020 = vmatpush.msra.mxu0 %v3981
        %4021 = vmatpush.msra.mxu0 %v3980
        %4022 = vmatpush.msra.mxu0 %v3979
        %4023 = vmatpush.msra.mxu0 %v3978
        %4024 = vmatpush.msra.mxu0 %v3977
        %4025 = vmatmul.f32.gmra.mxu0 %v3993
        %v4026 = vpop.f32.mrf.mxu0
        %v4027 = vadd.f32 %v4001, %v4026
        %4028 = vmatmul.f32.gmra.mxu0 %v3994
        %v4029 = vpop.f32.mrf.mxu0
        %v4030 = vadd.f32 %v4002, %v4029
        %4031 = vmatmul.f32.gmra.mxu0 %v3995
        %v4032 = vpop.f32.mrf.mxu0
        %v4033 = vadd.f32 %v4003, %v4032
        %4034 = vmatmul.f32.gmra.mxu0 %v3996
        %v4035 = vpop.f32.mrf.mxu0
        %v4036 = vadd.f32 %v4004, %v4035
        %4037 = vmatmul.f32.gmra.mxu0 %v3997
        %v4038 = vpop.f32.mrf.mxu0
        %v4039 = vadd.f32 %v4005, %v4038
        %4040 = vmatmul.f32.gmra.mxu0 %v3998
        %v4041 = vpop.f32.mrf.mxu0
        %v4042 = vadd.f32 %v4006, %v4041
        %4043 = vmatmul.f32.gmra.mxu0 %v3999
        %v4044 = vpop.f32.mrf.mxu0
        %v4045 = vadd.f32 %v4007, %v4044
        %4046 = vmatmul.f32.gmra.mxu0 %v4000
        %v4047 = vpop.f32.mrf.mxu0
        %v4048 = vadd.f32 %v4008, %v4047
        %4049 = vdwg.mxu0
        %v4050 = vmax.f32 %v4027, 0.0
        %v4051 = vmax.f32 %v4030, 0.0
        %v4052 = vmax.f32 %v4033, 0.0
        %v4053 = vmax.f32 %v4036, 0.0
        %v4054 = vmax.f32 %v4039, 0.0
        %v4055 = vmax.f32 %v4042, 0.0
        %v4056 = vmax.f32 %v4045, 0.0
        %v4057 = vmax.f32 %v4048, 0.0
        %v4058 = vld [vmem:[#allocation12] sm:$0xff]
        %v4059 = vld [vmem:[#allocation12 + $0x8] sm:$0xff]
        %v4060 = vld [vmem:[#allocation12 + $0x10] sm:$0xff]
        %v4061 = vld [vmem:[#allocation12 + $0x18] sm:$0xff]
        %v4062 = vld [vmem:[%s15] sm:$0xff]
        %v4063 = vld [vmem:[%s15 + $0x8] sm:$0xff]
        %v4064 = vld [vmem:[%s15 + $0x10] sm:$0xff]
        %v4065 = vld [vmem:[%s15 + $0x18] sm:$0xff]
        %vm4066 = vcmask 523264
        %v4068 = vsel %vm4066, %v4058, 0
        %v4071 = vsel %vm4066, %v4059, 0
        %v4074 = vsel %vm4066, %v4060, 0
        %v4077 = vsel %vm4066, %v4061, 0
        %4079 = vmatpush.msra.mxu0 0.0
        %4080 = vmatpush.msra.mxu0 0.0
        %4081 = vmatpush.msra.mxu0 0.0
        %4082 = vmatpush.msra.mxu0 0.0
        %4083 = vmatpush.msra.mxu0 0.0
        %4084 = vmatpush.msra.mxu0 0.0
        %4085 = vmatpush.msra.mxu0 0.0
        %4086 = vmatpush.msra.mxu0 0.0
        %4087 = vmatpush.msra.mxu0 %v4057
        %4088 = vmatpush.msra.mxu0 %v4056
        %4089 = vmatpush.msra.mxu0 %v4055
        %4090 = vmatpush.msra.mxu0 %v4054
        %4091 = vmatpush.msra.mxu0 %v4053
        %4092 = vmatpush.msra.mxu0 %v4052
        %4093 = vmatpush.msra.mxu0 %v4051
        %4094 = vmatpush.msra.mxu0 %v4050
        %4095 = vmatmul.f32.gmra.mxu0 %v4068
        %v4096 = vpop.f32.mrf.mxu0
        %v4097 = vadd.f32 %v4062, %v4096
        %4098 = vmatmul.f32.gmra.mxu0 %v4071
        %v4099 = vpop.f32.mrf.mxu0
        %v4100 = vadd.f32 %v4063, %v4099
        %4101 = vmatmul.f32.gmra.mxu0 %v4074
        %v4102 = vpop.f32.mrf.mxu0
        %v4103 = vadd.f32 %v4064, %v4102
        %4104 = vmatmul.f32.gmra.mxu0 %v4077
        %v4105 = vpop.f32.mrf.mxu0
        %v4106 = vadd.f32 %v4065, %v4105
        %4107 = vdwg.mxu0
        %v4108 = vld [vmem:[#allocation13] sm:$0xff]
        %v4109 = vld [vmem:[#allocation13 + $0x8] sm:$0xff]
        %v4110 = vld [vmem:[#allocation13 + $0x10] sm:$0xff]
        %v4111 = vld [vmem:[#allocation13 + $0x18] sm:$0xff]
        %v4112 = vld [vmem:[%s17] sm:$0xff]
        %v4113 = vld [vmem:[%s17 + $0x8] sm:$0xff]
        %v4114 = vld [vmem:[%s17 + $0x10] sm:$0xff]
        %v4115 = vld [vmem:[%s17 + $0x18] sm:$0xff]
        %4117 = vset.pattern.permute.xlu0 0
        %4118 = vperm.xlu0 %4117, %v4112
        %v4119 = vpop.permute.xlu0 %4118
        %4122 = vset.pattern.permute.xlu0 0
        %4123 = vperm.xlu0 %4122, %v4113
        %v4124 = vpop.permute.xlu0 %4123
        %4127 = vset.pattern.permute.xlu0 0
        %4128 = vperm.xlu0 %4127, %v4114
        %v4129 = vpop.permute.xlu0 %4128
        %4132 = vset.pattern.permute.xlu0 0
        %4133 = vperm.xlu0 %4132, %v4115
        %v4134 = vpop.permute.xlu0 %4133
        %v4137 = vsel %vm1241, %v4108, 0
        %v4140 = vsel %vm1241, %v4109, 0
        %v4143 = vsel %vm1241, %v4110, 0
        %v4146 = vsel %vm1241, %v4111, 0
        %4148 = vmatpush.msra.mxu0 0.0
        %4149 = vmatpush.msra.mxu0 0.0
        %4150 = vmatpush.msra.mxu0 0.0
        %4151 = vmatpush.msra.mxu0 0.0
        %4152 = vmatpush.msra.mxu0 0.0
        %4153 = vmatpush.msra.mxu0 0.0
        %4154 = vmatpush.msra.mxu0 0.0
        %4155 = vmatpush.msra.mxu0 %v2814
        %4156 = vmatpush.msra.mxu0 %v2811
        %4157 = vmatpush.msra.mxu0 %v2808
        %4158 = vmatpush.msra.mxu0 %v2805
        %4159 = vmatpush.msra.mxu0 %v2802
        %4160 = vmatpush.msra.mxu0 %v2799
        %4161 = vmatpush.msra.mxu0 %v2796
        %4162 = vmatpush.msra.mxu0 %v2793
        %4163 = vmatpush.msra.mxu0 %v2790
        %4164 = vmatmul.f32.gmra.mxu0 %v4137
        %v4165 = vpop.f32.mrf.mxu0
        %v4166 = vadd.f32 %v4119, %v4165
        %4167 = vmatmul.f32.gmra.mxu0 %v4140
        %v4168 = vpop.f32.mrf.mxu0
        %v4169 = vadd.f32 %v4124, %v4168
        %4170 = vmatmul.f32.gmra.mxu0 %v4143
        %v4171 = vpop.f32.mrf.mxu0
        %v4172 = vadd.f32 %v4129, %v4171
        %4173 = vmatmul.f32.gmra.mxu0 %v4146
        %v4174 = vpop.f32.mrf.mxu0
        %v4175 = vadd.f32 %v4134, %v4174
        %4176 = vdwg.mxu0
        %v4177 = vmax.f32 %v4166, 0.0
        %v4178 = vmax.f32 %v4169, 0.0
        %v4179 = vmax.f32 %v4172, 0.0
        %v4180 = vmax.f32 %v4175, 0.0
        %v4181 = vld [vmem:[%s21] sm:$0xff]
        %v4182 = vld [vmem:[%s21 + $0x8] sm:$0xff]
        %v4183 = vld [vmem:[%s21 + $0x10] sm:$0xff]
        %v4184 = vld [vmem:[%s21 + $0x18] sm:$0xff]
        %v4185 = vld [vmem:[%s21 + $0x20] sm:$0xff]
        %v4186 = vld [vmem:[%s21 + $0x28] sm:$0xff]
        %v4187 = vld [vmem:[%s21 + $0x30] sm:$0xff]
        %v4188 = vld [vmem:[%s21 + $0x38] sm:$0xff]
        %v4189 = vld [vmem:[%s21 + $0x40] sm:$0xff]
        %v4190 = vld [vmem:[%s21 + $0x48] sm:$0xff]
        %v4191 = vld [vmem:[%s21 + $0x50] sm:$0xff]
        %v4192 = vld [vmem:[%s21 + $0x58] sm:$0xff]
        %v4193 = vld [vmem:[%s21 + $0x60] sm:$0xf]
        %v4195 = vsel %vm2902, %v4177, 0
        %v4198 = vsel %vm2902, %v4178, 0
        %v4201 = vsel %vm2902, %v4179, 0
        %v4204 = vsel %vm2902, %v4180, 0
        %v4207 = vsel %vm1894, %v4193, 0
        %4209 = vmatpush.msra.mxu0 0.0
        %4210 = vmatpush.msra.mxu0 0.0
        %4211 = vmatpush.msra.mxu0 0.0
        %4212 = vmatpush.msra.mxu0 %v4207
        %4213 = vmatpush.msra.mxu0 %v4192
        %4214 = vmatpush.msra.mxu0 %v4191
        %4215 = vmatpush.msra.mxu0 %v4190
        %4216 = vmatpush.msra.mxu0 %v4189
        %4217 = vmatpush.msra.mxu0 %v4188
        %4218 = vmatpush.msra.mxu0 %v4187
        %4219 = vmatpush.msra.mxu0 %v4186
        %4220 = vmatpush.msra.mxu0 %v4185
        %4221 = vmatpush.msra.mxu0 %v4184
        %4222 = vmatpush.msra.mxu0 %v4183
        %4223 = vmatpush.msra.mxu0 %v4182
        %4224 = vmatpush.msra.mxu0 %v4181
        %4225 = vmatmul.f32.gmra.mxu0 %v4195
        %v4226 = vpop.f32.mrf.mxu0
        %v4227 = vadd.f32 0.0, %v4226
        %4228 = vmatmul.f32.gmra.mxu0 %v4198
        %v4229 = vpop.f32.mrf.mxu0
        %v4230 = vadd.f32 0.0, %v4229
        %4231 = vmatmul.f32.gmra.mxu0 %v4201
        %v4232 = vpop.f32.mrf.mxu0
        %v4233 = vadd.f32 0.0, %v4232
        %4234 = vmatmul.f32.gmra.mxu0 %v4204
        %v4235 = vpop.f32.mrf.mxu0
        %v4236 = vadd.f32 0.0, %v4235
        %4237 = vdwg.mxu0
        %4238 = vst.msk [vmem:[#allocation4] sm:$0xff] %vm2788, %v4227
        %4239 = vst.msk [vmem:[#allocation4 + $0x8] sm:$0xff] %vm2788, %v4230
        %4240 = vst.msk [vmem:[#allocation4 + $0x10] sm:$0xff] %vm2788, %v4233
        %4241 = vst.msk [vmem:[#allocation4 + $0x18] sm:$0xff] %vm2788, %v4236
        %v4242 = vld [vmem:[#allocation4] sm:$0xff]
        %v4243 = vld [vmem:[#allocation4 + $0x8] sm:$0xff]
        %v4244 = vld [vmem:[#allocation4 + $0x10] sm:$0xff]
        %v4245 = vld [vmem:[#allocation4 + $0x18] sm:$0xff]
        %4250 = vrot.lane.b32.xlu0 %v4242, 127
        %v4251 = vpop.permute.xlu0 %4250
        %4252 = vrot.lane.b32.xlu0 %v4243, 127
        %v4253 = vpop.permute.xlu0 %4252
        %4254 = vrot.lane.b32.xlu0 %v4244, 127
        %v4255 = vpop.permute.xlu0 %4254
        %4256 = vrot.lane.b32.xlu0 %v4245, 127
        %v4257 = vpop.permute.xlu0 %4256
        %4262 = vrot.lane.b32.xlu0 %v4242, 126
        %v4263 = vpop.permute.xlu0 %4262
        %4264 = vrot.lane.b32.xlu0 %v4243, 126
        %v4265 = vpop.permute.xlu0 %4264
        %4266 = vrot.lane.b32.xlu0 %v4244, 126
        %v4267 = vpop.permute.xlu0 %4266
        %4268 = vrot.lane.b32.xlu0 %v4245, 126
        %v4269 = vpop.permute.xlu0 %4268
        %4274 = vrot.lane.b32.xlu0 %v4242, 118
        %v4275 = vpop.permute.xlu0 %4274
        %4276 = vrot.lane.b32.xlu0 %v4243, 118
        %v4277 = vpop.permute.xlu0 %4276
        %4278 = vrot.lane.b32.xlu0 %v4244, 118
        %v4279 = vpop.permute.xlu0 %4278
        %4280 = vrot.lane.b32.xlu0 %v4245, 118
        %v4281 = vpop.permute.xlu0 %4280
        %4286 = vrot.lane.b32.xlu0 %v4242, 117
        %v4287 = vpop.permute.xlu0 %4286
        %4288 = vrot.lane.b32.xlu0 %v4243, 117
        %v4289 = vpop.permute.xlu0 %4288
        %4290 = vrot.lane.b32.xlu0 %v4244, 117
        %v4291 = vpop.permute.xlu0 %4290
        %4292 = vrot.lane.b32.xlu0 %v4245, 117
        %v4293 = vpop.permute.xlu0 %4292
        %4298 = vrot.lane.b32.xlu0 %v4242, 116
        %v4299 = vpop.permute.xlu0 %4298
        %4300 = vrot.lane.b32.xlu0 %v4243, 116
        %v4301 = vpop.permute.xlu0 %4300
        %4302 = vrot.lane.b32.xlu0 %v4244, 116
        %v4303 = vpop.permute.xlu0 %4302
        %4304 = vrot.lane.b32.xlu0 %v4245, 116
        %v4305 = vpop.permute.xlu0 %4304
        %4310 = vrot.lane.b32.xlu0 %v4242, 108
        %v4311 = vpop.permute.xlu0 %4310
        %4312 = vrot.lane.b32.xlu0 %v4243, 108
        %v4313 = vpop.permute.xlu0 %4312
        %4314 = vrot.lane.b32.xlu0 %v4244, 108
        %v4315 = vpop.permute.xlu0 %4314
        %4316 = vrot.lane.b32.xlu0 %v4245, 108
        %v4317 = vpop.permute.xlu0 %4316
        %4322 = vrot.lane.b32.xlu0 %v4242, 107
        %v4323 = vpop.permute.xlu0 %4322
        %4324 = vrot.lane.b32.xlu0 %v4243, 107
        %v4325 = vpop.permute.xlu0 %4324
        %4326 = vrot.lane.b32.xlu0 %v4244, 107
        %v4327 = vpop.permute.xlu0 %4326
        %4328 = vrot.lane.b32.xlu0 %v4245, 107
        %v4329 = vpop.permute.xlu0 %4328
        %4334 = vrot.lane.b32.xlu0 %v4242, 106
        %v4335 = vpop.permute.xlu0 %4334
        %4336 = vrot.lane.b32.xlu0 %v4243, 106
        %v4337 = vpop.permute.xlu0 %4336
        %4338 = vrot.lane.b32.xlu0 %v4244, 106
        %v4339 = vpop.permute.xlu0 %4338
        %4340 = vrot.lane.b32.xlu0 %v4245, 106
        %v4341 = vpop.permute.xlu0 %4340
        %v4346 = vld [vmem:[%s18] sm:$0xff]
        %v4347 = vld [vmem:[%s18 + $0x8] sm:$0xff]
        %v4348 = vld [vmem:[%s18 + $0x10] sm:$0xff]
        %v4349 = vld [vmem:[%s18 + $0x18] sm:$0xff]
        %v4350 = vld [vmem:[%s18 + $0x20] sm:$0xff]
        %v4351 = vld [vmem:[%s18 + $0x28] sm:$0xff]
        %v4352 = vld [vmem:[%s18 + $0x30] sm:$0xff]
        %v4353 = vld [vmem:[%s18 + $0x38] sm:$0xff]
        %v4354 = vld [vmem:[%s18 + $0x40] sm:$0xff]
        %v4355 = vld [vmem:[%s18 + $0x48] sm:$0xff]
        %v4356 = vld [vmem:[%s18 + $0x50] sm:$0xff]
        %v4357 = vld [vmem:[%s18 + $0x58] sm:$0xff]
        %vm4358 = vcmask 261120
        %v4360 = vsel %vm4358, %v4348, 0
        %v4363 = vsel %vm4358, %v4351, 0
        %v4366 = vsel %vm4358, %v4354, 0
        %v4369 = vsel %vm4358, %v4357, 0
        %4371 = vmatpush.msra.mxu0 %v4281
        %4372 = vmatpush.msra.mxu0 %v4279
        %4373 = vmatpush.msra.mxu0 %v4277
        %4374 = vmatpush.msra.mxu0 %v4275
        %4375 = vmatpush.msra.mxu0 %v4269
        %4376 = vmatpush.msra.mxu0 %v4267
        %4377 = vmatpush.msra.mxu0 %v4265
        %4378 = vmatpush.msra.mxu0 %v4263
        %4379 = vmatpush.msra.mxu0 %v4257
        %4380 = vmatpush.msra.mxu0 %v4255
        %4381 = vmatpush.msra.mxu0 %v4253
        %4382 = vmatpush.msra.mxu0 %v4251
        %4383 = vmatpush.msra.mxu0 %v4245
        %4384 = vmatpush.msra.mxu0 %v4244
        %4385 = vmatpush.msra.mxu0 %v4243
        %4386 = vmatpush.msra.mxu0 %v4242
        %4387 = vmatmul.f32.gmra.mxu0 %v4346
        %v4388 = vpop.f32.mrf.mxu0
        %v4389 = vadd.f32 0.0, %v4388
        %4390 = vmatmul.f32.gmra.mxu0 %v4349
        %v4391 = vpop.f32.mrf.mxu0
        %v4392 = vadd.f32 0.0, %v4391
        %4393 = vmatmul.f32.gmra.mxu0 %v4352
        %v4394 = vpop.f32.mrf.mxu0
        %v4395 = vadd.f32 0.0, %v4394
        %4396 = vmatmul.f32.gmra.mxu0 %v4355
        %v4397 = vpop.f32.mrf.mxu0
        %v4398 = vadd.f32 0.0, %v4397
        %4399 = vdwg.mxu0
        %4400 = vmatpush.msra.mxu0 %v4329
        %4401 = vmatpush.msra.mxu0 %v4327
        %4402 = vmatpush.msra.mxu0 %v4325
        %4403 = vmatpush.msra.mxu0 %v4323
        %4404 = vmatpush.msra.mxu0 %v4317
        %4405 = vmatpush.msra.mxu0 %v4315
        %4406 = vmatpush.msra.mxu0 %v4313
        %4407 = vmatpush.msra.mxu0 %v4311
        %4408 = vmatpush.msra.mxu0 %v4305
        %4409 = vmatpush.msra.mxu0 %v4303
        %4410 = vmatpush.msra.mxu0 %v4301
        %4411 = vmatpush.msra.mxu0 %v4299
        %4412 = vmatpush.msra.mxu0 %v4293
        %4413 = vmatpush.msra.mxu0 %v4291
        %4414 = vmatpush.msra.mxu0 %v4289
        %4415 = vmatpush.msra.mxu0 %v4287
        %4416 = vmatmul.f32.gmra.mxu0 %v4347
        %v4417 = vpop.f32.mrf.mxu0
        %v4418 = vadd.f32 %v4389, %v4417
        %4419 = vmatmul.f32.gmra.mxu0 %v4350
        %v4420 = vpop.f32.mrf.mxu0
        %v4421 = vadd.f32 %v4392, %v4420
        %4422 = vmatmul.f32.gmra.mxu0 %v4353
        %v4423 = vpop.f32.mrf.mxu0
        %v4424 = vadd.f32 %v4395, %v4423
        %4425 = vmatmul.f32.gmra.mxu0 %v4356
        %v4426 = vpop.f32.mrf.mxu0
        %v4427 = vadd.f32 %v4398, %v4426
        %4428 = vdwg.mxu0
        %4429 = vmatpush.msra.mxu0 0.0
        %4430 = vmatpush.msra.mxu0 0.0
        %4431 = vmatpush.msra.mxu0 0.0
        %4432 = vmatpush.msra.mxu0 0.0
        %4433 = vmatpush.msra.mxu0 0.0
        %4434 = vmatpush.msra.mxu0 0.0
        %4435 = vmatpush.msra.mxu0 0.0
        %4436 = vmatpush.msra.mxu0 0.0
        %4437 = vmatpush.msra.mxu0 0.0
        %4438 = vmatpush.msra.mxu0 0.0
        %4439 = vmatpush.msra.mxu0 0.0
        %4440 = vmatpush.msra.mxu0 0.0
        %4441 = vmatpush.msra.mxu0 %v4341
        %4442 = vmatpush.msra.mxu0 %v4339
        %4443 = vmatpush.msra.mxu0 %v4337
        %4444 = vmatpush.msra.mxu0 %v4335
        %4445 = vmatmul.f32.gmra.mxu0 %v4360
        %v4446 = vpop.f32.mrf.mxu0
        %v4447 = vadd.f32 %v4418, %v4446
        %4448 = vmatmul.f32.gmra.mxu0 %v4363
        %v4449 = vpop.f32.mrf.mxu0
        %v4450 = vadd.f32 %v4421, %v4449
        %4451 = vmatmul.f32.gmra.mxu0 %v4366
        %v4452 = vpop.f32.mrf.mxu0
        %v4453 = vadd.f32 %v4424, %v4452
        %4454 = vmatmul.f32.gmra.mxu0 %v4369
        %v4455 = vpop.f32.mrf.mxu0
        %v4456 = vadd.f32 %v4427, %v4455
        %4457 = vdwg.mxu0
        %v4458 = vmax.f32 %v4447, 0.0
        %v4459 = vmax.f32 %v4450, 0.0
        %v4460 = vmax.f32 %v4453, 0.0
        %v4461 = vmax.f32 %v4456, 0.0
        %v4462 = vld [vmem:[%s21] sm:$0xff]
        %v4463 = vld [vmem:[%s21 + $0x8] sm:$0xff]
        %v4464 = vld [vmem:[%s21 + $0x10] sm:$0xff]
        %v4465 = vld [vmem:[%s21 + $0x18] sm:$0xff]
        %v4466 = vld [vmem:[%s21 + $0x20] sm:$0xff]
        %v4467 = vld [vmem:[%s21 + $0x28] sm:$0xff]
        %v4468 = vld [vmem:[%s21 + $0x30] sm:$0xff]
        %v4469 = vld [vmem:[%s21 + $0x38] sm:$0xff]
        %v4470 = vld [vmem:[%s21 + $0x40] sm:$0xff]
        %v4471 = vld [vmem:[%s21 + $0x48] sm:$0xff]
        %v4472 = vld [vmem:[%s21 + $0x50] sm:$0xff]
        %v4473 = vld [vmem:[%s21 + $0x58] sm:$0xff]
        %v4474 = vld [vmem:[%s21 + $0x60] sm:$0xf]
        %v4476 = vsel %vm2902, %v4458, 0
        %v4479 = vsel %vm2902, %v4459, 0
        %v4482 = vsel %vm2902, %v4460, 0
        %v4485 = vsel %vm2902, %v4461, 0
        %v4488 = vsel %vm1894, %v4474, 0
        %4490 = vmatpush.msra.mxu0 0.0
        %4491 = vmatpush.msra.mxu0 0.0
        %4492 = vmatpush.msra.mxu0 0.0
        %4493 = vmatpush.msra.mxu0 %v4488
        %4494 = vmatpush.msra.mxu0 %v4473
        %4495 = vmatpush.msra.mxu0 %v4472
        %4496 = vmatpush.msra.mxu0 %v4471
        %4497 = vmatpush.msra.mxu0 %v4470
        %4498 = vmatpush.msra.mxu0 %v4469
        %4499 = vmatpush.msra.mxu0 %v4468
        %4500 = vmatpush.msra.mxu0 %v4467
        %4501 = vmatpush.msra.mxu0 %v4466
        %4502 = vmatpush.msra.mxu0 %v4465
        %4503 = vmatpush.msra.mxu0 %v4464
        %4504 = vmatpush.msra.mxu0 %v4463
        %4505 = vmatpush.msra.mxu0 %v4462
        %4506 = vmatmul.f32.gmra.mxu0 %v4476
        %v4507 = vpop.f32.mrf.mxu0
        %v4508 = vadd.f32 0.0, %v4507
        %4509 = vmatmul.f32.gmra.mxu0 %v4479
        %v4510 = vpop.f32.mrf.mxu0
        %v4511 = vadd.f32 0.0, %v4510
        %4512 = vmatmul.f32.gmra.mxu0 %v4482
        %v4513 = vpop.f32.mrf.mxu0
        %v4514 = vadd.f32 0.0, %v4513
        %4515 = vmatmul.f32.gmra.mxu0 %v4485
        %v4516 = vpop.f32.mrf.mxu0
        %v4517 = vadd.f32 0.0, %v4516
        %4518 = vdwg.mxu0
        %4519 = vst.msk [vmem:[#allocation4] sm:$0xff] %vm2788, %v4508
        %4520 = vst.msk [vmem:[#allocation4 + $0x8] sm:$0xff] %vm2788, %v4511
        %4521 = vst.msk [vmem:[#allocation4 + $0x10] sm:$0xff] %vm2788, %v4514
        %4522 = vst.msk [vmem:[#allocation4 + $0x18] sm:$0xff] %vm2788, %v4517
        %v4523 = vld [vmem:[#allocation4] sm:$0xff]
        %v4524 = vld [vmem:[#allocation4 + $0x8] sm:$0xff]
        %v4525 = vld [vmem:[#allocation4 + $0x10] sm:$0xff]
        %v4526 = vld [vmem:[#allocation4 + $0x18] sm:$0xff]
        %4531 = vrot.lane.b32.xlu0 %v4523, 127
        %v4532 = vpop.permute.xlu0 %4531
        %4533 = vrot.lane.b32.xlu0 %v4524, 127
        %v4534 = vpop.permute.xlu0 %4533
        %4535 = vrot.lane.b32.xlu0 %v4525, 127
        %v4536 = vpop.permute.xlu0 %4535
        %4537 = vrot.lane.b32.xlu0 %v4526, 127
        %v4538 = vpop.permute.xlu0 %4537
        %4543 = vrot.lane.b32.xlu0 %v4523, 126
        %v4544 = vpop.permute.xlu0 %4543
        %4545 = vrot.lane.b32.xlu0 %v4524, 126
        %v4546 = vpop.permute.xlu0 %4545
        %4547 = vrot.lane.b32.xlu0 %v4525, 126
        %v4548 = vpop.permute.xlu0 %4547
        %4549 = vrot.lane.b32.xlu0 %v4526, 126
        %v4550 = vpop.permute.xlu0 %4549
        %4555 = vrot.lane.b32.xlu0 %v4523, 118
        %v4556 = vpop.permute.xlu0 %4555
        %4557 = vrot.lane.b32.xlu0 %v4524, 118
        %v4558 = vpop.permute.xlu0 %4557
        %4559 = vrot.lane.b32.xlu0 %v4525, 118
        %v4560 = vpop.permute.xlu0 %4559
        %4561 = vrot.lane.b32.xlu0 %v4526, 118
        %v4562 = vpop.permute.xlu0 %4561
        %4567 = vrot.lane.b32.xlu0 %v4523, 117
        %v4568 = vpop.permute.xlu0 %4567
        %4569 = vrot.lane.b32.xlu0 %v4524, 117
        %v4570 = vpop.permute.xlu0 %4569
        %4571 = vrot.lane.b32.xlu0 %v4525, 117
        %v4572 = vpop.permute.xlu0 %4571
        %4573 = vrot.lane.b32.xlu0 %v4526, 117
        %v4574 = vpop.permute.xlu0 %4573
        %4579 = vrot.lane.b32.xlu0 %v4523, 116
        %v4580 = vpop.permute.xlu0 %4579
        %4581 = vrot.lane.b32.xlu0 %v4524, 116
        %v4582 = vpop.permute.xlu0 %4581
        %4583 = vrot.lane.b32.xlu0 %v4525, 116
        %v4584 = vpop.permute.xlu0 %4583
        %4585 = vrot.lane.b32.xlu0 %v4526, 116
        %v4586 = vpop.permute.xlu0 %4585
        %4591 = vrot.lane.b32.xlu0 %v4523, 108
        %v4592 = vpop.permute.xlu0 %4591
        %4593 = vrot.lane.b32.xlu0 %v4524, 108
        %v4594 = vpop.permute.xlu0 %4593
        %4595 = vrot.lane.b32.xlu0 %v4525, 108
        %v4596 = vpop.permute.xlu0 %4595
        %4597 = vrot.lane.b32.xlu0 %v4526, 108
        %v4598 = vpop.permute.xlu0 %4597
        %4603 = vrot.lane.b32.xlu0 %v4523, 107
        %v4604 = vpop.permute.xlu0 %4603
        %4605 = vrot.lane.b32.xlu0 %v4524, 107
        %v4606 = vpop.permute.xlu0 %4605
        %4607 = vrot.lane.b32.xlu0 %v4525, 107
        %v4608 = vpop.permute.xlu0 %4607
        %4609 = vrot.lane.b32.xlu0 %v4526, 107
        %v4610 = vpop.permute.xlu0 %4609
        %4615 = vrot.lane.b32.xlu0 %v4523, 106
        %v4616 = vpop.permute.xlu0 %4615
        %4617 = vrot.lane.b32.xlu0 %v4524, 106
        %v4618 = vpop.permute.xlu0 %4617
        %4619 = vrot.lane.b32.xlu0 %v4525, 106
        %v4620 = vpop.permute.xlu0 %4619
        %4621 = vrot.lane.b32.xlu0 %v4526, 106
        %v4622 = vpop.permute.xlu0 %4621
        %v4627 = vld [vmem:[#allocation15] sm:$0xff]
        %v4628 = vld [vmem:[#allocation15 + $0x8] sm:$0xff]
        %v4629 = vld [vmem:[#allocation15 + $0x10] sm:$0xff]
        %v4630 = vld [vmem:[#allocation15 + $0x18] sm:$0xff]
        %v4631 = vld [vmem:[#allocation15 + $0x20] sm:$0xff]
        %v4632 = vld [vmem:[#allocation15 + $0x28] sm:$0xff]
        %v4633 = vld [vmem:[#allocation15 + $0x30] sm:$0xff]
        %v4634 = vld [vmem:[#allocation15 + $0x38] sm:$0xff]
        %v4635 = vld [vmem:[#allocation15 + $0x40] sm:$0xff]
        %v4636 = vld [vmem:[#allocation15 + $0x48] sm:$0xff]
        %v4637 = vld [vmem:[#allocation15 + $0x50] sm:$0xff]
        %v4638 = vld [vmem:[#allocation15 + $0x58] sm:$0xff]
        %v4640 = vsel %vm4358, %v4629, 0
        %v4643 = vsel %vm4358, %v4632, 0
        %v4646 = vsel %vm4358, %v4635, 0
        %v4649 = vsel %vm4358, %v4638, 0
        %4651 = vmatpush.msra.mxu0 %v4562
        %4652 = vmatpush.msra.mxu0 %v4560
        %4653 = vmatpush.msra.mxu0 %v4558
        %4654 = vmatpush.msra.mxu0 %v4556
        %4655 = vmatpush.msra.mxu0 %v4550
        %4656 = vmatpush.msra.mxu0 %v4548
        %4657 = vmatpush.msra.mxu0 %v4546
        %4658 = vmatpush.msra.mxu0 %v4544
        %4659 = vmatpush.msra.mxu0 %v4538
        %4660 = vmatpush.msra.mxu0 %v4536
        %4661 = vmatpush.msra.mxu0 %v4534
        %4662 = vmatpush.msra.mxu0 %v4532
        %4663 = vmatpush.msra.mxu0 %v4526
        %4664 = vmatpush.msra.mxu0 %v4525
        %4665 = vmatpush.msra.mxu0 %v4524
        %4666 = vmatpush.msra.mxu0 %v4523
        %4667 = vmatmul.f32.gmra.mxu0 %v4627
        %v4668 = vpop.f32.mrf.mxu0
        %v4669 = vadd.f32 0.0, %v4668
        %4670 = vmatmul.f32.gmra.mxu0 %v4630
        %v4671 = vpop.f32.mrf.mxu0
        %v4672 = vadd.f32 0.0, %v4671
        %4673 = vmatmul.f32.gmra.mxu0 %v4633
        %v4674 = vpop.f32.mrf.mxu0
        %v4675 = vadd.f32 0.0, %v4674
        %4676 = vmatmul.f32.gmra.mxu0 %v4636
        %v4677 = vpop.f32.mrf.mxu0
        %v4678 = vadd.f32 0.0, %v4677
        %4679 = vdwg.mxu0
        %4680 = vmatpush.msra.mxu0 %v4610
        %4681 = vmatpush.msra.mxu0 %v4608
        %4682 = vmatpush.msra.mxu0 %v4606
        %4683 = vmatpush.msra.mxu0 %v4604
        %4684 = vmatpush.msra.mxu0 %v4598
        %4685 = vmatpush.msra.mxu0 %v4596
        %4686 = vmatpush.msra.mxu0 %v4594
        %4687 = vmatpush.msra.mxu0 %v4592
        %4688 = vmatpush.msra.mxu0 %v4586
        %4689 = vmatpush.msra.mxu0 %v4584
        %4690 = vmatpush.msra.mxu0 %v4582
        %4691 = vmatpush.msra.mxu0 %v4580
        %4692 = vmatpush.msra.mxu0 %v4574
        %4693 = vmatpush.msra.mxu0 %v4572
        %4694 = vmatpush.msra.mxu0 %v4570
        %4695 = vmatpush.msra.mxu0 %v4568
        %4696 = vmatmul.f32.gmra.mxu0 %v4628
        %v4697 = vpop.f32.mrf.mxu0
        %v4698 = vadd.f32 %v4669, %v4697
        %4699 = vmatmul.f32.gmra.mxu0 %v4631
        %v4700 = vpop.f32.mrf.mxu0
        %v4701 = vadd.f32 %v4672, %v4700
        %4702 = vmatmul.f32.gmra.mxu0 %v4634
        %v4703 = vpop.f32.mrf.mxu0
        %v4704 = vadd.f32 %v4675, %v4703
        %4705 = vmatmul.f32.gmra.mxu0 %v4637
        %v4706 = vpop.f32.mrf.mxu0
        %v4707 = vadd.f32 %v4678, %v4706
        %4708 = vdwg.mxu0
        %4709 = vmatpush.msra.mxu0 0.0
        %4710 = vmatpush.msra.mxu0 0.0
        %4711 = vmatpush.msra.mxu0 0.0
        %4712 = vmatpush.msra.mxu0 0.0
        %4713 = vmatpush.msra.mxu0 0.0
        %4714 = vmatpush.msra.mxu0 0.0
        %4715 = vmatpush.msra.mxu0 0.0
        %4716 = vmatpush.msra.mxu0 0.0
        %4717 = vmatpush.msra.mxu0 0.0
        %4718 = vmatpush.msra.mxu0 0.0
        %4719 = vmatpush.msra.mxu0 0.0
        %4720 = vmatpush.msra.mxu0 0.0
        %4721 = vmatpush.msra.mxu0 %v4622
        %4722 = vmatpush.msra.mxu0 %v4620
        %4723 = vmatpush.msra.mxu0 %v4618
        %4724 = vmatpush.msra.mxu0 %v4616
        %4725 = vmatmul.f32.gmra.mxu0 %v4640
        %v4726 = vpop.f32.mrf.mxu0
        %v4727 = vadd.f32 %v4698, %v4726
        %4728 = vmatmul.f32.gmra.mxu0 %v4643
        %v4729 = vpop.f32.mrf.mxu0
        %v4730 = vadd.f32 %v4701, %v4729
        %4731 = vmatmul.f32.gmra.mxu0 %v4646
        %v4732 = vpop.f32.mrf.mxu0
        %v4733 = vadd.f32 %v4704, %v4732
        %4734 = vmatmul.f32.gmra.mxu0 %v4649
        %v4735 = vpop.f32.mrf.mxu0
        %v4736 = vadd.f32 %v4707, %v4735
        %4737 = vdwg.mxu0
        %v4738 = vmax.f32 %v4727, 0.0
        %v4739 = vmax.f32 %v4730, 0.0
        %v4740 = vmax.f32 %v4733, 0.0
        %v4741 = vmax.f32 %v4736, 0.0
        %v4742 = vld [vmem:[%s21] sm:$0xff]
        %v4743 = vld [vmem:[%s21 + $0x8] sm:$0xff]
        %v4744 = vld [vmem:[%s21 + $0x10] sm:$0xff]
        %v4745 = vld [vmem:[%s21 + $0x18] sm:$0xff]
        %v4746 = vld [vmem:[%s21 + $0x20] sm:$0xff]
        %v4747 = vld [vmem:[%s21 + $0x28] sm:$0xff]
        %v4748 = vld [vmem:[%s21 + $0x30] sm:$0xff]
        %v4749 = vld [vmem:[%s21 + $0x38] sm:$0xff]
        %v4750 = vld [vmem:[%s21 + $0x40] sm:$0xff]
        %v4751 = vld [vmem:[%s21 + $0x48] sm:$0xff]
        %v4752 = vld [vmem:[%s21 + $0x50] sm:$0xff]
        %v4753 = vld [vmem:[%s21 + $0x58] sm:$0xff]
        %v4754 = vld [vmem:[%s21 + $0x60] sm:$0xf]
        %v4756 = vsel %vm2902, %v4738, 0
        %v4759 = vsel %vm2902, %v4739, 0
        %v4762 = vsel %vm2902, %v4740, 0
        %v4765 = vsel %vm2902, %v4741, 0
        %v4768 = vsel %vm1894, %v4754, 0
        %4770 = vmatpush.msra.mxu0 0.0
        %4771 = vmatpush.msra.mxu0 0.0
        %4772 = vmatpush.msra.mxu0 0.0
        %4773 = vmatpush.msra.mxu0 %v4768
        %4774 = vmatpush.msra.mxu0 %v4753
        %4775 = vmatpush.msra.mxu0 %v4752
        %4776 = vmatpush.msra.mxu0 %v4751
        %4777 = vmatpush.msra.mxu0 %v4750
        %4778 = vmatpush.msra.mxu0 %v4749
        %4779 = vmatpush.msra.mxu0 %v4748
        %4780 = vmatpush.msra.mxu0 %v4747
        %4781 = vmatpush.msra.mxu0 %v4746
        %4782 = vmatpush.msra.mxu0 %v4745
        %4783 = vmatpush.msra.mxu0 %v4744
        %4784 = vmatpush.msra.mxu0 %v4743
        %4785 = vmatpush.msra.mxu0 %v4742
        %4786 = vmatmul.f32.gmra.mxu0 %v4756
        %v4787 = vpop.f32.mrf.mxu0
        %v4788 = vadd.f32 0.0, %v4787
        %4789 = vmatmul.f32.gmra.mxu0 %v4759
        %v4790 = vpop.f32.mrf.mxu0
        %v4791 = vadd.f32 0.0, %v4790
        %4792 = vmatmul.f32.gmra.mxu0 %v4762
        %v4793 = vpop.f32.mrf.mxu0
        %v4794 = vadd.f32 0.0, %v4793
        %4795 = vmatmul.f32.gmra.mxu0 %v4765
        %v4796 = vpop.f32.mrf.mxu0
        %v4797 = vadd.f32 0.0, %v4796
        %4798 = vdwg.mxu0
        %4799 = vst.msk [vmem:[#allocation4] sm:$0xff] %vm2788, %v4788
        %4800 = vst.msk [vmem:[#allocation4 + $0x8] sm:$0xff] %vm2788, %v4791
        %4801 = vst.msk [vmem:[#allocation4 + $0x10] sm:$0xff] %vm2788, %v4794
        %4802 = vst.msk [vmem:[#allocation4 + $0x18] sm:$0xff] %vm2788, %v4797
        %v4803 = vld [vmem:[#allocation4] sm:$0xff]
        %v4804 = vld [vmem:[#allocation4 + $0x8] sm:$0xff]
        %v4805 = vld [vmem:[#allocation4 + $0x10] sm:$0xff]
        %v4806 = vld [vmem:[#allocation4 + $0x18] sm:$0xff]
        %4811 = vrot.lane.b32.xlu0 %v4803, 127
        %v4812 = vpop.permute.xlu0 %4811
        %4813 = vrot.lane.b32.xlu0 %v4804, 127
        %v4814 = vpop.permute.xlu0 %4813
        %4815 = vrot.lane.b32.xlu0 %v4805, 127
        %v4816 = vpop.permute.xlu0 %4815
        %4817 = vrot.lane.b32.xlu0 %v4806, 127
        %v4818 = vpop.permute.xlu0 %4817
        %4823 = vrot.lane.b32.xlu0 %v4803, 126
        %v4824 = vpop.permute.xlu0 %4823
        %4825 = vrot.lane.b32.xlu0 %v4804, 126
        %v4826 = vpop.permute.xlu0 %4825
        %4827 = vrot.lane.b32.xlu0 %v4805, 126
        %v4828 = vpop.permute.xlu0 %4827
        %4829 = vrot.lane.b32.xlu0 %v4806, 126
        %v4830 = vpop.permute.xlu0 %4829
        %4835 = vrot.lane.b32.xlu0 %v4803, 118
        %v4836 = vpop.permute.xlu0 %4835
        %4837 = vrot.lane.b32.xlu0 %v4804, 118
        %v4838 = vpop.permute.xlu0 %4837
        %4839 = vrot.lane.b32.xlu0 %v4805, 118
        %v4840 = vpop.permute.xlu0 %4839
        %4841 = vrot.lane.b32.xlu0 %v4806, 118
        %v4842 = vpop.permute.xlu0 %4841
        %4847 = vrot.lane.b32.xlu0 %v4803, 117
        %v4848 = vpop.permute.xlu0 %4847
        %4849 = vrot.lane.b32.xlu0 %v4804, 117
        %v4850 = vpop.permute.xlu0 %4849
        %4851 = vrot.lane.b32.xlu0 %v4805, 117
        %v4852 = vpop.permute.xlu0 %4851
        %4853 = vrot.lane.b32.xlu0 %v4806, 117
        %v4854 = vpop.permute.xlu0 %4853
        %4859 = vrot.lane.b32.xlu0 %v4803, 116
        %v4860 = vpop.permute.xlu0 %4859
        %4861 = vrot.lane.b32.xlu0 %v4804, 116
        %v4862 = vpop.permute.xlu0 %4861
        %4863 = vrot.lane.b32.xlu0 %v4805, 116
        %v4864 = vpop.permute.xlu0 %4863
        %4865 = vrot.lane.b32.xlu0 %v4806, 116
        %v4866 = vpop.permute.xlu0 %4865
        %4871 = vrot.lane.b32.xlu0 %v4803, 108
        %v4872 = vpop.permute.xlu0 %4871
        %4873 = vrot.lane.b32.xlu0 %v4804, 108
        %v4874 = vpop.permute.xlu0 %4873
        %4875 = vrot.lane.b32.xlu0 %v4805, 108
        %v4876 = vpop.permute.xlu0 %4875
        %4877 = vrot.lane.b32.xlu0 %v4806, 108
        %v4878 = vpop.permute.xlu0 %4877
        %4883 = vrot.lane.b32.xlu0 %v4803, 107
        %v4884 = vpop.permute.xlu0 %4883
        %4885 = vrot.lane.b32.xlu0 %v4804, 107
        %v4886 = vpop.permute.xlu0 %4885
        %4887 = vrot.lane.b32.xlu0 %v4805, 107
        %v4888 = vpop.permute.xlu0 %4887
        %4889 = vrot.lane.b32.xlu0 %v4806, 107
        %v4890 = vpop.permute.xlu0 %4889
        %4895 = vrot.lane.b32.xlu0 %v4803, 106
        %v4896 = vpop.permute.xlu0 %4895
        %4897 = vrot.lane.b32.xlu0 %v4804, 106
        %v4898 = vpop.permute.xlu0 %4897
        %4899 = vrot.lane.b32.xlu0 %v4805, 106
        %v4900 = vpop.permute.xlu0 %4899
        %4901 = vrot.lane.b32.xlu0 %v4806, 106
        %v4902 = vpop.permute.xlu0 %4901
        %v4907 = vld [vmem:[#allocation16] sm:$0xff]
        %v4908 = vld [vmem:[#allocation16 + $0x8] sm:$0xff]
        %v4909 = vld [vmem:[#allocation16 + $0x10] sm:$0xff]
        %v4910 = vld [vmem:[#allocation16 + $0x18] sm:$0xff]
        %v4911 = vld [vmem:[#allocation16 + $0x20] sm:$0xff]
        %v4912 = vld [vmem:[#allocation16 + $0x28] sm:$0xff]
        %v4913 = vld [vmem:[#allocation16 + $0x30] sm:$0xff]
        %v4914 = vld [vmem:[#allocation16 + $0x38] sm:$0xff]
        %v4915 = vld [vmem:[#allocation16 + $0x40] sm:$0xff]
        %v4916 = vld [vmem:[#allocation16 + $0x48] sm:$0xff]
        %v4917 = vld [vmem:[#allocation16 + $0x50] sm:$0xff]
        %v4918 = vld [vmem:[#allocation16 + $0x58] sm:$0xff]
        %v4920 = vsel %vm4358, %v4909, 0
        %v4923 = vsel %vm4358, %v4912, 0
        %v4926 = vsel %vm4358, %v4915, 0
        %v4929 = vsel %vm4358, %v4918, 0
        %4931 = vmatpush.msra.mxu0 %v4842
        %4932 = vmatpush.msra.mxu0 %v4840
        %4933 = vmatpush.msra.mxu0 %v4838
        %4934 = vmatpush.msra.mxu0 %v4836
        %4935 = vmatpush.msra.mxu0 %v4830
        %4936 = vmatpush.msra.mxu0 %v4828
        %4937 = vmatpush.msra.mxu0 %v4826
        %4938 = vmatpush.msra.mxu0 %v4824
        %4939 = vmatpush.msra.mxu0 %v4818
        %4940 = vmatpush.msra.mxu0 %v4816
        %4941 = vmatpush.msra.mxu0 %v4814
        %4942 = vmatpush.msra.mxu0 %v4812
        %4943 = vmatpush.msra.mxu0 %v4806
        %4944 = vmatpush.msra.mxu0 %v4805
        %4945 = vmatpush.msra.mxu0 %v4804
        %4946 = vmatpush.msra.mxu0 %v4803
        %4947 = vmatmul.f32.gmra.mxu0 %v4907
        %v4948 = vpop.f32.mrf.mxu0
        %v4949 = vadd.f32 0.0, %v4948
        %4950 = vmatmul.f32.gmra.mxu0 %v4910
        %v4951 = vpop.f32.mrf.mxu0
        %v4952 = vadd.f32 0.0, %v4951
        %4953 = vmatmul.f32.gmra.mxu0 %v4913
        %v4954 = vpop.f32.mrf.mxu0
        %v4955 = vadd.f32 0.0, %v4954
        %4956 = vmatmul.f32.gmra.mxu0 %v4916
        %v4957 = vpop.f32.mrf.mxu0
        %v4958 = vadd.f32 0.0, %v4957
        %4959 = vdwg.mxu0
        %4960 = vmatpush.msra.mxu0 %v4890
        %4961 = vmatpush.msra.mxu0 %v4888
        %4962 = vmatpush.msra.mxu0 %v4886
        %4963 = vmatpush.msra.mxu0 %v4884
        %4964 = vmatpush.msra.mxu0 %v4878
        %4965 = vmatpush.msra.mxu0 %v4876
        %4966 = vmatpush.msra.mxu0 %v4874
        %4967 = vmatpush.msra.mxu0 %v4872
        %4968 = vmatpush.msra.mxu0 %v4866
        %4969 = vmatpush.msra.mxu0 %v4864
        %4970 = vmatpush.msra.mxu0 %v4862
        %4971 = vmatpush.msra.mxu0 %v4860
        %4972 = vmatpush.msra.mxu0 %v4854
        %4973 = vmatpush.msra.mxu0 %v4852
        %4974 = vmatpush.msra.mxu0 %v4850
        %4975 = vmatpush.msra.mxu0 %v4848
        %4976 = vmatmul.f32.gmra.mxu0 %v4908
        %v4977 = vpop.f32.mrf.mxu0
        %v4978 = vadd.f32 %v4949, %v4977
        %4979 = vmatmul.f32.gmra.mxu0 %v4911
        %v4980 = vpop.f32.mrf.mxu0
        %v4981 = vadd.f32 %v4952, %v4980
        %4982 = vmatmul.f32.gmra.mxu0 %v4914
        %v4983 = vpop.f32.mrf.mxu0
        %v4984 = vadd.f32 %v4955, %v4983
        %4985 = vmatmul.f32.gmra.mxu0 %v4917
        %v4986 = vpop.f32.mrf.mxu0
        %v4987 = vadd.f32 %v4958, %v4986
        %4988 = vdwg.mxu0
        %4989 = vmatpush.msra.mxu0 0.0
        %4990 = vmatpush.msra.mxu0 0.0
        %4991 = vmatpush.msra.mxu0 0.0
        %4992 = vmatpush.msra.mxu0 0.0
        %4993 = vmatpush.msra.mxu0 0.0
        %4994 = vmatpush.msra.mxu0 0.0
        %4995 = vmatpush.msra.mxu0 0.0
        %4996 = vmatpush.msra.mxu0 0.0
        %4997 = vmatpush.msra.mxu0 0.0
        %4998 = vmatpush.msra.mxu0 0.0
        %4999 = vmatpush.msra.mxu0 0.0
        %5000 = vmatpush.msra.mxu0 0.0
        %5001 = vmatpush.msra.mxu0 %v4902
        %5002 = vmatpush.msra.mxu0 %v4900
        %5003 = vmatpush.msra.mxu0 %v4898
        %5004 = vmatpush.msra.mxu0 %v4896
        %5005 = vmatmul.f32.gmra.mxu0 %v4920
        %v5006 = vpop.f32.mrf.mxu0
        %v5007 = vadd.f32 %v4978, %v5006
        %5008 = vmatmul.f32.gmra.mxu0 %v4923
        %v5009 = vpop.f32.mrf.mxu0
        %v5010 = vadd.f32 %v4981, %v5009
        %5011 = vmatmul.f32.gmra.mxu0 %v4926
        %v5012 = vpop.f32.mrf.mxu0
        %v5013 = vadd.f32 %v4984, %v5012
        %5014 = vmatmul.f32.gmra.mxu0 %v4929
        %v5015 = vpop.f32.mrf.mxu0
        %v5016 = vadd.f32 %v4987, %v5015
        %5017 = vdwg.mxu0
        %v5018 = vmax.f32 %v5007, 0.0
        %v5019 = vmax.f32 %v5010, 0.0
        %v5020 = vmax.f32 %v5013, 0.0
        %v5021 = vmax.f32 %v5016, 0.0
        %v5022 = vld [vmem:[%s22] sm:$0xff]
        %v5023 = vld [vmem:[%s22 + $0x8] sm:$0xff]
        %v5024 = vld [vmem:[%s22 + $0x10] sm:$0xff]
        %v5025 = vld [vmem:[%s22 + $0x18] sm:$0xff]
        %v5026 = vld [vmem:[%s22 + $0x20] sm:$0xff]
        %v5027 = vld [vmem:[%s22 + $0x28] sm:$0xff]
        %v5028 = vld [vmem:[%s22 + $0x30] sm:$0xff]
        %v5029 = vld [vmem:[%s22 + $0x38] sm:$0xff]
        %v5030 = vld [vmem:[%s22 + $0x40] sm:$0xff]
        %v5031 = vld [vmem:[%s22 + $0x48] sm:$0xff]
        %v5032 = vld [vmem:[%s22 + $0x50] sm:$0xff]
        %v5033 = vld [vmem:[%s22 + $0x58] sm:$0xff]
        %v5034 = vld [vmem:[%s22 + $0x60] sm:$0xf]
        %5036 = vset.pattern.permute.xlu0 0
        %5037 = vperm.xlu0 %5036, %v4097
        %v5038 = vpop.permute.xlu0 %5037
        %5041 = vset.pattern.permute.xlu0 0
        %5042 = vperm.xlu0 %5041, %v4100
        %v5043 = vpop.permute.xlu0 %5042
        %5046 = vset.pattern.permute.xlu0 0
        %5047 = vperm.xlu0 %5046, %v4103
        %v5048 = vpop.permute.xlu0 %5047
        %5051 = vset.pattern.permute.xlu0 0
        %5052 = vperm.xlu0 %5051, %v4106
        %v5053 = vpop.permute.xlu0 %5052
        %v5056 = vsel %vm2902, %v5018, 0
        %v5059 = vsel %vm2902, %v5019, 0
        %v5062 = vsel %vm2902, %v5020, 0
        %v5065 = vsel %vm2902, %v5021, 0
        %v5068 = vsel %vm1894, %v5034, 0
        %5070 = vmatpush.msra.mxu0 0.0
        %5071 = vmatpush.msra.mxu0 0.0
        %5072 = vmatpush.msra.mxu0 0.0
        %5073 = vmatpush.msra.mxu0 %v5068
        %5074 = vmatpush.msra.mxu0 %v5033
        %5075 = vmatpush.msra.mxu0 %v5032
        %5076 = vmatpush.msra.mxu0 %v5031
        %5077 = vmatpush.msra.mxu0 %v5030
        %5078 = vmatpush.msra.mxu0 %v5029
        %5079 = vmatpush.msra.mxu0 %v5028
        %5080 = vmatpush.msra.mxu0 %v5027
        %5081 = vmatpush.msra.mxu0 %v5026
        %5082 = vmatpush.msra.mxu0 %v5025
        %5083 = vmatpush.msra.mxu0 %v5024
        %5084 = vmatpush.msra.mxu0 %v5023
        %5085 = vmatpush.msra.mxu0 %v5022
        %5086 = vmatmul.f32.gmra.mxu0 %v5056
        %v5087 = vpop.f32.mrf.mxu0
        %v5088 = vadd.f32 %v5038, %v5087
        %5089 = vmatmul.f32.gmra.mxu0 %v5059
        %v5090 = vpop.f32.mrf.mxu0
        %v5091 = vadd.f32 %v5043, %v5090
        %5092 = vmatmul.f32.gmra.mxu0 %v5062
        %v5093 = vpop.f32.mrf.mxu0
        %v5094 = vadd.f32 %v5048, %v5093
        %5095 = vmatmul.f32.gmra.mxu0 %v5065
        %v5096 = vpop.f32.mrf.mxu0
        %v5097 = vadd.f32 %v5053, %v5096
        %5098 = vdwg.mxu0
        %v5099 = vmax.f32 %v5088, 0.0
        %v5100 = vmax.f32 %v5091, 0.0
        %v5101 = vmax.f32 %v5094, 0.0
        %v5102 = vmax.f32 %v5097, 0.0
        %v5103 = vld [vmem:[%s23] sm:$0xff]
        %v5104 = vld [vmem:[%s23 + $0x8] sm:$0xff]
        %v5105 = vld [vmem:[%s23 + $0x10] sm:$0xff]
        %v5106 = vld [vmem:[%s23 + $0x18] sm:$0xff]
        %v5107 = vld [vmem:[%s23 + $0x20] sm:$0xff]
        %v5108 = vld [vmem:[%s23 + $0x28] sm:$0xff]
        %v5109 = vld [vmem:[%s24] sm:$0xff]
        %v5110 = vld [vmem:[%s24 + $0x8] sm:$0xff]
        %v5111 = vld [vmem:[%s24 + $0x10] sm:$0xff]
        %v5112 = vld [vmem:[%s24 + $0x18] sm:$0xff]
        %v5113 = vld [vmem:[%s24 + $0x20] sm:$0xff]
        %v5114 = vld [vmem:[%s24 + $0x28] sm:$0xff]
        %5116 = vset.pattern.permute.xlu0 0
        %5117 = vperm.xlu0 %5116, %v5109
        %v5118 = vpop.permute.xlu0 %5117
        %5121 = vset.pattern.permute.xlu0 0
        %5122 = vperm.xlu0 %5121, %v5110
        %v5123 = vpop.permute.xlu0 %5122
        %5126 = vset.pattern.permute.xlu0 0
        %5127 = vperm.xlu0 %5126, %v5111
        %v5128 = vpop.permute.xlu0 %5127
        %5131 = vset.pattern.permute.xlu0 0
        %5132 = vperm.xlu0 %5131, %v5112
        %v5133 = vpop.permute.xlu0 %5132
        %5136 = vset.pattern.permute.xlu0 0
        %5137 = vperm.xlu0 %5136, %v5113
        %v5138 = vpop.permute.xlu0 %5137
        %5141 = vset.pattern.permute.xlu0 0
        %5142 = vperm.xlu0 %5141, %v5114
        %v5143 = vpop.permute.xlu0 %5142
        %v5146 = vsel %vm4358, %v5103, 0
        %v5149 = vsel %vm4358, %v5104, 0
        %v5152 = vsel %vm4358, %v5105, 0
        %v5155 = vsel %vm4358, %v5106, 0
        %v5158 = vsel %vm4358, %v5107, 0
        %v5161 = vsel %vm4358, %v5108, 0
        %5163 = vmatpush.msra.mxu0 0.0
        %5164 = vmatpush.msra.mxu0 0.0
        %5165 = vmatpush.msra.mxu0 0.0
        %5166 = vmatpush.msra.mxu0 0.0
        %5167 = vmatpush.msra.mxu0 0.0
        %5168 = vmatpush.msra.mxu0 0.0
        %5169 = vmatpush.msra.mxu0 0.0
        %5170 = vmatpush.msra.mxu0 0.0
        %5171 = vmatpush.msra.mxu0 0.0
        %5172 = vmatpush.msra.mxu0 0.0
        %5173 = vmatpush.msra.mxu0 0.0
        %5174 = vmatpush.msra.mxu0 0.0
        %5175 = vmatpush.msra.mxu0 %v5102
        %5176 = vmatpush.msra.mxu0 %v5101
        %5177 = vmatpush.msra.mxu0 %v5100
        %5178 = vmatpush.msra.mxu0 %v5099
        %5179 = vmatmul.f32.gmra.mxu0 %v5146
        %v5180 = vpop.f32.mrf.mxu0
        %v5181 = vadd.f32 %v5118, %v5180
        %5182 = vmatmul.f32.gmra.mxu0 %v5149
        %v5183 = vpop.f32.mrf.mxu0
        %v5184 = vadd.f32 %v5123, %v5183
        %5185 = vmatmul.f32.gmra.mxu0 %v5152
        %v5186 = vpop.f32.mrf.mxu0
        %v5187 = vadd.f32 %v5128, %v5186
        %5188 = vmatmul.f32.gmra.mxu0 %v5155
        %v5189 = vpop.f32.mrf.mxu0
        %v5190 = vadd.f32 %v5133, %v5189
        %5191 = vmatmul.f32.gmra.mxu0 %v5158
        %v5192 = vpop.f32.mrf.mxu0
        %v5193 = vadd.f32 %v5138, %v5192
        %5194 = vmatmul.f32.gmra.mxu0 %v5161
        %v5195 = vpop.f32.mrf.mxu0
        %v5196 = vadd.f32 %v5143, %v5195
        %5197 = vdwg.mxu0
        %5198 = vst.msk [vmem:[%s893] sm:$0xff] %vm4066, %v5181
        %5199 = vst.msk [vmem:[%s893 + $0x8] sm:$0xff] %vm4066, %v5184
        %5200 = vst.msk [vmem:[%s893 + $0x10] sm:$0xff] %vm4066, %v5187
        %5201 = vst.msk [vmem:[%s893 + $0x18] sm:$0xff] %vm4066, %v5190
        %5202 = vst.msk [vmem:[%s893 + $0x20] sm:$0xff] %vm4066, %v5193
        %5203 = vst.msk [vmem:[%s893 + $0x28] sm:$0xff] %vm4066, %v5196
        %p5204 = scmp.lt.s32.totalorder %s41, 1
        %s5205 = scalar_select %p5204, %s41, 1
        %s5206 = smul.addr %s5205, 6
        %s5207 = smul.addr %s5206, 8
        %s5208 = scalar_lea.vmem %s25, %s5207
        // Predicated region
        $region153: #{compute_coeffs_forward.1} parent=119 // pred_check
          %p5209 = pneg %p589
        $region154: #{compute_coeffs_forward.1} parent=119 // pred_check_branch
          %5211 = sbr.rel (%p5209) target = $region156
        $region155: #{compute_coeffs_forward.1} parent=119 // pred_region
          _
        $region156: #{compute_coeffs_forward.1} parent=119 // pred_fallthru
          _
      $region120: #{compute_coeffs_forward.1} parent=5 // pred_fallthru
        _
      %p5212 = scmp.le.s32.totalorder 2, %s36
      // Predicated region
      $region157: #{compute_coeffs_forward.1} parent=5 // pred_check
        %p5213 = pneg %p5212
      $region158: #{compute_coeffs_forward.1} parent=5 // pred_check_branch
        %5215 = sbr.rel (%p5213) target = $region160
      $region159: #{compute_coeffs_forward.1} parent=5 // pred_region
        %s5216 = ssub.s32 %s36, 2
        // Predicated region
        $region161: #{compute_coeffs_forward.1} parent=159 // pred_check
          %p5217 = pneg %p595
        $region162: #{compute_coeffs_forward.1} parent=159 // pred_check_branch
          %5219 = sbr.rel (%p5217) target = $region164
        $region163: #{compute_coeffs_forward.1} parent=159 // pred_region
          %p5220 = scmp.lt.s32.totalorder %s42, 1
          %s5221 = scalar_select %p5220, %s42, 1
          %s5222 = smul.addr %s5221, 6
          %s5223 = smul.addr %s5222, 8
          %s5224 = scalar_lea.vmem %s25, %s5223
        $region164: #{compute_coeffs_forward.1} parent=159 // pred_fallthru
          _
      $region160: #{compute_coeffs_forward.1} parent=5 // pred_fallthru
        _
    $region6: #{compute_coeffs_forward.1} parent=1 // loop_footer
      %s40 = sadd.s32 1, %s36
    $region7: #{compute_coeffs_forward.1} parent=1 // loop_footer_branch
      %35 = sbr.rel target = $region3
    $region8: #{compute_coeffs_forward.1} parent=1 // loop_exit
      _
    %5225 = vsyncpa [#allocation6], 1
    %s5226 = scalar_lea.sflag [#allocation6], 1
    %5227 = vsyncpa %s5226, 1
    %5228 = vsyncpa [#allocation8], 1
    %5229 = vsyncpa [#allocation11], 1
    %5230 = vsyncpa [#allocation14], 1
    %5231 = vsyncpa [#allocation17], 1

</llo_original>
